<compile_context>
chip_gen: v5e
topology: v5e:2x2
jax: 0.10.0
libtpu: 0.0.40
codegen_flags: <defaults>
</compile_context>

<pallas_src>
import math

import jax
import jax.numpy as jnp
from jax.experimental import pallas as pl
from jax.experimental.pallas import tpu as pltpu


_VMEM = pl.BlockSpec(memory_space=pltpu.MemorySpace.VMEM)


# ----------------------------------------------------------------------------
# Kernel 1 & 2: im2col conv (single bf16 matmul, f32 accum) + bias + ReLU
#               + fused 2x2 maxpool epilogue
# ----------------------------------------------------------------------------
def _conv_relu_pool_kernel(cols_ref, w_ref, b_ref, o_ref):
    # cols_ref: (4*Q, K) bf16 im2col rows.  Rows [j*Q:(j+1)*Q] hold pool-window
    #           position j = wy*2+wx of every 2x2 window, in (n, py, px) order.
    # w_ref:    (K, Cout) bf16;  b_ref: (1, Cout) f32;  o_ref: (Q, Cout) bf16
    q = o_ref.shape[0]
    acc = jnp.dot(cols_ref[...], w_ref[...], preferred_element_type=jnp.float32)
    acc = jnp.maximum(acc + b_ref[...], 0.0)                    # bias + ReLU (f32)
    # fused maxpool: pairwise lane-wise maxes over contiguous sublane slabs (VPU only)
    pooled = jnp.maximum(jnp.maximum(acc[0:q], acc[q:2 * q]),
                         jnp.maximum(acc[2 * q:3 * q], acc[3 * q:4 * q]))
    o_ref[...] = pooled.astype(o_ref.dtype)


def conv_relu_pool(cols, w, b):
    m4, _ = cols.shape
    q = m4 // 4
    cout = w.shape[1]
    return pl.pallas_call(
        _conv_relu_pool_kernel,
        out_shape=jax.ShapeDtypeStruct((q, cout), jnp.bfloat16),
        in_specs=[_VMEM, _VMEM, _VMEM],
        out_specs=_VMEM,
    )(cols, w, b)


# ----------------------------------------------------------------------------
# Kernel 3: fc1 + ReLU + fc2 + log_softmax (lane-dense 128-wide logits)
# ----------------------------------------------------------------------------
def _mlp_logsoftmax_kernel(x_ref, w1_ref, b1_ref, w2_ref, b2_ref, o_ref):
    h = jnp.dot(x_ref[...], w1_ref[...], preferred_element_type=jnp.float32)
    h = jnp.maximum(h + b1_ref[...], 0.0).astype(jnp.bfloat16)
    logits = jnp.dot(h, w2_ref[...], preferred_element_type=jnp.float32) + b2_ref[...]
    # padded lanes carry a -1e30 bias -> exp() underflows to 0; real lanes exact
    m = jnp.max(logits, axis=-1, keepdims=True)
    z = logits - m
    lse = jnp.log(jnp.sum(jnp.exp(z), axis=-1, keepdims=True))
    o_ref[...] = z - lse


def mlp_logsoftmax(x, w1, b1, w2, b2):
    n = x.shape[0]
    dout = w2.shape[1]
    return pl.pallas_call(
        _mlp_logsoftmax_kernel,
        out_shape=jax.ShapeDtypeStruct((n, dout), jnp.float32),
        in_specs=[_VMEM] * 5,
        out_specs=_VMEM,
    )(x, w1, b1, w2, b2)


# ----------------------------------------------------------------------------
# Wrapper-side im2col (tiny XLA glue; rows pre-grouped for the fused pool)
# ----------------------------------------------------------------------------
def _im2col_pool_grouped(x, ksize, pool):
    """x: (N, H, W, C) NHWC -> (pool*pool*Q, ksize*ksize*C) rows for a valid conv
    whose output is 2x2-maxpooled.  Q = N * (Ho//pool) * (Wo//pool)."""
    n, hh, ww, c = x.shape
    ho = hh - ksize + 1
    wo = ww - ksize + 1
    hp, wp = ho // pool, wo // pool
    k = ksize * ksize * c
    pat = jnp.stack([x[:, dy:dy + ho, dx:dx + wo, :]
                     for dy in range(ksize) for dx in range(ksize)], axis=3)
    pat = pat.reshape(n, ho, wo, k)
    # split oy = py*pool + wy, ox = px*pool + wx, then group by (wy, wx)
    pat = pat.reshape(n, hp, pool, wp, pool, k).transpose(2, 4, 0, 1, 3, 5)
    return pat.reshape(pool * pool * n * hp * wp, k)


# ----------------------------------------------------------------------------
# Parameters (deterministic, PyTorch-default-style init), relayouted ONCE
# ----------------------------------------------------------------------------
def init_params(key):
    def uniform(k, shape, fan_in):
        bound = 1.0 / math.sqrt(fan_in)
        return jax.random.uniform(k, shape, jnp.float32, -bound, bound)

    ks = jax.random.split(key, 8)
    w1 = uniform(ks[0], (20, 1, 5, 5), 1 * 5 * 5)      # conv1 OIHW
    b1 = uniform(ks[1], (20,), 1 * 5 * 5)
    w2 = uniform(ks[2], (50, 20, 5, 5), 20 * 5 * 5)    # conv2 OIHW
    b2 = uniform(ks[3], (50,), 20 * 5 * 5)
    wf1 = uniform(ks[4], (500, 800), 800)              # fc1 (out, in), in-index = c*16+h*4+w
    bf1 = uniform(ks[5], (500,), 800)
    wf2 = uniform(ks[6], (10, 500), 500)               # fc2 (out, in)
    bf2 = uniform(ks[7], (10,), 500)

    # fc2 padded to a lane-dense 128-wide output; pad bias = -1e30 so the fused
    # log_softmax ignores the padded lanes.
    fc2_w = jnp.zeros((500, 128), jnp.bfloat16).at[:, :10].set(
        jnp.transpose(wf2).astype(jnp.bfloat16))
    fc2_b = jnp.full((1, 128), -1e30, jnp.float32).at[:, :10].set(bf2.reshape(1, 10))

    return {
        "conv1_w": jnp.transpose(w1, (2, 3, 1, 0)).reshape(25, 20).astype(jnp.bfloat16),
        "conv1_b": b1.reshape(1, 20),
        "conv2_w": jnp.transpose(w2, (2, 3, 1, 0)).reshape(500, 50).astype(jnp.bfloat16),
        "conv2_b": b2.reshape(1, 50),
        "fc1_w": jnp.transpose(wf1).astype(jnp.bfloat16),   # (800, 500)
        "fc1_b": bf1.reshape(1, 500),
        "fc2_w": fc2_w,
        "fc2_b": fc2_b,
    }


# ----------------------------------------------------------------------------
# Full forward pass (matches Net.forward; log_softmax included)
# ----------------------------------------------------------------------------
def net_forward(params, x_nchw):
    n = x_nchw.shape[0]
    x = jnp.transpose(x_nchw, (0, 2, 3, 1)).astype(jnp.bfloat16)   # NCHW -> NHWC

    # conv1 + ReLU + 2x2 maxpool : (N,28,28,1) -> (N,12,12,20)
    cols1 = _im2col_pool_grouped(x, 5, 2)                          # (4*N*144, 25)
    a1 = conv_relu_pool(cols1, params["conv1_w"], params["conv1_b"])
    a1 = a1.reshape(n, 12, 12, 20)

    # conv2 + ReLU + 2x2 maxpool : (N,12,12,20) -> (N,4,4,50)
    cols2 = _im2col_pool_grouped(a1, 5, 2)                         # (4*N*16, 500)
    a2 = conv_relu_pool(cols2, params["conv2_w"], params["conv2_b"])

    # flatten in PyTorch NCHW (c, h, w) order to match nn.Linear(4*4*50, 500)
    flat = jnp.transpose(a2.reshape(n, 4, 4, 50), (0, 3, 1, 2)).reshape(n, 800)

    out = mlp_logsoftmax(flat, params["fc1_w"], params["fc1_b"],
                         params["fc2_w"], params["fc2_b"])
    return out[:, :10]                                             # drop padded lanes


if __name__ == "__main__":
    key = jax.random.PRNGKey(0)
    kp, kx = jax.random.split(key)
    params = init_params(kp)
    # fc1 = Linear(4*4*50, 500) fixes the input to 1x28x28 (MNIST-shaped).
    x = jax.random.normal(kx, (2, 1, 28, 28), jnp.float32)
    out = jax.jit(net_forward)(params, x)
    out = jax.block_until_ready(out)
    assert out.shape == (2, 10), out.shape
    assert bool(jnp.all(jnp.isfinite(out)))
    # log_softmax rows must exponentiate-sum to ~1
    assert bool(jnp.allclose(jnp.sum(jnp.exp(out), axis=1), 1.0, atol=1e-3))
    print("KERNEL_OK")
</pallas_src>

<mosaic_0001>
module attributes {stable_mosaic.version = 11 : i64} {
  func.func @_conv_relu_pool_kernel(%arg0: memref<1152x25xbf16, #tpu.memory_space<vmem>>, %arg1: memref<25x20xbf16, #tpu.memory_space<vmem>>, %arg2: memref<1x20xf32, #tpu.memory_space<vmem>>, %arg3: memref<288x20xbf16, #tpu.memory_space<vmem>>) attributes {dimension_semantics = [], scalar_prefetch = 0 : i64, scratch_operands = 0 : i64, tpu.core_type = #tpu.core_type<tc>} {
    %c0 = arith.constant 0 : index
    %c0_0 = arith.constant 0 : index
    %0 = vector.load %arg0[%c0, %c0_0] : memref<1152x25xbf16, #tpu.memory_space<vmem>>, vector<1152x25xbf16>
    %c0_1 = arith.constant 0 : index
    %c0_2 = arith.constant 0 : index
    %1 = vector.load %arg1[%c0_1, %c0_2] : memref<25x20xbf16, #tpu.memory_space<vmem>>, vector<25x20xbf16>
    %cst = arith.constant dense<0.000000e+00> : vector<1152x20xf32>
    %2 = tpu.matmul %0, %1, %cst {dimension_numbers = #tpu.dot_dimension_numbers<[1], [0], [0], [1], [0, 0, 1, 1], [], []>} : vector<1152x25xbf16>, vector<25x20xbf16>, vector<1152x20xf32> -> vector<1152x20xf32>
    %c0_3 = arith.constant 0 : index
    %c0_4 = arith.constant 0 : index
    %3 = vector.load %arg2[%c0_3, %c0_4] : memref<1x20xf32, #tpu.memory_space<vmem>>, vector<1x20xf32>
    %4 = vector.broadcast %3 : vector<1x20xf32> to vector<1152x20xf32>
    %5 = arith.addf %2, %4 : vector<1152x20xf32>
    %cst_5 = arith.constant 0.000000e+00 : f32
    %6 = vector.broadcast %cst_5 : f32 to vector<1152x20xf32>
    %7 = arith.maximumf %5, %6 : vector<1152x20xf32>
    %8 = vector.extract_strided_slice %7 {offsets = [0, 0], sizes = [288, 20], strides = [1, 1]} : vector<1152x20xf32> to vector<288x20xf32>
    %9 = vector.extract_strided_slice %7 {offsets = [288, 0], sizes = [288, 20], strides = [1, 1]} : vector<1152x20xf32> to vector<288x20xf32>
    %10 = arith.maximumf %8, %9 : vector<288x20xf32>
    %11 = vector.extract_strided_slice %7 {offsets = [576, 0], sizes = [288, 20], strides = [1, 1]} : vector<1152x20xf32> to vector<288x20xf32>
    %12 = vector.extract_strided_slice %7 {offsets = [864, 0], sizes = [288, 20], strides = [1, 1]} : vector<1152x20xf32> to vector<288x20xf32>
    %13 = arith.maximumf %11, %12 : vector<288x20xf32>
    %14 = arith.maximumf %10, %13 : vector<288x20xf32>
    %15 = arith.truncf %14 : vector<288x20xf32> to vector<288x20xbf16>
    %c0_6 = arith.constant 0 : index
    %c0_7 = arith.constant 0 : index
    %16 = vector.load %arg3[%c0_6, %c0_7] : memref<288x20xbf16, #tpu.memory_space<vmem>>, vector<288x20xbf16>
    tpu.vector_store %arg3[%c0_6, %c0_7], %15 {strides = array<i32>} : memref<288x20xbf16, #tpu.memory_space<vmem>>, vector<288x20xbf16>,
    return
  }
}

module attributes {stable_mosaic.version = 11 : i64} {
  func.func @_conv_relu_pool_kernel(%arg0: memref<128x500xbf16, #tpu.memory_space<vmem>>, %arg1: memref<500x50xbf16, #tpu.memory_space<vmem>>, %arg2: memref<1x50xf32, #tpu.memory_space<vmem>>, %arg3: memref<32x50xbf16, #tpu.memory_space<vmem>>) attributes {dimension_semantics = [], scalar_prefetch = 0 : i64, scratch_operands = 0 : i64, tpu.core_type = #tpu.core_type<tc>} {
    %c0 = arith.constant 0 : index
    %c0_0 = arith.constant 0 : index
    %0 = vector.load %arg0[%c0, %c0_0] : memref<128x500xbf16, #tpu.memory_space<vmem>>, vector<128x500xbf16>
    %c0_1 = arith.constant 0 : index
    %c0_2 = arith.constant 0 : index
    %1 = vector.load %arg1[%c0_1, %c0_2] : memref<500x50xbf16, #tpu.memory_space<vmem>>, vector<500x50xbf16>
    %cst = arith.constant dense<0.000000e+00> : vector<128x50xf32>
    %2 = tpu.matmul %0, %1, %cst {dimension_numbers = #tpu.dot_dimension_numbers<[1], [0], [0], [1], [0, 0, 1, 1], [], []>} : vector<128x500xbf16>, vector<500x50xbf16>, vector<128x50xf32> -> vector<128x50xf32>
    %c0_3 = arith.constant 0 : index
    %c0_4 = arith.constant 0 : index
    %3 = vector.load %arg2[%c0_3, %c0_4] : memref<1x50xf32, #tpu.memory_space<vmem>>, vector<1x50xf32>
    %4 = vector.broadcast %3 : vector<1x50xf32> to vector<128x50xf32>
    %5 = arith.addf %2, %4 : vector<128x50xf32>
    %cst_5 = arith.constant 0.000000e+00 : f32
    %6 = vector.broadcast %cst_5 : f32 to vector<128x50xf32>
    %7 = arith.maximumf %5, %6 : vector<128x50xf32>
    %8 = vector.extract_strided_slice %7 {offsets = [0, 0], sizes = [32, 50], strides = [1, 1]} : vector<128x50xf32> to vector<32x50xf32>
    %9 = vector.extract_strided_slice %7 {offsets = [32, 0], sizes = [32, 50], strides = [1, 1]} : vector<128x50xf32> to vector<32x50xf32>
    %10 = arith.maximumf %8, %9 : vector<32x50xf32>
    %11 = vector.extract_strided_slice %7 {offsets = [64, 0], sizes = [32, 50], strides = [1, 1]} : vector<128x50xf32> to vector<32x50xf32>
    %12 = vector.extract_strided_slice %7 {offsets = [96, 0], sizes = [32, 50], strides = [1, 1]} : vector<128x50xf32> to vector<32x50xf32>
    %13 = arith.maximumf %11, %12 : vector<32x50xf32>
    %14 = arith.maximumf %10, %13 : vector<32x50xf32>
    %15 = arith.truncf %14 : vector<32x50xf32> to vector<32x50xbf16>
    %c0_6 = arith.constant 0 : index
    %c0_7 = arith.constant 0 : index
    %16 = vector.load %arg3[%c0_6, %c0_7] : memref<32x50xbf16, #tpu.memory_space<vmem>>, vector<32x50xbf16>
    tpu.vector_store %arg3[%c0_6, %c0_7], %15 {strides = array<i32>} : memref<32x50xbf16, #tpu.memory_space<vmem>>, vector<32x50xbf16>,
    return
  }
}

module attributes {stable_mosaic.version = 11 : i64} {
  func.func @_mlp_logsoftmax_kernel(%arg0: memref<2x800xbf16, #tpu.memory_space<vmem>>, %arg1: memref<800x500xbf16, #tpu.memory_space<vmem>>, %arg2: memref<1x500xf32, #tpu.memory_space<vmem>>, %arg3: memref<500x128xbf16, #tpu.memory_space<vmem>>, %arg4: memref<1x128xf32, #tpu.memory_space<vmem>>, %arg5: memref<2x128xf32, #tpu.memory_space<vmem>>) attributes {dimension_semantics = [], scalar_prefetch = 0 : i64, scratch_operands = 0 : i64, tpu.core_type = #tpu.core_type<tc>} {
    %c0 = arith.constant 0 : index
    %c0_0 = arith.constant 0 : index
    %0 = vector.load %arg0[%c0, %c0_0] : memref<2x800xbf16, #tpu.memory_space<vmem>>, vector<2x800xbf16>
    %c0_1 = arith.constant 0 : index
    %c0_2 = arith.constant 0 : index
    %1 = vector.load %arg1[%c0_1, %c0_2] : memref<800x500xbf16, #tpu.memory_space<vmem>>, vector<800x500xbf16>
    %cst = arith.constant dense<0.000000e+00> : vector<2x500xf32>
    %2 = tpu.matmul %0, %1, %cst {dimension_numbers = #tpu.dot_dimension_numbers<[1], [0], [0], [1], [0, 0, 1, 1], [], []>} : vector<2x800xbf16>, vector<800x500xbf16>, vector<2x500xf32> -> vector<2x500xf32>
    %c0_3 = arith.constant 0 : index
    %c0_4 = arith.constant 0 : index
    %3 = vector.load %arg2[%c0_3, %c0_4] : memref<1x500xf32, #tpu.memory_space<vmem>>, vector<1x500xf32>
    %4 = vector.broadcast %3 : vector<1x500xf32> to vector<2x500xf32>
    %5 = arith.addf %2, %4 : vector<2x500xf32>
    %cst_5 = arith.constant 0.000000e+00 : f32
    %6 = vector.broadcast %cst_5 : f32 to vector<2x500xf32>
    %7 = arith.maximumf %5, %6 : vector<2x500xf32>
    %8 = arith.truncf %7 : vector<2x500xf32> to vector<2x500xbf16>
    %c0_6 = arith.constant 0 : index
    %c0_7 = arith.constant 0 : index
    %9 = vector.load %arg3[%c0_6, %c0_7] : memref<500x128xbf16, #tpu.memory_space<vmem>>, vector<500x128xbf16>
    %cst_8 = arith.constant dense<0.000000e+00> : vector<2x128xf32>
    %10 = tpu.matmul %8, %9, %cst_8 {dimension_numbers = #tpu.dot_dimension_numbers<[1], [0], [0], [1], [0, 0, 1, 1], [], []>} : vector<2x500xbf16>, vector<500x128xbf16>, vector<2x128xf32> -> vector<2x128xf32>
    %c0_9 = arith.constant 0 : index
    %c0_10 = arith.constant 0 : index
    %11 = vector.load %arg4[%c0_9, %c0_10] : memref<1x128xf32, #tpu.memory_space<vmem>>, vector<1x128xf32>
    %12 = vector.broadcast %11 : vector<1x128xf32> to vector<2x128xf32>
    %13 = arith.addf %10, %12 : vector<2x128xf32>
    %cst_11 = arith.constant dense<0xFF800000> : vector<2xf32>
    %14 = vector.multi_reduction <maximumf>, %13, %cst_11 [1] : vector<2x128xf32> to vector<2xf32>
    %15 = vector.shape_cast %14 : vector<2xf32> to vector<2x1xf32>
    %16 = vector.broadcast %15 : vector<2x1xf32> to vector<2x128xf32>
    %17 = arith.subf %13, %16 : vector<2x128xf32>
    %18 = math.exp %17 : vector<2x128xf32>
    %cst_12 = arith.constant dense<0.000000e+00> : vector<2xf32>
    %19 = vector.multi_reduction <add>, %18, %cst_12 [1] : vector<2x128xf32> to vector<2xf32>
    %20 = vector.shape_cast %19 : vector<2xf32> to vector<2x1xf32>
    %21 = math.log %20 : vector<2x1xf32>
    %22 = vector.broadcast %21 : vector<2x1xf32> to vector<2x128xf32>
    %23 = arith.subf %17, %22 : vector<2x128xf32>
    %c0_13 = arith.constant 0 : index
    %c0_14 = arith.constant 0 : index
    %24 = vector.load %arg5[%c0_13, %c0_14] : memref<2x128xf32, #tpu.memory_space<vmem>>, vector<2x128xf32>
    tpu.vector_store %arg5[%c0_13, %c0_14], %23 {strides = array<i32>} : memref<2x128xf32, #tpu.memory_space<vmem>>, vector<2x128xf32>,
    return
  }
}

</mosaic_0001>

<llo_original>
// kernel: net_forward.3
$region0: #{net_forward.3}
  #allocation0 [shape = 'u32[]', space=smem, size = 0x4, offset = 0x4, fixed_abs, tag = 'smem constant byte address 0x4 - core index']
  #allocation1 [shape = 'u32[72,128]{1,0:T(1,128)}', space=vmem, size = 0x9000, scoped, tag = 'internal scratch']
  %s0 = inlined_call_operand.vmem [shape: bf16[1152,25], index: 0, kind: input, shape index: {}]
  %s1 = inlined_call_operand.vmem [shape: bf16[25,20], index: 1, kind: input, shape index: {}]
  %s2 = inlined_call_operand.vmem [shape: f32[1,20], index: 2, kind: input, shape index: {}]
  %s3 = inlined_call_operand.vmem [shape: bf16[288,20], index: 3, kind: output, shape index: {}]
  %s4 = sld [smem:[#allocation0]]
  $region22: #{net_forward.3} parent=0
    _
  %s6 = ssub.s32 1, %s4
  %s7 = scalar_select 0, %s6, %s4
  // Predicated region
  $region2: #{net_forward.3} parent=0 // pred_check
    _
  $region3: #{net_forward.3} parent=0 // pred_check_branch
    %9 = sbr.rel (0) target = $region5
  $region4: #{net_forward.3} parent=0 // pred_region
    _
  $region5: #{net_forward.3} parent=0 // pred_fallthru
    _
  // Predicated region
  $region6: #{net_forward.3} parent=0 // pred_check
    _
  $region7: #{net_forward.3} parent=0 // pred_check_branch
    %11 = sbr.rel (0) target = $region9
  $region8: #{net_forward.3} parent=0 // pred_region
    _
  $region9: #{net_forward.3} parent=0 // pred_fallthru
    _
  // Predicated region
  $region10: #{net_forward.3} parent=0 // pred_check
    _
  $region11: #{net_forward.3} parent=0 // pred_check_branch
    %13 = sbr.rel (0) target = $region13
  $region12: #{net_forward.3} parent=0 // pred_region
    _
  $region13: #{net_forward.3} parent=0 // pred_fallthru
    _
  %v15 = vld [vmem:[%s0] sm:$0xf]
  %v16 = vld [vmem:[%s0 + $0x4] sm:$0xf]
  %v17 = vld [vmem:[%s0 + $0x8] sm:$0xf]
  %v18 = vld [vmem:[%s0 + $0xc] sm:$0xf]
  %v19 = vld [vmem:[%s0 + $0x10] sm:$0xf]
  %v20 = vld [vmem:[%s0 + $0x14] sm:$0xf]
  %v21 = vld [vmem:[%s0 + $0x18] sm:$0xf]
  %v22 = vld [vmem:[%s0 + $0x1c] sm:$0xf]
  %v23 = vld [vmem:[%s0 + $0x20] sm:$0xf]
  %v24 = vld [vmem:[%s0 + $0x24] sm:$0xf]
  %v25 = vld [vmem:[%s0 + $0x28] sm:$0xf]
  %v26 = vld [vmem:[%s0 + $0x2c] sm:$0xf]
  %v27 = vld [vmem:[%s0 + $0x30] sm:$0xf]
  %v28 = vld [vmem:[%s0 + $0x34] sm:$0xf]
  %v29 = vld [vmem:[%s0 + $0x38] sm:$0xf]
  %v30 = vld [vmem:[%s0 + $0x3c] sm:$0xf]
  %v31 = vld [vmem:[%s0 + $0x40] sm:$0xf]
  %v32 = vld [vmem:[%s0 + $0x44] sm:$0xf]
  %v33 = vld [vmem:[%s0 + $0x48] sm:$0xf]
  %v34 = vld [vmem:[%s0 + $0x4c] sm:$0xf]
  %v35 = vld [vmem:[%s0 + $0x50] sm:$0xf]
  %v36 = vld [vmem:[%s0 + $0x54] sm:$0xf]
  %v37 = vld [vmem:[%s0 + $0x58] sm:$0xf]
  %v38 = vld [vmem:[%s0 + $0x5c] sm:$0xf]
  %v39 = vld [vmem:[%s0 + $0x60] sm:$0xf]
  %v40 = vld [vmem:[%s0 + $0x64] sm:$0xf]
  %v41 = vld [vmem:[%s0 + $0x68] sm:$0xf]
  %v42 = vld [vmem:[%s0 + $0x6c] sm:$0xf]
  %v43 = vld [vmem:[%s0 + $0x70] sm:$0xf]
  %v44 = vld [vmem:[%s0 + $0x74] sm:$0xf]
  %v45 = vld [vmem:[%s0 + $0x78] sm:$0xf]
  %v46 = vld [vmem:[%s0 + $0x7c] sm:$0xf]
  %v47 = vld [vmem:[%s0 + $0x80] sm:$0xf]
  %v48 = vld [vmem:[%s0 + $0x84] sm:$0xf]
  %v49 = vld [vmem:[%s0 + $0x88] sm:$0xf]
  %v50 = vld [vmem:[%s0 + $0x8c] sm:$0xf]
  %v51 = vld [vmem:[%s0 + $0x90] sm:$0xf]
  %v52 = vld [vmem:[%s0 + $0x94] sm:$0xf]
  %v53 = vld [vmem:[%s0 + $0x98] sm:$0xf]
  %v54 = vld [vmem:[%s0 + $0x9c] sm:$0xf]
  %v55 = vld [vmem:[%s0 + $0xa0] sm:$0xf]
  %v56 = vld [vmem:[%s0 + $0xa4] sm:$0xf]
  %v57 = vld [vmem:[%s0 + $0xa8] sm:$0xf]
  %v58 = vld [vmem:[%s0 + $0xac] sm:$0xf]
  %v59 = vld [vmem:[%s0 + $0xb0] sm:$0xf]
  %v60 = vld [vmem:[%s0 + $0xb4] sm:$0xf]
  %v61 = vld [vmem:[%s0 + $0xb8] sm:$0xf]
  %v62 = vld [vmem:[%s0 + $0xbc] sm:$0xf]
  %v63 = vld [vmem:[%s0 + $0xc0] sm:$0xf]
  %v64 = vld [vmem:[%s0 + $0xc4] sm:$0xf]
  %v65 = vld [vmem:[%s0 + $0xc8] sm:$0xf]
  %v66 = vld [vmem:[%s0 + $0xcc] sm:$0xf]
  %v67 = vld [vmem:[%s0 + $0xd0] sm:$0xf]
  %v68 = vld [vmem:[%s0 + $0xd4] sm:$0xf]
  %v69 = vld [vmem:[%s0 + $0xd8] sm:$0xf]
  %v70 = vld [vmem:[%s0 + $0xdc] sm:$0xf]
  %v71 = vld [vmem:[%s0 + $0xe0] sm:$0xf]
  %v72 = vld [vmem:[%s0 + $0xe4] sm:$0xf]
  %v73 = vld [vmem:[%s0 + $0xe8] sm:$0xf]
  %v74 = vld [vmem:[%s0 + $0xec] sm:$0xf]
  %v75 = vld [vmem:[%s0 + $0xf0] sm:$0xf]
  %v76 = vld [vmem:[%s0 + $0xf4] sm:$0xf]
  %v77 = vld [vmem:[%s0 + $0xf8] sm:$0xf]
  %v78 = vld [vmem:[%s0 + $0xfc] sm:$0xf]
  %v79 = vld [vmem:[%s0 + $0x100] sm:$0xf]
  %v80 = vld [vmem:[%s0 + $0x104] sm:$0xf]
  %v81 = vld [vmem:[%s0 + $0x108] sm:$0xf]
  %v82 = vld [vmem:[%s0 + $0x10c] sm:$0xf]
  %v83 = vld [vmem:[%s0 + $0x110] sm:$0xf]
  %v84 = vld [vmem:[%s0 + $0x114] sm:$0xf]
  %v85 = vld [vmem:[%s0 + $0x118] sm:$0xf]
  %v86 = vld [vmem:[%s0 + $0x11c] sm:$0xf]
  %v87 = vld [vmem:[%s0 + $0x120] sm:$0xf]
  %v88 = vld [vmem:[%s0 + $0x124] sm:$0xf]
  %v89 = vld [vmem:[%s0 + $0x128] sm:$0xf]
  %v90 = vld [vmem:[%s0 + $0x12c] sm:$0xf]
  %v91 = vld [vmem:[%s0 + $0x130] sm:$0xf]
  %v92 = vld [vmem:[%s0 + $0x134] sm:$0xf]
  %v93 = vld [vmem:[%s0 + $0x138] sm:$0xf]
  %v94 = vld [vmem:[%s0 + $0x13c] sm:$0xf]
  %v95 = vld [vmem:[%s0 + $0x140] sm:$0xf]
  %v96 = vld [vmem:[%s0 + $0x144] sm:$0xf]
  %v97 = vld [vmem:[%s0 + $0x148] sm:$0xf]
  %v98 = vld [vmem:[%s0 + $0x14c] sm:$0xf]
  %v99 = vld [vmem:[%s0 + $0x150] sm:$0xf]
  %v100 = vld [vmem:[%s0 + $0x154] sm:$0xf]
  %v101 = vld [vmem:[%s0 + $0x158] sm:$0xf]
  %v102 = vld [vmem:[%s0 + $0x15c] sm:$0xf]
  %v103 = vld [vmem:[%s0 + $0x160] sm:$0xf]
  %v104 = vld [vmem:[%s0 + $0x164] sm:$0xf]
  %v105 = vld [vmem:[%s0 + $0x168] sm:$0xf]
  %v106 = vld [vmem:[%s0 + $0x16c] sm:$0xf]
  %v107 = vld [vmem:[%s0 + $0x170] sm:$0xf]
  %v108 = vld [vmem:[%s0 + $0x174] sm:$0xf]
  %v109 = vld [vmem:[%s0 + $0x178] sm:$0xf]
  %v110 = vld [vmem:[%s0 + $0x17c] sm:$0xf]
  %v111 = vld [vmem:[%s0 + $0x180] sm:$0xf]
  %v112 = vld [vmem:[%s0 + $0x184] sm:$0xf]
  %v113 = vld [vmem:[%s0 + $0x188] sm:$0xf]
  %v114 = vld [vmem:[%s0 + $0x18c] sm:$0xf]
  %v115 = vld [vmem:[%s0 + $0x190] sm:$0xf]
  %v116 = vld [vmem:[%s0 + $0x194] sm:$0xf]
  %v117 = vld [vmem:[%s0 + $0x198] sm:$0xf]
  %v118 = vld [vmem:[%s0 + $0x19c] sm:$0xf]
  %v119 = vld [vmem:[%s0 + $0x1a0] sm:$0xf]
  %v120 = vld [vmem:[%s0 + $0x1a4] sm:$0xf]
  %v121 = vld [vmem:[%s0 + $0x1a8] sm:$0xf]
  %v122 = vld [vmem:[%s0 + $0x1ac] sm:$0xf]
  %v123 = vld [vmem:[%s0 + $0x1b0] sm:$0xf]
  %v124 = vld [vmem:[%s0 + $0x1b4] sm:$0xf]
  %v125 = vld [vmem:[%s0 + $0x1b8] sm:$0xf]
  %v126 = vld [vmem:[%s0 + $0x1bc] sm:$0xf]
  %v127 = vld [vmem:[%s0 + $0x1c0] sm:$0xf]
  %v128 = vld [vmem:[%s0 + $0x1c4] sm:$0xf]
  %v129 = vld [vmem:[%s0 + $0x1c8] sm:$0xf]
  %v130 = vld [vmem:[%s0 + $0x1cc] sm:$0xf]
  %v131 = vld [vmem:[%s0 + $0x1d0] sm:$0xf]
  %v132 = vld [vmem:[%s0 + $0x1d4] sm:$0xf]
  %v133 = vld [vmem:[%s0 + $0x1d8] sm:$0xf]
  %v134 = vld [vmem:[%s0 + $0x1dc] sm:$0xf]
  %v135 = vld [vmem:[%s0 + $0x1e0] sm:$0xf]
  %v136 = vld [vmem:[%s0 + $0x1e4] sm:$0xf]
  %v137 = vld [vmem:[%s0 + $0x1e8] sm:$0xf]
  %v138 = vld [vmem:[%s0 + $0x1ec] sm:$0xf]
  %v139 = vld [vmem:[%s0 + $0x1f0] sm:$0xf]
  %v140 = vld [vmem:[%s0 + $0x1f4] sm:$0xf]
  %v141 = vld [vmem:[%s0 + $0x1f8] sm:$0xf]
  %v142 = vld [vmem:[%s0 + $0x1fc] sm:$0xf]
  %v143 = vld [vmem:[%s0 + $0x200] sm:$0xf]
  %v144 = vld [vmem:[%s0 + $0x204] sm:$0xf]
  %v145 = vld [vmem:[%s0 + $0x208] sm:$0xf]
  %v146 = vld [vmem:[%s0 + $0x20c] sm:$0xf]
  %v147 = vld [vmem:[%s0 + $0x210] sm:$0xf]
  %v148 = vld [vmem:[%s0 + $0x214] sm:$0xf]
  %v149 = vld [vmem:[%s0 + $0x218] sm:$0xf]
  %v150 = vld [vmem:[%s0 + $0x21c] sm:$0xf]
  %v151 = vld [vmem:[%s0 + $0x220] sm:$0xf]
  %v152 = vld [vmem:[%s0 + $0x224] sm:$0xf]
  %v153 = vld [vmem:[%s0 + $0x228] sm:$0xf]
  %v154 = vld [vmem:[%s0 + $0x22c] sm:$0xf]
  %v155 = vld [vmem:[%s0 + $0x230] sm:$0xf]
  %v156 = vld [vmem:[%s0 + $0x234] sm:$0xf]
  %v157 = vld [vmem:[%s0 + $0x238] sm:$0xf]
  %v158 = vld [vmem:[%s0 + $0x23c] sm:$0xf]
  %v159 = vld [vmem:[%s1] sm:$0xf]
  %v160 = vld [vmem:[%s1 + $0x4] sm:$0xf]
  %v161 = vld [vmem:[%s1 + $0x8] sm:$0xf]
  %v162 = vld [vmem:[%s1 + $0xc] sm:$0x1]
  %v163 = vld [vmem:[%s2] sm:$0x1]
  %v165 = vperm.slane %v163, 0
  %v311 = vunpack.c.l.b16 %v15
  %v312 = vunpack.c.l.b16 %v16
  %v313 = vunpack.c.l.b16 %v17
  %v314 = vunpack.c.l.b16 %v18
  %v315 = vunpack.c.l.b16 %v19
  %v316 = vunpack.c.l.b16 %v20
  %v317 = vunpack.c.l.b16 %v21
  %v318 = vunpack.c.l.b16 %v22
  %v319 = vunpack.c.l.b16 %v23
  %v320 = vunpack.c.l.b16 %v24
  %v321 = vunpack.c.l.b16 %v25
  %v322 = vunpack.c.l.b16 %v26
  %v323 = vunpack.c.l.b16 %v27
  %v324 = vunpack.c.l.b16 %v28
  %v325 = vunpack.c.l.b16 %v29
  %v326 = vunpack.c.l.b16 %v30
  %v327 = vunpack.c.l.b16 %v31
  %v328 = vunpack.c.l.b16 %v32
  %v329 = vunpack.c.l.b16 %v33
  %v330 = vunpack.c.l.b16 %v34
  %v331 = vunpack.c.l.b16 %v35
  %v332 = vunpack.c.l.b16 %v36
  %v333 = vunpack.c.l.b16 %v37
  %v334 = vunpack.c.l.b16 %v38
  %v335 = vunpack.c.l.b16 %v39
  %v336 = vunpack.c.l.b16 %v40
  %v337 = vunpack.c.l.b16 %v41
  %v338 = vunpack.c.l.b16 %v42
  %v339 = vunpack.c.l.b16 %v43
  %v340 = vunpack.c.l.b16 %v44
  %v341 = vunpack.c.l.b16 %v45
  %v342 = vunpack.c.l.b16 %v46
  %v343 = vunpack.c.l.b16 %v47
  %v344 = vunpack.c.l.b16 %v48
  %v345 = vunpack.c.l.b16 %v49
  %v346 = vunpack.c.l.b16 %v50
  %v347 = vunpack.c.l.b16 %v51
  %v348 = vunpack.c.l.b16 %v52
  %v349 = vunpack.c.l.b16 %v53
  %v350 = vunpack.c.l.b16 %v54
  %v351 = vunpack.c.l.b16 %v55
  %v352 = vunpack.c.l.b16 %v56
  %v353 = vunpack.c.l.b16 %v57
  %v354 = vunpack.c.l.b16 %v58
  %v355 = vunpack.c.l.b16 %v59
  %v356 = vunpack.c.l.b16 %v60
  %v357 = vunpack.c.l.b16 %v61
  %v358 = vunpack.c.l.b16 %v62
  %v359 = vunpack.c.l.b16 %v63
  %v360 = vunpack.c.l.b16 %v64
  %v361 = vunpack.c.l.b16 %v65
  %v362 = vunpack.c.l.b16 %v66
  %v363 = vunpack.c.l.b16 %v67
  %v364 = vunpack.c.l.b16 %v68
  %v365 = vunpack.c.l.b16 %v69
  %v366 = vunpack.c.l.b16 %v70
  %v367 = vunpack.c.l.b16 %v71
  %v368 = vunpack.c.l.b16 %v72
  %v369 = vunpack.c.l.b16 %v73
  %v370 = vunpack.c.l.b16 %v74
  %v371 = vunpack.c.l.b16 %v75
  %v372 = vunpack.c.l.b16 %v76
  %v373 = vunpack.c.l.b16 %v77
  %v374 = vunpack.c.l.b16 %v78
  %v375 = vunpack.c.l.b16 %v79
  %v376 = vunpack.c.l.b16 %v80
  %v377 = vunpack.c.l.b16 %v81
  %v378 = vunpack.c.l.b16 %v82
  %v379 = vunpack.c.l.b16 %v83
  %v380 = vunpack.c.l.b16 %v84
  %v381 = vunpack.c.l.b16 %v85
  %v382 = vunpack.c.l.b16 %v86
  %v383 = vunpack.c.l.b16 %v87
  %v384 = vunpack.c.l.b16 %v88
  %v385 = vunpack.c.l.b16 %v89
  %v386 = vunpack.c.l.b16 %v90
  %v387 = vunpack.c.l.b16 %v91
  %v388 = vunpack.c.l.b16 %v92
  %v389 = vunpack.c.l.b16 %v93
  %v390 = vunpack.c.l.b16 %v94
  %v391 = vunpack.c.l.b16 %v95
  %v392 = vunpack.c.l.b16 %v96
  %v393 = vunpack.c.l.b16 %v97
  %v394 = vunpack.c.l.b16 %v98
  %v395 = vunpack.c.l.b16 %v99
  %v396 = vunpack.c.l.b16 %v100
  %v397 = vunpack.c.l.b16 %v101
  %v398 = vunpack.c.l.b16 %v102
  %v399 = vunpack.c.l.b16 %v103
  %v400 = vunpack.c.l.b16 %v104
  %v401 = vunpack.c.l.b16 %v105
  %v402 = vunpack.c.l.b16 %v106
  %v403 = vunpack.c.l.b16 %v107
  %v404 = vunpack.c.l.b16 %v108
  %v405 = vunpack.c.l.b16 %v109
  %v406 = vunpack.c.l.b16 %v110
  %v407 = vunpack.c.l.b16 %v111
  %v408 = vunpack.c.l.b16 %v112
  %v409 = vunpack.c.l.b16 %v113
  %v410 = vunpack.c.l.b16 %v114
  %v411 = vunpack.c.l.b16 %v115
  %v412 = vunpack.c.l.b16 %v116
  %v413 = vunpack.c.l.b16 %v117
  %v414 = vunpack.c.l.b16 %v118
  %v415 = vunpack.c.l.b16 %v119
  %v416 = vunpack.c.l.b16 %v120
  %v417 = vunpack.c.l.b16 %v121
  %v418 = vunpack.c.l.b16 %v122
  %v419 = vunpack.c.l.b16 %v123
  %v420 = vunpack.c.l.b16 %v124
  %v421 = vunpack.c.l.b16 %v125
  %v422 = vunpack.c.l.b16 %v126
  %v423 = vunpack.c.l.b16 %v127
  %v424 = vunpack.c.l.b16 %v128
  %v425 = vunpack.c.l.b16 %v129
  %v426 = vunpack.c.l.b16 %v130
  %v427 = vunpack.c.l.b16 %v131
  %v428 = vunpack.c.l.b16 %v132
  %v429 = vunpack.c.l.b16 %v133
  %v430 = vunpack.c.l.b16 %v134
  %v431 = vunpack.c.l.b16 %v135
  %v432 = vunpack.c.l.b16 %v136
  %v433 = vunpack.c.l.b16 %v137
  %v434 = vunpack.c.l.b16 %v138
  %v435 = vunpack.c.l.b16 %v139
  %v436 = vunpack.c.l.b16 %v140
  %v437 = vunpack.c.l.b16 %v141
  %v438 = vunpack.c.l.b16 %v142
  %v439 = vunpack.c.l.b16 %v143
  %v440 = vunpack.c.l.b16 %v144
  %v441 = vunpack.c.l.b16 %v145
  %v442 = vunpack.c.l.b16 %v146
  %v443 = vunpack.c.l.b16 %v147
  %v444 = vunpack.c.l.b16 %v148
  %v445 = vunpack.c.l.b16 %v149
  %v446 = vunpack.c.l.b16 %v150
  %v447 = vunpack.c.l.b16 %v151
  %v448 = vunpack.c.l.b16 %v152
  %v449 = vunpack.c.l.b16 %v153
  %v450 = vunpack.c.l.b16 %v154
  %v451 = vunpack.c.l.b16 %v155
  %v452 = vunpack.c.l.b16 %v156
  %v453 = vunpack.c.l.b16 %v157
  %v454 = vunpack.c.l.b16 %v158
  %v455 = vpack.c.b16 %v312, %v311
  %v456 = vpack.c.b16 %v314, %v313
  %v457 = vpack.c.b16 %v316, %v315
  %v458 = vpack.c.b16 %v318, %v317
  %v459 = vpack.c.b16 %v320, %v319
  %v460 = vpack.c.b16 %v322, %v321
  %v461 = vpack.c.b16 %v324, %v323
  %v462 = vpack.c.b16 %v326, %v325
  %v463 = vpack.c.b16 %v328, %v327
  %v464 = vpack.c.b16 %v330, %v329
  %v465 = vpack.c.b16 %v332, %v331
  %v466 = vpack.c.b16 %v334, %v333
  %v467 = vpack.c.b16 %v336, %v335
  %v468 = vpack.c.b16 %v338, %v337
  %v469 = vpack.c.b16 %v340, %v339
  %v470 = vpack.c.b16 %v342, %v341
  %v471 = vpack.c.b16 %v344, %v343
  %v472 = vpack.c.b16 %v346, %v345
  %v473 = vpack.c.b16 %v348, %v347
  %v474 = vpack.c.b16 %v350, %v349
  %v475 = vpack.c.b16 %v352, %v351
  %v476 = vpack.c.b16 %v354, %v353
  %v477 = vpack.c.b16 %v356, %v355
  %v478 = vpack.c.b16 %v358, %v357
  %v479 = vpack.c.b16 %v360, %v359
  %v480 = vpack.c.b16 %v362, %v361
  %v481 = vpack.c.b16 %v364, %v363
  %v482 = vpack.c.b16 %v366, %v365
  %v483 = vpack.c.b16 %v368, %v367
  %v484 = vpack.c.b16 %v370, %v369
  %v485 = vpack.c.b16 %v372, %v371
  %v486 = vpack.c.b16 %v374, %v373
  %v487 = vpack.c.b16 %v376, %v375
  %v488 = vpack.c.b16 %v378, %v377
  %v489 = vpack.c.b16 %v380, %v379
  %v490 = vpack.c.b16 %v382, %v381
  %v491 = vpack.c.b16 %v384, %v383
  %v492 = vpack.c.b16 %v386, %v385
  %v493 = vpack.c.b16 %v388, %v387
  %v494 = vpack.c.b16 %v390, %v389
  %v495 = vpack.c.b16 %v392, %v391
  %v496 = vpack.c.b16 %v394, %v393
  %v497 = vpack.c.b16 %v396, %v395
  %v498 = vpack.c.b16 %v398, %v397
  %v499 = vpack.c.b16 %v400, %v399
  %v500 = vpack.c.b16 %v402, %v401
  %v501 = vpack.c.b16 %v404, %v403
  %v502 = vpack.c.b16 %v406, %v405
  %v503 = vpack.c.b16 %v408, %v407
  %v504 = vpack.c.b16 %v410, %v409
  %v505 = vpack.c.b16 %v412, %v411
  %v506 = vpack.c.b16 %v414, %v413
  %v507 = vpack.c.b16 %v416, %v415
  %v508 = vpack.c.b16 %v418, %v417
  %v509 = vpack.c.b16 %v420, %v419
  %v510 = vpack.c.b16 %v422, %v421
  %v511 = vpack.c.b16 %v424, %v423
  %v512 = vpack.c.b16 %v426, %v425
  %v513 = vpack.c.b16 %v428, %v427
  %v514 = vpack.c.b16 %v430, %v429
  %v515 = vpack.c.b16 %v432, %v431
  %v516 = vpack.c.b16 %v434, %v433
  %v517 = vpack.c.b16 %v436, %v435
  %v518 = vpack.c.b16 %v438, %v437
  %v519 = vpack.c.b16 %v440, %v439
  %v520 = vpack.c.b16 %v442, %v441
  %v521 = vpack.c.b16 %v444, %v443
  %v522 = vpack.c.b16 %v446, %v445
  %v523 = vpack.c.b16 %v448, %v447
  %v524 = vpack.c.b16 %v450, %v449
  %v525 = vpack.c.b16 %v452, %v451
  %v526 = vpack.c.b16 %v454, %v453
  %v531 = vunpack.c.l.b16 %v159
  %v532 = vunpack.c.l.b16 %v160
  %v533 = vunpack.c.l.b16 %v161
  %v534 = vunpack.c.l.b16 %v162
  %v535 = vpack.c.b16 %v532, %v531
  %v536 = vpack.c.b16 %v534, %v533
  %vm538 = vcmask 203776
  %v540 = vsel %vm538, %v455, 0
  %v543 = vsel %vm538, %v456, 0
  %v546 = vsel %vm538, %v457, 0
  %v549 = vsel %vm538, %v458, 0
  %v552 = vsel %vm538, %v459, 0
  %v555 = vsel %vm538, %v460, 0
  %v558 = vsel %vm538, %v461, 0
  %v561 = vsel %vm538, %v462, 0
  %v564 = vsel %vm538, %v463, 0
  %v567 = vsel %vm538, %v464, 0
  %v570 = vsel %vm538, %v465, 0
  %v573 = vsel %vm538, %v466, 0
  %v576 = vsel %vm538, %v467, 0
  %v579 = vsel %vm538, %v468, 0
  %v582 = vsel %vm538, %v469, 0
  %v585 = vsel %vm538, %v470, 0
  %v588 = vsel %vm538, %v471, 0
  %v591 = vsel %vm538, %v472, 0
  %v594 = vsel %vm538, %v473, 0
  %v597 = vsel %vm538, %v474, 0
  %v600 = vsel %vm538, %v475, 0
  %v603 = vsel %vm538, %v476, 0
  %v606 = vsel %vm538, %v477, 0
  %v609 = vsel %vm538, %v478, 0
  %v612 = vsel %vm538, %v479, 0
  %v615 = vsel %vm538, %v480, 0
  %v618 = vsel %vm538, %v481, 0
  %v621 = vsel %vm538, %v482, 0
  %v624 = vsel %vm538, %v483, 0
  %v627 = vsel %vm538, %v484, 0
  %v630 = vsel %vm538, %v485, 0
  %v633 = vsel %vm538, %v486, 0
  %v636 = vsel %vm538, %v487, 0
  %v639 = vsel %vm538, %v488, 0
  %v642 = vsel %vm538, %v489, 0
  %v645 = vsel %vm538, %v490, 0
  %v648 = vsel %vm538, %v491, 0
  %v651 = vsel %vm538, %v492, 0
  %v654 = vsel %vm538, %v493, 0
  %v657 = vsel %vm538, %v494, 0
  %v660 = vsel %vm538, %v495, 0
  %v663 = vsel %vm538, %v496, 0
  %v666 = vsel %vm538, %v497, 0
  %v669 = vsel %vm538, %v498, 0
  %v672 = vsel %vm538, %v499, 0
  %v675 = vsel %vm538, %v500, 0
  %v678 = vsel %vm538, %v501, 0
  %v681 = vsel %vm538, %v502, 0
  %v684 = vsel %vm538, %v503, 0
  %v687 = vsel %vm538, %v504, 0
  %v690 = vsel %vm538, %v505, 0
  %v693 = vsel %vm538, %v506, 0
  %v696 = vsel %vm538, %v507, 0
  %v699 = vsel %vm538, %v508, 0
  %v702 = vsel %vm538, %v509, 0
  %v705 = vsel %vm538, %v510, 0
  %v708 = vsel %vm538, %v511, 0
  %v711 = vsel %vm538, %v512, 0
  %v714 = vsel %vm538, %v513, 0
  %v717 = vsel %vm538, %v514, 0
  %v720 = vsel %vm538, %v515, 0
  %v723 = vsel %vm538, %v516, 0
  %v726 = vsel %vm538, %v517, 0
  %v729 = vsel %vm538, %v518, 0
  %v732 = vsel %vm538, %v519, 0
  %v735 = vsel %vm538, %v520, 0
  %v738 = vsel %vm538, %v521, 0
  %v741 = vsel %vm538, %v522, 0
  %v744 = vsel %vm538, %v523, 0
  %v747 = vsel %vm538, %v524, 0
  %v750 = vsel %vm538, %v525, 0
  %v753 = vsel %vm538, %v526, 0
  %vm755 = vcmask 1043456
  %vm756 = vcmask 1044480
  %v757 = vsel %vm755, 4294967295, 65535
  %v758 = vsel %vm756, %v757, 0
  %v760 = vand.u32 %v536, %v758
  %762 = vmatpush.bf16.msra.mxu0 0
  %763 = vmatpush.bf16.msra.mxu0 0
  %764 = vmatpush.bf16.msra.mxu0 0
  %765 = vmatpush.bf16.msra.mxu0 0
  %766 = vmatpush.bf16.msra.mxu0 0
  %767 = vmatpush.bf16.msra.mxu0 0
  %768 = vmatpush.bf16.msra.mxu0 %v760
  %769 = vmatpush.bf16.msra.mxu0 %v535
  %770 = vmatmul.bf16.gmra.mxu0 %v540
  %v771 = vpop.f32.mrf.mxu0
  %v772 = vadd.f32 %v165, %v771
  %v773 = vpop.f32.mrf.mxu0
  %v774 = vadd.f32 %v165, %v773
  %775 = vmatmul.bf16.gmra.mxu0 %v543
  %v776 = vpop.f32.mrf.mxu0
  %v777 = vadd.f32 %v165, %v776
  %v778 = vpop.f32.mrf.mxu0
  %v779 = vadd.f32 %v165, %v778
  %780 = vmatmul.bf16.gmra.mxu0 %v546
  %v781 = vpop.f32.mrf.mxu0
  %v782 = vadd.f32 %v165, %v781
  %v783 = vpop.f32.mrf.mxu0
  %v784 = vadd.f32 %v165, %v783
  %785 = vmatmul.bf16.gmra.mxu0 %v549
  %v786 = vpop.f32.mrf.mxu0
  %v787 = vadd.f32 %v165, %v786
  %v788 = vpop.f32.mrf.mxu0
  %v789 = vadd.f32 %v165, %v788
  %790 = vmatmul.bf16.gmra.mxu0 %v552
  %v791 = vpop.f32.mrf.mxu0
  %v792 = vadd.f32 %v165, %v791
  %v793 = vpop.f32.mrf.mxu0
  %v794 = vadd.f32 %v165, %v793
  %795 = vmatmul.bf16.gmra.mxu0 %v555
  %v796 = vpop.f32.mrf.mxu0
  %v797 = vadd.f32 %v165, %v796
  %v798 = vpop.f32.mrf.mxu0
  %v799 = vadd.f32 %v165, %v798
  %800 = vmatmul.bf16.gmra.mxu0 %v558
  %v801 = vpop.f32.mrf.mxu0
  %v802 = vadd.f32 %v165, %v801
  %v803 = vpop.f32.mrf.mxu0
  %v804 = vadd.f32 %v165, %v803
  %805 = vmatmul.bf16.gmra.mxu0 %v561
  %v806 = vpop.f32.mrf.mxu0
  %v807 = vadd.f32 %v165, %v806
  %v808 = vpop.f32.mrf.mxu0
  %v809 = vadd.f32 %v165, %v808
  %810 = vmatmul.bf16.gmra.mxu0 %v564
  %v811 = vpop.f32.mrf.mxu0
  %v812 = vadd.f32 %v165, %v811
  %v813 = vpop.f32.mrf.mxu0
  %v814 = vadd.f32 %v165, %v813
  %815 = vmatmul.bf16.gmra.mxu0 %v567
  %v816 = vpop.f32.mrf.mxu0
  %v817 = vadd.f32 %v165, %v816
  %v818 = vpop.f32.mrf.mxu0
  %v819 = vadd.f32 %v165, %v818
  %820 = vmatmul.bf16.gmra.mxu0 %v570
  %v821 = vpop.f32.mrf.mxu0
  %v822 = vadd.f32 %v165, %v821
  %v823 = vpop.f32.mrf.mxu0
  %v824 = vadd.f32 %v165, %v823
  %825 = vmatmul.bf16.gmra.mxu0 %v573
  %v826 = vpop.f32.mrf.mxu0
  %v827 = vadd.f32 %v165, %v826
  %v828 = vpop.f32.mrf.mxu0
  %v829 = vadd.f32 %v165, %v828
  %830 = vmatmul.bf16.gmra.mxu0 %v576
  %v831 = vpop.f32.mrf.mxu0
  %v832 = vadd.f32 %v165, %v831
  %v833 = vpop.f32.mrf.mxu0
  %v834 = vadd.f32 %v165, %v833
  %835 = vmatmul.bf16.gmra.mxu0 %v579
  %v836 = vpop.f32.mrf.mxu0
  %v837 = vadd.f32 %v165, %v836
  %v838 = vpop.f32.mrf.mxu0
  %v839 = vadd.f32 %v165, %v838
  %840 = vmatmul.bf16.gmra.mxu0 %v582
  %v841 = vpop.f32.mrf.mxu0
  %v842 = vadd.f32 %v165, %v841
  %v843 = vpop.f32.mrf.mxu0
  %v844 = vadd.f32 %v165, %v843
  %845 = vmatmul.bf16.gmra.mxu0 %v585
  %v846 = vpop.f32.mrf.mxu0
  %v847 = vadd.f32 %v165, %v846
  %v848 = vpop.f32.mrf.mxu0
  %v849 = vadd.f32 %v165, %v848
  %850 = vmatmul.bf16.gmra.mxu0 %v588
  %v851 = vpop.f32.mrf.mxu0
  %v852 = vadd.f32 %v165, %v851
  %v853 = vpop.f32.mrf.mxu0
  %v854 = vadd.f32 %v165, %v853
  %855 = vmatmul.bf16.gmra.mxu0 %v591
  %v856 = vpop.f32.mrf.mxu0
  %v857 = vadd.f32 %v165, %v856
  %v858 = vpop.f32.mrf.mxu0
  %v859 = vadd.f32 %v165, %v858
  %860 = vmatmul.bf16.gmra.mxu0 %v594
  %v861 = vpop.f32.mrf.mxu0
  %v862 = vadd.f32 %v165, %v861
  %v863 = vpop.f32.mrf.mxu0
  %v864 = vadd.f32 %v165, %v863
  %865 = vmatmul.bf16.gmra.mxu0 %v597
  %v866 = vpop.f32.mrf.mxu0
  %v867 = vadd.f32 %v165, %v866
  %v868 = vpop.f32.mrf.mxu0
  %v869 = vadd.f32 %v165, %v868
  %870 = vmatmul.bf16.gmra.mxu0 %v600
  %v871 = vpop.f32.mrf.mxu0
  %v872 = vadd.f32 %v165, %v871
  %v873 = vpop.f32.mrf.mxu0
  %v874 = vadd.f32 %v165, %v873
  %875 = vmatmul.bf16.gmra.mxu0 %v603
  %v876 = vpop.f32.mrf.mxu0
  %v877 = vadd.f32 %v165, %v876
  %v878 = vpop.f32.mrf.mxu0
  %v879 = vadd.f32 %v165, %v878
  %880 = vmatmul.bf16.gmra.mxu0 %v606
  %v881 = vpop.f32.mrf.mxu0
  %v882 = vadd.f32 %v165, %v881
  %v883 = vpop.f32.mrf.mxu0
  %v884 = vadd.f32 %v165, %v883
  %885 = vmatmul.bf16.gmra.mxu0 %v609
  %v886 = vpop.f32.mrf.mxu0
  %v887 = vadd.f32 %v165, %v886
  %v888 = vpop.f32.mrf.mxu0
  %v889 = vadd.f32 %v165, %v888
  %890 = vmatmul.bf16.gmra.mxu0 %v612
  %v891 = vpop.f32.mrf.mxu0
  %v892 = vadd.f32 %v165, %v891
  %v893 = vpop.f32.mrf.mxu0
  %v894 = vadd.f32 %v165, %v893
  %895 = vmatmul.bf16.gmra.mxu0 %v615
  %v896 = vpop.f32.mrf.mxu0
  %v897 = vadd.f32 %v165, %v896
  %v898 = vpop.f32.mrf.mxu0
  %v899 = vadd.f32 %v165, %v898
  %900 = vmatmul.bf16.gmra.mxu0 %v618
  %v901 = vpop.f32.mrf.mxu0
  %v902 = vadd.f32 %v165, %v901
  %v903 = vpop.f32.mrf.mxu0
  %v904 = vadd.f32 %v165, %v903
  %905 = vmatmul.bf16.gmra.mxu0 %v621
  %v906 = vpop.f32.mrf.mxu0
  %v907 = vadd.f32 %v165, %v906
  %v908 = vpop.f32.mrf.mxu0
  %v909 = vadd.f32 %v165, %v908
  %910 = vmatmul.bf16.gmra.mxu0 %v624
  %v911 = vpop.f32.mrf.mxu0
  %v912 = vadd.f32 %v165, %v911
  %v913 = vpop.f32.mrf.mxu0
  %v914 = vadd.f32 %v165, %v913
  %915 = vmatmul.bf16.gmra.mxu0 %v627
  %v916 = vpop.f32.mrf.mxu0
  %v917 = vadd.f32 %v165, %v916
  %v918 = vpop.f32.mrf.mxu0
  %v919 = vadd.f32 %v165, %v918
  %920 = vmatmul.bf16.gmra.mxu0 %v630
  %v921 = vpop.f32.mrf.mxu0
  %v922 = vadd.f32 %v165, %v921
  %v923 = vpop.f32.mrf.mxu0
  %v924 = vadd.f32 %v165, %v923
  %925 = vmatmul.bf16.gmra.mxu0 %v633
  %v926 = vpop.f32.mrf.mxu0
  %v927 = vadd.f32 %v165, %v926
  %v928 = vpop.f32.mrf.mxu0
  %v929 = vadd.f32 %v165, %v928
  %930 = vmatmul.bf16.gmra.mxu0 %v636
  %v931 = vpop.f32.mrf.mxu0
  %v932 = vadd.f32 %v165, %v931
  %v933 = vpop.f32.mrf.mxu0
  %v934 = vadd.f32 %v165, %v933
  %935 = vmatmul.bf16.gmra.mxu0 %v639
  %v936 = vpop.f32.mrf.mxu0
  %v937 = vadd.f32 %v165, %v936
  %v938 = vpop.f32.mrf.mxu0
  %v939 = vadd.f32 %v165, %v938
  %940 = vmatmul.bf16.gmra.mxu0 %v642
  %v941 = vpop.f32.mrf.mxu0
  %v942 = vadd.f32 %v165, %v941
  %v943 = vpop.f32.mrf.mxu0
  %v944 = vadd.f32 %v165, %v943
  %945 = vmatmul.bf16.gmra.mxu0 %v645
  %v946 = vpop.f32.mrf.mxu0
  %v947 = vadd.f32 %v165, %v946
  %v948 = vpop.f32.mrf.mxu0
  %v949 = vadd.f32 %v165, %v948
  %950 = vmatmul.bf16.gmra.mxu0 %v648
  %v951 = vpop.f32.mrf.mxu0
  %v952 = vadd.f32 %v165, %v951
  %v953 = vpop.f32.mrf.mxu0
  %v954 = vadd.f32 %v165, %v953
  %955 = vmatmul.bf16.gmra.mxu0 %v651
  %v956 = vpop.f32.mrf.mxu0
  %v957 = vadd.f32 %v165, %v956
  %v958 = vpop.f32.mrf.mxu0
  %v959 = vadd.f32 %v165, %v958
  %960 = vmatmul.bf16.gmra.mxu0 %v654
  %v961 = vpop.f32.mrf.mxu0
  %v962 = vadd.f32 %v165, %v961
  %v963 = vpop.f32.mrf.mxu0
  %v964 = vadd.f32 %v165, %v963
  %965 = vmatmul.bf16.gmra.mxu0 %v657
  %v966 = vpop.f32.mrf.mxu0
  %v967 = vadd.f32 %v165, %v966
  %v968 = vpop.f32.mrf.mxu0
  %v969 = vadd.f32 %v165, %v968
  %970 = vmatmul.bf16.gmra.mxu0 %v660
  %v971 = vpop.f32.mrf.mxu0
  %v972 = vadd.f32 %v165, %v971
  %v973 = vpop.f32.mrf.mxu0
  %v974 = vadd.f32 %v165, %v973
  %975 = vmatmul.bf16.gmra.mxu0 %v663
  %v976 = vpop.f32.mrf.mxu0
  %v977 = vadd.f32 %v165, %v976
  %v978 = vpop.f32.mrf.mxu0
  %v979 = vadd.f32 %v165, %v978
  %980 = vmatmul.bf16.gmra.mxu0 %v666
  %v981 = vpop.f32.mrf.mxu0
  %v982 = vadd.f32 %v165, %v981
  %v983 = vpop.f32.mrf.mxu0
  %v984 = vadd.f32 %v165, %v983
  %985 = vmatmul.bf16.gmra.mxu0 %v669
  %v986 = vpop.f32.mrf.mxu0
  %v987 = vadd.f32 %v165, %v986
  %v988 = vpop.f32.mrf.mxu0
  %v989 = vadd.f32 %v165, %v988
  %990 = vmatmul.bf16.gmra.mxu0 %v672
  %v991 = vpop.f32.mrf.mxu0
  %v992 = vadd.f32 %v165, %v991
  %v993 = vpop.f32.mrf.mxu0
  %v994 = vadd.f32 %v165, %v993
  %995 = vmatmul.bf16.gmra.mxu0 %v675
  %v996 = vpop.f32.mrf.mxu0
  %v997 = vadd.f32 %v165, %v996
  %v998 = vpop.f32.mrf.mxu0
  %v999 = vadd.f32 %v165, %v998
  %1000 = vmatmul.bf16.gmra.mxu0 %v678
  %v1001 = vpop.f32.mrf.mxu0
  %v1002 = vadd.f32 %v165, %v1001
  %v1003 = vpop.f32.mrf.mxu0
  %v1004 = vadd.f32 %v165, %v1003
  %1005 = vmatmul.bf16.gmra.mxu0 %v681
  %v1006 = vpop.f32.mrf.mxu0
  %v1007 = vadd.f32 %v165, %v1006
  %v1008 = vpop.f32.mrf.mxu0
  %v1009 = vadd.f32 %v165, %v1008
  %1010 = vmatmul.bf16.gmra.mxu0 %v684
  %v1011 = vpop.f32.mrf.mxu0
  %v1012 = vadd.f32 %v165, %v1011
  %v1013 = vpop.f32.mrf.mxu0
  %v1014 = vadd.f32 %v165, %v1013
  %1015 = vmatmul.bf16.gmra.mxu0 %v687
  %v1016 = vpop.f32.mrf.mxu0
  %v1017 = vadd.f32 %v165, %v1016
  %v1018 = vpop.f32.mrf.mxu0
  %v1019 = vadd.f32 %v165, %v1018
  %1020 = vmatmul.bf16.gmra.mxu0 %v690
  %v1021 = vpop.f32.mrf.mxu0
  %v1022 = vadd.f32 %v165, %v1021
  %v1023 = vpop.f32.mrf.mxu0
  %v1024 = vadd.f32 %v165, %v1023
  %1025 = vmatmul.bf16.gmra.mxu0 %v693
  %v1026 = vpop.f32.mrf.mxu0
  %v1027 = vadd.f32 %v165, %v1026
  %v1028 = vpop.f32.mrf.mxu0
  %v1029 = vadd.f32 %v165, %v1028
  %1030 = vmatmul.bf16.gmra.mxu0 %v696
  %v1031 = vpop.f32.mrf.mxu0
  %v1032 = vadd.f32 %v165, %v1031
  %v1033 = vpop.f32.mrf.mxu0
  %v1034 = vadd.f32 %v165, %v1033
  %1035 = vmatmul.bf16.gmra.mxu0 %v699
  %v1036 = vpop.f32.mrf.mxu0
  %v1037 = vadd.f32 %v165, %v1036
  %v1038 = vpop.f32.mrf.mxu0
  %v1039 = vadd.f32 %v165, %v1038
  %1040 = vmatmul.bf16.gmra.mxu0 %v702
  %v1041 = vpop.f32.mrf.mxu0
  %v1042 = vadd.f32 %v165, %v1041
  %v1043 = vpop.f32.mrf.mxu0
  %v1044 = vadd.f32 %v165, %v1043
  %1045 = vmatmul.bf16.gmra.mxu0 %v705
  %v1046 = vpop.f32.mrf.mxu0
  %v1047 = vadd.f32 %v165, %v1046
  %v1048 = vpop.f32.mrf.mxu0
  %v1049 = vadd.f32 %v165, %v1048
  %1050 = vmatmul.bf16.gmra.mxu0 %v708
  %v1051 = vpop.f32.mrf.mxu0
  %v1052 = vadd.f32 %v165, %v1051
  %v1053 = vpop.f32.mrf.mxu0
  %v1054 = vadd.f32 %v165, %v1053
  %1055 = vmatmul.bf16.gmra.mxu0 %v711
  %v1056 = vpop.f32.mrf.mxu0
  %v1057 = vadd.f32 %v165, %v1056
  %v1058 = vpop.f32.mrf.mxu0
  %v1059 = vadd.f32 %v165, %v1058
  %1060 = vmatmul.bf16.gmra.mxu0 %v714
  %v1061 = vpop.f32.mrf.mxu0
  %v1062 = vadd.f32 %v165, %v1061
  %v1063 = vpop.f32.mrf.mxu0
  %v1064 = vadd.f32 %v165, %v1063
  %1065 = vmatmul.bf16.gmra.mxu0 %v717
  %v1066 = vpop.f32.mrf.mxu0
  %v1067 = vadd.f32 %v165, %v1066
  %v1068 = vpop.f32.mrf.mxu0
  %v1069 = vadd.f32 %v165, %v1068
  %1070 = vmatmul.bf16.gmra.mxu0 %v720
  %v1071 = vpop.f32.mrf.mxu0
  %v1072 = vadd.f32 %v165, %v1071
  %v1073 = vpop.f32.mrf.mxu0
  %v1074 = vadd.f32 %v165, %v1073
  %1075 = vmatmul.bf16.gmra.mxu0 %v723
  %v1076 = vpop.f32.mrf.mxu0
  %v1077 = vadd.f32 %v165, %v1076
  %v1078 = vpop.f32.mrf.mxu0
  %v1079 = vadd.f32 %v165, %v1078
  %1080 = vmatmul.bf16.gmra.mxu0 %v726
  %v1081 = vpop.f32.mrf.mxu0
  %v1082 = vadd.f32 %v165, %v1081
  %v1083 = vpop.f32.mrf.mxu0
  %v1084 = vadd.f32 %v165, %v1083
  %1085 = vmatmul.bf16.gmra.mxu0 %v729
  %v1086 = vpop.f32.mrf.mxu0
  %v1087 = vadd.f32 %v165, %v1086
  %v1088 = vpop.f32.mrf.mxu0
  %v1089 = vadd.f32 %v165, %v1088
  %1090 = vmatmul.bf16.gmra.mxu0 %v732
  %v1091 = vpop.f32.mrf.mxu0
  %v1092 = vadd.f32 %v165, %v1091
  %v1093 = vpop.f32.mrf.mxu0
  %v1094 = vadd.f32 %v165, %v1093
  %1095 = vmatmul.bf16.gmra.mxu0 %v735
  %v1096 = vpop.f32.mrf.mxu0
  %v1097 = vadd.f32 %v165, %v1096
  %v1098 = vpop.f32.mrf.mxu0
  %v1099 = vadd.f32 %v165, %v1098
  %1100 = vmatmul.bf16.gmra.mxu0 %v738
  %v1101 = vpop.f32.mrf.mxu0
  %v1102 = vadd.f32 %v165, %v1101
  %v1103 = vpop.f32.mrf.mxu0
  %v1104 = vadd.f32 %v165, %v1103
  %1105 = vmatmul.bf16.gmra.mxu0 %v741
  %v1106 = vpop.f32.mrf.mxu0
  %v1107 = vadd.f32 %v165, %v1106
  %v1108 = vpop.f32.mrf.mxu0
  %v1109 = vadd.f32 %v165, %v1108
  %1110 = vmatmul.bf16.gmra.mxu0 %v744
  %v1111 = vpop.f32.mrf.mxu0
  %v1112 = vadd.f32 %v165, %v1111
  %v1113 = vpop.f32.mrf.mxu0
  %v1114 = vadd.f32 %v165, %v1113
  %1115 = vmatmul.bf16.gmra.mxu0 %v747
  %v1116 = vpop.f32.mrf.mxu0
  %v1117 = vadd.f32 %v165, %v1116
  %v1118 = vpop.f32.mrf.mxu0
  %v1119 = vadd.f32 %v165, %v1118
  %1120 = vmatmul.bf16.gmra.mxu0 %v750
  %v1121 = vpop.f32.mrf.mxu0
  %v1122 = vadd.f32 %v165, %v1121
  %v1123 = vpop.f32.mrf.mxu0
  %v1124 = vadd.f32 %v165, %v1123
  %1125 = vmatmul.bf16.gmra.mxu0 %v753
  %v1126 = vpop.f32.mrf.mxu0
  %v1127 = vadd.f32 %v165, %v1126
  %v1128 = vpop.f32.mrf.mxu0
  %v1129 = vadd.f32 %v165, %v1128
  %1130 = vdwg.mxu0
  %v1131 = vmax.f32 %v772, 0.0
  %v1132 = vmax.f32 %v774, 0.0
  %v1133 = vmax.f32 %v777, 0.0
  %v1134 = vmax.f32 %v779, 0.0
  %v1135 = vmax.f32 %v782, 0.0
  %v1136 = vmax.f32 %v784, 0.0
  %v1137 = vmax.f32 %v787, 0.0
  %v1138 = vmax.f32 %v789, 0.0
  %v1139 = vmax.f32 %v792, 0.0
  %v1140 = vmax.f32 %v794, 0.0
  %v1141 = vmax.f32 %v797, 0.0
  %v1142 = vmax.f32 %v799, 0.0
  %v1143 = vmax.f32 %v802, 0.0
  %v1144 = vmax.f32 %v804, 0.0
  %v1145 = vmax.f32 %v807, 0.0
  %v1146 = vmax.f32 %v809, 0.0
  %v1147 = vmax.f32 %v812, 0.0
  %v1148 = vmax.f32 %v814, 0.0
  %v1149 = vmax.f32 %v817, 0.0
  %v1150 = vmax.f32 %v819, 0.0
  %v1151 = vmax.f32 %v822, 0.0
  %v1152 = vmax.f32 %v824, 0.0
  %v1153 = vmax.f32 %v827, 0.0
  %v1154 = vmax.f32 %v829, 0.0
  %v1155 = vmax.f32 %v832, 0.0
  %v1156 = vmax.f32 %v834, 0.0
  %v1157 = vmax.f32 %v837, 0.0
  %v1158 = vmax.f32 %v839, 0.0
  %v1159 = vmax.f32 %v842, 0.0
  %v1160 = vmax.f32 %v844, 0.0
  %v1161 = vmax.f32 %v847, 0.0
  %v1162 = vmax.f32 %v849, 0.0
  %v1163 = vmax.f32 %v852, 0.0
  %v1164 = vmax.f32 %v854, 0.0
  %v1165 = vmax.f32 %v857, 0.0
  %v1166 = vmax.f32 %v859, 0.0
  %v1167 = vmax.f32 %v862, 0.0
  %v1168 = vmax.f32 %v864, 0.0
  %v1169 = vmax.f32 %v867, 0.0
  %v1170 = vmax.f32 %v869, 0.0
  %v1171 = vmax.f32 %v872, 0.0
  %v1172 = vmax.f32 %v874, 0.0
  %v1173 = vmax.f32 %v877, 0.0
  %v1174 = vmax.f32 %v879, 0.0
  %v1175 = vmax.f32 %v882, 0.0
  %v1176 = vmax.f32 %v884, 0.0
  %v1177 = vmax.f32 %v887, 0.0
  %v1178 = vmax.f32 %v889, 0.0
  %v1179 = vmax.f32 %v892, 0.0
  %v1180 = vmax.f32 %v894, 0.0
  %v1181 = vmax.f32 %v897, 0.0
  %v1182 = vmax.f32 %v899, 0.0
  %v1183 = vmax.f32 %v902, 0.0
  %v1184 = vmax.f32 %v904, 0.0
  %v1185 = vmax.f32 %v907, 0.0
  %v1186 = vmax.f32 %v909, 0.0
  %v1187 = vmax.f32 %v912, 0.0
  %v1188 = vmax.f32 %v914, 0.0
  %v1189 = vmax.f32 %v917, 0.0
  %v1190 = vmax.f32 %v919, 0.0
  %v1191 = vmax.f32 %v922, 0.0
  %v1192 = vmax.f32 %v924, 0.0
  %v1193 = vmax.f32 %v927, 0.0
  %v1194 = vmax.f32 %v929, 0.0
  %v1195 = vmax.f32 %v932, 0.0
  %v1196 = vmax.f32 %v934, 0.0
  %v1197 = vmax.f32 %v937, 0.0
  %v1198 = vmax.f32 %v939, 0.0
  %v1199 = vmax.f32 %v942, 0.0
  %v1200 = vmax.f32 %v944, 0.0
  %v1201 = vmax.f32 %v947, 0.0
  %v1202 = vmax.f32 %v949, 0.0
  %v1203 = vmax.f32 %v952, 0.0
  %v1204 = vmax.f32 %v954, 0.0
  %v1205 = vmax.f32 %v957, 0.0
  %v1206 = vmax.f32 %v959, 0.0
  %v1207 = vmax.f32 %v962, 0.0
  %v1208 = vmax.f32 %v964, 0.0
  %v1209 = vmax.f32 %v967, 0.0
  %v1210 = vmax.f32 %v969, 0.0
  %v1211 = vmax.f32 %v972, 0.0
  %v1212 = vmax.f32 %v974, 0.0
  %v1213 = vmax.f32 %v977, 0.0
  %v1214 = vmax.f32 %v979, 0.0
  %v1215 = vmax.f32 %v982, 0.0
  %v1216 = vmax.f32 %v984, 0.0
  %v1217 = vmax.f32 %v987, 0.0
  %v1218 = vmax.f32 %v989, 0.0
  %v1219 = vmax.f32 %v992, 0.0
  %v1220 = vmax.f32 %v994, 0.0
  %v1221 = vmax.f32 %v997, 0.0
  %v1222 = vmax.f32 %v999, 0.0
  %v1223 = vmax.f32 %v1002, 0.0
  %v1224 = vmax.f32 %v1004, 0.0
  %v1225 = vmax.f32 %v1007, 0.0
  %v1226 = vmax.f32 %v1009, 0.0
  %v1227 = vmax.f32 %v1012, 0.0
  %v1228 = vmax.f32 %v1014, 0.0
  %v1229 = vmax.f32 %v1017, 0.0
  %v1230 = vmax.f32 %v1019, 0.0
  %v1231 = vmax.f32 %v1022, 0.0
  %v1232 = vmax.f32 %v1024, 0.0
  %v1233 = vmax.f32 %v1027, 0.0
  %v1234 = vmax.f32 %v1029, 0.0
  %v1235 = vmax.f32 %v1032, 0.0
  %v1236 = vmax.f32 %v1034, 0.0
  %v1237 = vmax.f32 %v1037, 0.0
  %v1238 = vmax.f32 %v1039, 0.0
  %v1239 = vmax.f32 %v1042, 0.0
  %v1240 = vmax.f32 %v1044, 0.0
  %v1241 = vmax.f32 %v1047, 0.0
  %v1242 = vmax.f32 %v1049, 0.0
  %v1243 = vmax.f32 %v1052, 0.0
  %v1244 = vmax.f32 %v1054, 0.0
  %v1245 = vmax.f32 %v1057, 0.0
  %v1246 = vmax.f32 %v1059, 0.0
  %v1247 = vmax.f32 %v1062, 0.0
  %v1248 = vmax.f32 %v1064, 0.0
  %v1249 = vmax.f32 %v1067, 0.0
  %v1250 = vmax.f32 %v1069, 0.0
  %v1251 = vmax.f32 %v1072, 0.0
  %v1252 = vmax.f32 %v1074, 0.0
  %v1253 = vmax.f32 %v1077, 0.0
  %v1254 = vmax.f32 %v1079, 0.0
  %v1255 = vmax.f32 %v1082, 0.0
  %v1256 = vmax.f32 %v1084, 0.0
  %v1257 = vmax.f32 %v1087, 0.0
  %v1258 = vmax.f32 %v1089, 0.0
  %v1259 = vmax.f32 %v1092, 0.0
  %v1260 = vmax.f32 %v1094, 0.0
  %v1261 = vmax.f32 %v1097, 0.0
  %v1262 = vmax.f32 %v1099, 0.0
  %v1263 = vmax.f32 %v1102, 0.0
  %v1264 = vmax.f32 %v1104, 0.0
  %v1265 = vmax.f32 %v1107, 0.0
  %v1266 = vmax.f32 %v1109, 0.0
  %v1267 = vmax.f32 %v1112, 0.0
  %v1268 = vmax.f32 %v1114, 0.0
  %v1269 = vmax.f32 %v1117, 0.0
  %v1270 = vmax.f32 %v1119, 0.0
  %v1271 = vmax.f32 %v1122, 0.0
  %v1272 = vmax.f32 %v1124, 0.0
  %v1273 = vmax.f32 %v1127, 0.0
  %v1274 = vmax.f32 %v1129, 0.0
  %v1275 = vmax.f32 %v1131, %v1167
  %v1276 = vmax.f32 %v1132, %v1168
  %v1277 = vmax.f32 %v1133, %v1169
  %v1278 = vmax.f32 %v1134, %v1170
  %v1279 = vmax.f32 %v1135, %v1171
  %v1280 = vmax.f32 %v1136, %v1172
  %v1281 = vmax.f32 %v1137, %v1173
  %v1282 = vmax.f32 %v1138, %v1174
  %v1283 = vmax.f32 %v1139, %v1175
  %v1284 = vmax.f32 %v1140, %v1176
  %v1285 = vmax.f32 %v1141, %v1177
  %v1286 = vmax.f32 %v1142, %v1178
  %v1287 = vmax.f32 %v1143, %v1179
  %v1288 = vmax.f32 %v1144, %v1180
  %v1289 = vmax.f32 %v1145, %v1181
  %v1290 = vmax.f32 %v1146, %v1182
  %v1291 = vmax.f32 %v1147, %v1183
  %v1292 = vmax.f32 %v1148, %v1184
  %v1293 = vmax.f32 %v1149, %v1185
  %v1294 = vmax.f32 %v1150, %v1186
  %v1295 = vmax.f32 %v1151, %v1187
  %v1296 = vmax.f32 %v1152, %v1188
  %v1297 = vmax.f32 %v1153, %v1189
  %v1298 = vmax.f32 %v1154, %v1190
  %v1299 = vmax.f32 %v1155, %v1191
  %v1300 = vmax.f32 %v1156, %v1192
  %v1301 = vmax.f32 %v1157, %v1193
  %v1302 = vmax.f32 %v1158, %v1194
  %v1303 = vmax.f32 %v1159, %v1195
  %v1304 = vmax.f32 %v1160, %v1196
  %v1305 = vmax.f32 %v1161, %v1197
  %v1306 = vmax.f32 %v1162, %v1198
  %v1307 = vmax.f32 %v1163, %v1199
  %v1308 = vmax.f32 %v1164, %v1200
  %v1309 = vmax.f32 %v1165, %v1201
  %v1310 = vmax.f32 %v1166, %v1202
  %v1311 = vmax.f32 %v1203, %v1239
  %v1312 = vmax.f32 %v1204, %v1240
  %v1313 = vmax.f32 %v1205, %v1241
  %v1314 = vmax.f32 %v1206, %v1242
  %v1315 = vmax.f32 %v1207, %v1243
  %v1316 = vmax.f32 %v1208, %v1244
  %v1317 = vmax.f32 %v1209, %v1245
  %v1318 = vmax.f32 %v1210, %v1246
  %v1319 = vmax.f32 %v1211, %v1247
  %v1320 = vmax.f32 %v1212, %v1248
  %v1321 = vmax.f32 %v1213, %v1249
  %v1322 = vmax.f32 %v1214, %v1250
  %v1323 = vmax.f32 %v1215, %v1251
  %v1324 = vmax.f32 %v1216, %v1252
  %v1325 = vmax.f32 %v1217, %v1253
  %v1326 = vmax.f32 %v1218, %v1254
  %v1327 = vmax.f32 %v1219, %v1255
  %v1328 = vmax.f32 %v1220, %v1256
  %v1329 = vmax.f32 %v1221, %v1257
  %v1330 = vmax.f32 %v1222, %v1258
  %v1331 = vmax.f32 %v1223, %v1259
  %v1332 = vmax.f32 %v1224, %v1260
  %v1333 = vmax.f32 %v1225, %v1261
  %v1334 = vmax.f32 %v1226, %v1262
  %v1335 = vmax.f32 %v1227, %v1263
  %v1336 = vmax.f32 %v1228, %v1264
  %v1337 = vmax.f32 %v1229, %v1265
  %v1338 = vmax.f32 %v1230, %v1266
  %v1339 = vmax.f32 %v1231, %v1267
  %v1340 = vmax.f32 %v1232, %v1268
  %v1341 = vmax.f32 %v1233, %v1269
  %v1342 = vmax.f32 %v1234, %v1270
  %v1343 = vmax.f32 %v1235, %v1271
  %v1344 = vmax.f32 %v1236, %v1272
  %v1345 = vmax.f32 %v1237, %v1273
  %v1346 = vmax.f32 %v1238, %v1274
  %v1347 = vmax.f32 %v1275, %v1311
  %v1348 = vmax.f32 %v1276, %v1312
  %v1349 = vmax.f32 %v1277, %v1313
  %v1350 = vmax.f32 %v1278, %v1314
  %v1351 = vmax.f32 %v1279, %v1315
  %v1352 = vmax.f32 %v1280, %v1316
  %v1353 = vmax.f32 %v1281, %v1317
  %v1354 = vmax.f32 %v1282, %v1318
  %v1355 = vmax.f32 %v1283, %v1319
  %v1356 = vmax.f32 %v1284, %v1320
  %v1357 = vmax.f32 %v1285, %v1321
  %v1358 = vmax.f32 %v1286, %v1322
  %v1359 = vmax.f32 %v1287, %v1323
  %v1360 = vmax.f32 %v1288, %v1324
  %v1361 = vmax.f32 %v1289, %v1325
  %v1362 = vmax.f32 %v1290, %v1326
  %v1363 = vmax.f32 %v1291, %v1327
  %v1364 = vmax.f32 %v1292, %v1328
  %v1365 = vmax.f32 %v1293, %v1329
  %v1366 = vmax.f32 %v1294, %v1330
  %v1367 = vmax.f32 %v1295, %v1331
  %v1368 = vmax.f32 %v1296, %v1332
  %v1369 = vmax.f32 %v1297, %v1333
  %v1370 = vmax.f32 %v1298, %v1334
  %v1371 = vmax.f32 %v1299, %v1335
  %v1372 = vmax.f32 %v1300, %v1336
  %v1373 = vmax.f32 %v1301, %v1337
  %v1374 = vmax.f32 %v1302, %v1338
  %v1375 = vmax.f32 %v1303, %v1339
  %v1376 = vmax.f32 %v1304, %v1340
  %v1377 = vmax.f32 %v1305, %v1341
  %v1378 = vmax.f32 %v1306, %v1342
  %v1379 = vmax.f32 %v1307, %v1343
  %v1380 = vmax.f32 %v1308, %v1344
  %v1381 = vmax.f32 %v1309, %v1345
  %v1382 = vmax.f32 %v1310, %v1346
  %v1383 = vpack.c.bf16 %v1347, %v1347
  %v1384 = vpack.c.bf16 %v1348, %v1348
  %v1385 = vpack.c.bf16 %v1349, %v1349
  %v1386 = vpack.c.bf16 %v1350, %v1350
  %v1387 = vpack.c.bf16 %v1351, %v1351
  %v1388 = vpack.c.bf16 %v1352, %v1352
  %v1389 = vpack.c.bf16 %v1353, %v1353
  %v1390 = vpack.c.bf16 %v1354, %v1354
  %v1391 = vpack.c.bf16 %v1355, %v1355
  %v1392 = vpack.c.bf16 %v1356, %v1356
  %v1393 = vpack.c.bf16 %v1357, %v1357
  %v1394 = vpack.c.bf16 %v1358, %v1358
  %v1395 = vpack.c.bf16 %v1359, %v1359
  %v1396 = vpack.c.bf16 %v1360, %v1360
  %v1397 = vpack.c.bf16 %v1361, %v1361
  %v1398 = vpack.c.bf16 %v1362, %v1362
  %v1399 = vpack.c.bf16 %v1363, %v1363
  %v1400 = vpack.c.bf16 %v1364, %v1364
  %v1401 = vpack.c.bf16 %v1365, %v1365
  %v1402 = vpack.c.bf16 %v1366, %v1366
  %v1403 = vpack.c.bf16 %v1367, %v1367
  %v1404 = vpack.c.bf16 %v1368, %v1368
  %v1405 = vpack.c.bf16 %v1369, %v1369
  %v1406 = vpack.c.bf16 %v1370, %v1370
  %v1407 = vpack.c.bf16 %v1371, %v1371
  %v1408 = vpack.c.bf16 %v1372, %v1372
  %v1409 = vpack.c.bf16 %v1373, %v1373
  %v1410 = vpack.c.bf16 %v1374, %v1374
  %v1411 = vpack.c.bf16 %v1375, %v1375
  %v1412 = vpack.c.bf16 %v1376, %v1376
  %v1413 = vpack.c.bf16 %v1377, %v1377
  %v1414 = vpack.c.bf16 %v1378, %v1378
  %v1415 = vpack.c.bf16 %v1379, %v1379
  %v1416 = vpack.c.bf16 %v1380, %v1380
  %v1417 = vpack.c.bf16 %v1381, %v1381
  %v1418 = vpack.c.bf16 %v1382, %v1382
  %vm1419 = vcmask 158720
  %1420 = vst.msk [vmem:[%s3] sm:$0xf] %vm1419, %v1383
  %1421 = vst.msk [vmem:[%s3 + $0x4] sm:$0xf] %vm1419, %v1384
  %1422 = vst.msk [vmem:[%s3 + $0x8] sm:$0xf] %vm1419, %v1385
  %1423 = vst.msk [vmem:[%s3 + $0xc] sm:$0xf] %vm1419, %v1386
  %1424 = vst.msk [vmem:[%s3 + $0x10] sm:$0xf] %vm1419, %v1387
  %1425 = vst.msk [vmem:[%s3 + $0x14] sm:$0xf] %vm1419, %v1388
  %1426 = vst.msk [vmem:[%s3 + $0x18] sm:$0xf] %vm1419, %v1389
  %1427 = vst.msk [vmem:[%s3 + $0x1c] sm:$0xf] %vm1419, %v1390
  %1428 = vst.msk [vmem:[%s3 + $0x20] sm:$0xf] %vm1419, %v1391
  %1429 = vst.msk [vmem:[%s3 + $0x24] sm:$0xf] %vm1419, %v1392
  %1430 = vst.msk [vmem:[%s3 + $0x28] sm:$0xf] %vm1419, %v1393
  %1431 = vst.msk [vmem:[%s3 + $0x2c] sm:$0xf] %vm1419, %v1394
  %1432 = vst.msk [vmem:[%s3 + $0x30] sm:$0xf] %vm1419, %v1395
  %1433 = vst.msk [vmem:[%s3 + $0x34] sm:$0xf] %vm1419, %v1396
  %1434 = vst.msk [vmem:[%s3 + $0x38] sm:$0xf] %vm1419, %v1397
  %1435 = vst.msk [vmem:[%s3 + $0x3c] sm:$0xf] %vm1419, %v1398
  %1436 = vst.msk [vmem:[%s3 + $0x40] sm:$0xf] %vm1419, %v1399
  %1437 = vst.msk [vmem:[%s3 + $0x44] sm:$0xf] %vm1419, %v1400
  %1438 = vst.msk [vmem:[%s3 + $0x48] sm:$0xf] %vm1419, %v1401
  %1439 = vst.msk [vmem:[%s3 + $0x4c] sm:$0xf] %vm1419, %v1402
  %1440 = vst.msk [vmem:[%s3 + $0x50] sm:$0xf] %vm1419, %v1403
  %1441 = vst.msk [vmem:[%s3 + $0x54] sm:$0xf] %vm1419, %v1404
  %1442 = vst.msk [vmem:[%s3 + $0x58] sm:$0xf] %vm1419, %v1405
  %1443 = vst.msk [vmem:[%s3 + $0x5c] sm:$0xf] %vm1419, %v1406
  %1444 = vst.msk [vmem:[%s3 + $0x60] sm:$0xf] %vm1419, %v1407
  %1445 = vst.msk [vmem:[%s3 + $0x64] sm:$0xf] %vm1419, %v1408
  %1446 = vst.msk [vmem:[%s3 + $0x68] sm:$0xf] %vm1419, %v1409
  %1447 = vst.msk [vmem:[%s3 + $0x6c] sm:$0xf] %vm1419, %v1410
  %1448 = vst.msk [vmem:[%s3 + $0x70] sm:$0xf] %vm1419, %v1411
  %1449 = vst.msk [vmem:[%s3 + $0x74] sm:$0xf] %vm1419, %v1412
  %1450 = vst.msk [vmem:[%s3 + $0x78] sm:$0xf] %vm1419, %v1413
  %1451 = vst.msk [vmem:[%s3 + $0x7c] sm:$0xf] %vm1419, %v1414
  %1452 = vst.msk [vmem:[%s3 + $0x80] sm:$0xf] %vm1419, %v1415
  %1453 = vst.msk [vmem:[%s3 + $0x84] sm:$0xf] %vm1419, %v1416
  %1454 = vst.msk [vmem:[%s3 + $0x88] sm:$0xf] %vm1419, %v1417
  %1455 = vst.msk [vmem:[%s3 + $0x8c] sm:$0xf] %vm1419, %v1418
  // Predicated region
  $region14: #{net_forward.3} parent=0 // pred_check
    _
  $region15: #{net_forward.3} parent=0 // pred_check_branch
    %1457 = sbr.rel (0) target = $region17
  $region16: #{net_forward.3} parent=0 // pred_region
    _
  $region17: #{net_forward.3} parent=0 // pred_fallthru
    _
  // Predicated region
  $region18: #{net_forward.3} parent=0 // pred_check
    _
  $region19: #{net_forward.3} parent=0 // pred_check_branch
    %1459 = sbr.rel (0) target = $region21
  $region20: #{net_forward.3} parent=0 // pred_region
    _
  $region21: #{net_forward.3} parent=0 // pred_fallthru
    _

// kernel: net_forward.4
$region0: #{net_forward.4}
  #allocation0 [shape = 'u32[]', space=smem, size = 0x4, offset = 0x4, fixed_abs, tag = 'smem constant byte address 0x4 - core index']
  #allocation1 [shape = 'u32[72,128]{1,0:T(1,128)}', space=vmem, size = 0x9000, scoped, tag = 'internal scratch']
  %s0 = inlined_call_operand.vmem [shape: bf16[128,500], index: 0, kind: input, shape index: {}]
  %s1 = inlined_call_operand.vmem [shape: bf16[500,50], index: 1, kind: input, shape index: {}]
  %s2 = inlined_call_operand.vmem [shape: f32[1,50], index: 2, kind: input, shape index: {}]
  %s3 = inlined_call_operand.vmem [shape: bf16[32,50], index: 3, kind: output, shape index: {}]
  %s4 = sld [smem:[#allocation0]]
  $region22: #{net_forward.4} parent=0
    _
  %s6 = ssub.s32 1, %s4
  %s7 = scalar_select 0, %s6, %s4
  // Predicated region
  $region2: #{net_forward.4} parent=0 // pred_check
    _
  $region3: #{net_forward.4} parent=0 // pred_check_branch
    %9 = sbr.rel (0) target = $region5
  $region4: #{net_forward.4} parent=0 // pred_region
    _
  $region5: #{net_forward.4} parent=0 // pred_fallthru
    _
  // Predicated region
  $region6: #{net_forward.4} parent=0 // pred_check
    _
  $region7: #{net_forward.4} parent=0 // pred_check_branch
    %11 = sbr.rel (0) target = $region9
  $region8: #{net_forward.4} parent=0 // pred_region
    _
  $region9: #{net_forward.4} parent=0 // pred_fallthru
    _
  // Predicated region
  $region10: #{net_forward.4} parent=0 // pred_check
    _
  $region11: #{net_forward.4} parent=0 // pred_check_branch
    %13 = sbr.rel (0) target = $region13
  $region12: #{net_forward.4} parent=0 // pred_region
    _
  $region13: #{net_forward.4} parent=0 // pred_fallthru
    _
  %v14 = vld [vmem:[%s0] sm:$0xff]
  %v15 = vld [vmem:[%s0 + $0x8] sm:$0xff]
  %v16 = vld [vmem:[%s0 + $0x10] sm:$0xff]
  %v17 = vld [vmem:[%s0 + $0x18] sm:$0xff]
  %v18 = vld [vmem:[%s0 + $0x20] sm:$0xff]
  %v19 = vld [vmem:[%s0 + $0x28] sm:$0xff]
  %v20 = vld [vmem:[%s0 + $0x30] sm:$0xff]
  %v21 = vld [vmem:[%s0 + $0x38] sm:$0xff]
  %v22 = vld [vmem:[%s0 + $0x40] sm:$0xff]
  %v23 = vld [vmem:[%s0 + $0x48] sm:$0xff]
  %v24 = vld [vmem:[%s0 + $0x50] sm:$0xff]
  %v25 = vld [vmem:[%s0 + $0x58] sm:$0xff]
  %v26 = vld [vmem:[%s0 + $0x60] sm:$0xff]
  %v27 = vld [vmem:[%s0 + $0x68] sm:$0xff]
  %v28 = vld [vmem:[%s0 + $0x70] sm:$0xff]
  %v29 = vld [vmem:[%s0 + $0x78] sm:$0xff]
  %v30 = vld [vmem:[%s0 + $0x80] sm:$0xff]
  %v31 = vld [vmem:[%s0 + $0x88] sm:$0xff]
  %v32 = vld [vmem:[%s0 + $0x90] sm:$0xff]
  %v33 = vld [vmem:[%s0 + $0x98] sm:$0xff]
  %v34 = vld [vmem:[%s0 + $0xa0] sm:$0xff]
  %v35 = vld [vmem:[%s0 + $0xa8] sm:$0xff]
  %v36 = vld [vmem:[%s0 + $0xb0] sm:$0xff]
  %v37 = vld [vmem:[%s0 + $0xb8] sm:$0xff]
  %v38 = vld [vmem:[%s0 + $0xc0] sm:$0xff]
  %v39 = vld [vmem:[%s0 + $0xc8] sm:$0xff]
  %v40 = vld [vmem:[%s0 + $0xd0] sm:$0xff]
  %v41 = vld [vmem:[%s0 + $0xd8] sm:$0xff]
  %v42 = vld [vmem:[%s0 + $0xe0] sm:$0xff]
  %v43 = vld [vmem:[%s0 + $0xe8] sm:$0xff]
  %v44 = vld [vmem:[%s0 + $0xf0] sm:$0xff]
  %v45 = vld [vmem:[%s0 + $0xf8] sm:$0xff]
  %v46 = vld [vmem:[%s1] sm:$0xf]
  %v47 = vld [vmem:[%s1 + $0x4] sm:$0xf]
  %v48 = vld [vmem:[%s1 + $0x8] sm:$0xf]
  %v49 = vld [vmem:[%s1 + $0xc] sm:$0xf]
  %v50 = vld [vmem:[%s1 + $0x10] sm:$0xf]
  %v51 = vld [vmem:[%s1 + $0x14] sm:$0xf]
  %v52 = vld [vmem:[%s1 + $0x18] sm:$0xf]
  %v53 = vld [vmem:[%s1 + $0x1c] sm:$0xf]
  %v54 = vld [vmem:[%s1 + $0x20] sm:$0xf]
  %v55 = vld [vmem:[%s1 + $0x24] sm:$0xf]
  %v56 = vld [vmem:[%s1 + $0x28] sm:$0xf]
  %v57 = vld [vmem:[%s1 + $0x2c] sm:$0xf]
  %v58 = vld [vmem:[%s1 + $0x30] sm:$0xf]
  %v59 = vld [vmem:[%s1 + $0x34] sm:$0xf]
  %v60 = vld [vmem:[%s1 + $0x38] sm:$0xf]
  %v61 = vld [vmem:[%s1 + $0x3c] sm:$0xf]
  %v62 = vld [vmem:[%s1 + $0x40] sm:$0xf]
  %v63 = vld [vmem:[%s1 + $0x44] sm:$0xf]
  %v64 = vld [vmem:[%s1 + $0x48] sm:$0xf]
  %v65 = vld [vmem:[%s1 + $0x4c] sm:$0xf]
  %v66 = vld [vmem:[%s1 + $0x50] sm:$0xf]
  %v67 = vld [vmem:[%s1 + $0x54] sm:$0xf]
  %v68 = vld [vmem:[%s1 + $0x58] sm:$0xf]
  %v69 = vld [vmem:[%s1 + $0x5c] sm:$0xf]
  %v70 = vld [vmem:[%s1 + $0x60] sm:$0xf]
  %v71 = vld [vmem:[%s1 + $0x64] sm:$0xf]
  %v72 = vld [vmem:[%s1 + $0x68] sm:$0xf]
  %v73 = vld [vmem:[%s1 + $0x6c] sm:$0xf]
  %v74 = vld [vmem:[%s1 + $0x70] sm:$0xf]
  %v75 = vld [vmem:[%s1 + $0x74] sm:$0xf]
  %v76 = vld [vmem:[%s1 + $0x78] sm:$0xf]
  %v77 = vld [vmem:[%s1 + $0x7c] sm:$0xf]
  %v78 = vld [vmem:[%s1 + $0x80] sm:$0xf]
  %v79 = vld [vmem:[%s1 + $0x84] sm:$0xf]
  %v80 = vld [vmem:[%s1 + $0x88] sm:$0xf]
  %v81 = vld [vmem:[%s1 + $0x8c] sm:$0xf]
  %v82 = vld [vmem:[%s1 + $0x90] sm:$0xf]
  %v83 = vld [vmem:[%s1 + $0x94] sm:$0xf]
  %v84 = vld [vmem:[%s1 + $0x98] sm:$0xf]
  %v85 = vld [vmem:[%s1 + $0x9c] sm:$0xf]
  %v86 = vld [vmem:[%s1 + $0xa0] sm:$0xf]
  %v87 = vld [vmem:[%s1 + $0xa4] sm:$0xf]
  %v88 = vld [vmem:[%s1 + $0xa8] sm:$0xf]
  %v89 = vld [vmem:[%s1 + $0xac] sm:$0xf]
  %v90 = vld [vmem:[%s1 + $0xb0] sm:$0xf]
  %v91 = vld [vmem:[%s1 + $0xb4] sm:$0xf]
  %v92 = vld [vmem:[%s1 + $0xb8] sm:$0xf]
  %v93 = vld [vmem:[%s1 + $0xbc] sm:$0xf]
  %v94 = vld [vmem:[%s1 + $0xc0] sm:$0xf]
  %v95 = vld [vmem:[%s1 + $0xc4] sm:$0xf]
  %v96 = vld [vmem:[%s1 + $0xc8] sm:$0xf]
  %v97 = vld [vmem:[%s1 + $0xcc] sm:$0xf]
  %v98 = vld [vmem:[%s1 + $0xd0] sm:$0xf]
  %v99 = vld [vmem:[%s1 + $0xd4] sm:$0xf]
  %v100 = vld [vmem:[%s1 + $0xd8] sm:$0xf]
  %v101 = vld [vmem:[%s1 + $0xdc] sm:$0xf]
  %v102 = vld [vmem:[%s1 + $0xe0] sm:$0xf]
  %v103 = vld [vmem:[%s1 + $0xe4] sm:$0xf]
  %v104 = vld [vmem:[%s1 + $0xe8] sm:$0xf]
  %v105 = vld [vmem:[%s1 + $0xec] sm:$0xf]
  %v106 = vld [vmem:[%s1 + $0xf0] sm:$0xf]
  %v107 = vld [vmem:[%s1 + $0xf4] sm:$0xf]
  %v108 = vld [vmem:[%s1 + $0xf8] sm:$0x3]
  %v109 = vld [vmem:[%s2] sm:$0x1]
  %v111 = vperm.slane %v109, 0
  %v145 = vunpack.c.l.b16 %v14
  %v146 = vunpack.c.h.b16 %v14
  %v147 = vunpack.c.l.b16 %v15
  %v148 = vunpack.c.h.b16 %v15
  %v149 = vunpack.c.l.b16 %v16
  %v150 = vunpack.c.h.b16 %v16
  %v151 = vunpack.c.l.b16 %v17
  %v152 = vunpack.c.h.b16 %v17
  %v153 = vunpack.c.l.b16 %v18
  %v154 = vunpack.c.h.b16 %v18
  %v155 = vunpack.c.l.b16 %v19
  %v156 = vunpack.c.h.b16 %v19
  %v157 = vunpack.c.l.b16 %v20
  %v158 = vunpack.c.h.b16 %v20
  %v159 = vunpack.c.l.b16 %v21
  %v160 = vunpack.c.h.b16 %v21
  %v161 = vunpack.c.l.b16 %v22
  %v162 = vunpack.c.h.b16 %v22
  %v163 = vunpack.c.l.b16 %v23
  %v164 = vunpack.c.h.b16 %v23
  %v165 = vunpack.c.l.b16 %v24
  %v166 = vunpack.c.h.b16 %v24
  %v167 = vunpack.c.l.b16 %v25
  %v168 = vunpack.c.h.b16 %v25
  %v169 = vunpack.c.l.b16 %v26
  %v170 = vunpack.c.h.b16 %v26
  %v171 = vunpack.c.l.b16 %v27
  %v172 = vunpack.c.h.b16 %v27
  %v173 = vunpack.c.l.b16 %v28
  %v174 = vunpack.c.h.b16 %v28
  %v175 = vunpack.c.l.b16 %v29
  %v176 = vunpack.c.h.b16 %v29
  %v177 = vunpack.c.l.b16 %v30
  %v178 = vunpack.c.h.b16 %v30
  %v179 = vunpack.c.l.b16 %v31
  %v180 = vunpack.c.h.b16 %v31
  %v181 = vunpack.c.l.b16 %v32
  %v182 = vunpack.c.h.b16 %v32
  %v183 = vunpack.c.l.b16 %v33
  %v184 = vunpack.c.h.b16 %v33
  %v185 = vunpack.c.l.b16 %v34
  %v186 = vunpack.c.h.b16 %v34
  %v187 = vunpack.c.l.b16 %v35
  %v188 = vunpack.c.h.b16 %v35
  %v189 = vunpack.c.l.b16 %v36
  %v190 = vunpack.c.h.b16 %v36
  %v191 = vunpack.c.l.b16 %v37
  %v192 = vunpack.c.h.b16 %v37
  %v193 = vunpack.c.l.b16 %v38
  %v194 = vunpack.c.h.b16 %v38
  %v195 = vunpack.c.l.b16 %v39
  %v196 = vunpack.c.h.b16 %v39
  %v197 = vunpack.c.l.b16 %v40
  %v198 = vunpack.c.h.b16 %v40
  %v199 = vunpack.c.l.b16 %v41
  %v200 = vunpack.c.h.b16 %v41
  %v201 = vunpack.c.l.b16 %v42
  %v202 = vunpack.c.h.b16 %v42
  %v203 = vunpack.c.l.b16 %v43
  %v204 = vunpack.c.h.b16 %v43
  %v205 = vunpack.c.l.b16 %v44
  %v206 = vunpack.c.h.b16 %v44
  %v207 = vunpack.c.l.b16 %v45
  %v208 = vunpack.c.h.b16 %v45
  %v209 = vpack.c.b16 %v149, %v145
  %v210 = vpack.c.b16 %v150, %v146
  %v211 = vpack.c.b16 %v151, %v147
  %v212 = vpack.c.b16 %v152, %v148
  %v213 = vpack.c.b16 %v157, %v153
  %v214 = vpack.c.b16 %v158, %v154
  %v215 = vpack.c.b16 %v159, %v155
  %v216 = vpack.c.b16 %v160, %v156
  %v217 = vpack.c.b16 %v165, %v161
  %v218 = vpack.c.b16 %v166, %v162
  %v219 = vpack.c.b16 %v167, %v163
  %v220 = vpack.c.b16 %v168, %v164
  %v221 = vpack.c.b16 %v173, %v169
  %v222 = vpack.c.b16 %v174, %v170
  %v223 = vpack.c.b16 %v175, %v171
  %v224 = vpack.c.b16 %v176, %v172
  %v225 = vpack.c.b16 %v181, %v177
  %v226 = vpack.c.b16 %v182, %v178
  %v227 = vpack.c.b16 %v183, %v179
  %v228 = vpack.c.b16 %v184, %v180
  %v229 = vpack.c.b16 %v189, %v185
  %v230 = vpack.c.b16 %v190, %v186
  %v231 = vpack.c.b16 %v191, %v187
  %v232 = vpack.c.b16 %v192, %v188
  %v233 = vpack.c.b16 %v197, %v193
  %v234 = vpack.c.b16 %v198, %v194
  %v235 = vpack.c.b16 %v199, %v195
  %v236 = vpack.c.b16 %v200, %v196
  %v237 = vpack.c.b16 %v205, %v201
  %v238 = vpack.c.b16 %v206, %v202
  %v239 = vpack.c.b16 %v207, %v203
  %v240 = vpack.c.b16 %v208, %v204
  %v328 = vunpack.c.l.b16 %v46
  %v329 = vunpack.c.l.b16 %v47
  %v330 = vunpack.c.l.b16 %v48
  %v331 = vunpack.c.l.b16 %v49
  %v332 = vunpack.c.l.b16 %v50
  %v333 = vunpack.c.l.b16 %v51
  %v334 = vunpack.c.l.b16 %v52
  %v335 = vunpack.c.l.b16 %v53
  %v336 = vunpack.c.l.b16 %v54
  %v337 = vunpack.c.l.b16 %v55
  %v338 = vunpack.c.l.b16 %v56
  %v339 = vunpack.c.l.b16 %v57
  %v340 = vunpack.c.l.b16 %v58
  %v341 = vunpack.c.l.b16 %v59
  %v342 = vunpack.c.l.b16 %v60
  %v343 = vunpack.c.l.b16 %v61
  %v344 = vunpack.c.l.b16 %v62
  %v345 = vunpack.c.l.b16 %v63
  %v346 = vunpack.c.l.b16 %v64
  %v347 = vunpack.c.l.b16 %v65
  %v348 = vunpack.c.l.b16 %v66
  %v349 = vunpack.c.l.b16 %v67
  %v350 = vunpack.c.l.b16 %v68
  %v351 = vunpack.c.l.b16 %v69
  %v352 = vunpack.c.l.b16 %v70
  %v353 = vunpack.c.l.b16 %v71
  %v354 = vunpack.c.l.b16 %v72
  %v355 = vunpack.c.l.b16 %v73
  %v356 = vunpack.c.l.b16 %v74
  %v357 = vunpack.c.l.b16 %v75
  %v358 = vunpack.c.l.b16 %v76
  %v359 = vunpack.c.l.b16 %v77
  %v360 = vunpack.c.l.b16 %v78
  %v361 = vunpack.c.l.b16 %v79
  %v362 = vunpack.c.l.b16 %v80
  %v363 = vunpack.c.l.b16 %v81
  %v364 = vunpack.c.l.b16 %v82
  %v365 = vunpack.c.l.b16 %v83
  %v366 = vunpack.c.l.b16 %v84
  %v367 = vunpack.c.l.b16 %v85
  %v368 = vunpack.c.l.b16 %v86
  %v369 = vunpack.c.l.b16 %v87
  %v370 = vunpack.c.l.b16 %v88
  %v371 = vunpack.c.l.b16 %v89
  %v372 = vunpack.c.l.b16 %v90
  %v373 = vunpack.c.l.b16 %v91
  %v374 = vunpack.c.l.b16 %v92
  %v375 = vunpack.c.l.b16 %v93
  %v376 = vunpack.c.l.b16 %v94
  %v377 = vunpack.c.l.b16 %v95
  %v378 = vunpack.c.l.b16 %v96
  %v379 = vunpack.c.l.b16 %v97
  %v380 = vunpack.c.l.b16 %v98
  %v381 = vunpack.c.l.b16 %v99
  %v382 = vunpack.c.l.b16 %v100
  %v383 = vunpack.c.l.b16 %v101
  %v384 = vunpack.c.l.b16 %v102
  %v385 = vunpack.c.l.b16 %v103
  %v386 = vunpack.c.l.b16 %v104
  %v387 = vunpack.c.l.b16 %v105
  %v388 = vunpack.c.l.b16 %v106
  %v389 = vunpack.c.l.b16 %v107
  %v390 = vunpack.c.l.b16 %v108
  %v391 = vpack.c.b16 %v329, %v328
  %v392 = vpack.c.b16 %v331, %v330
  %v393 = vpack.c.b16 %v333, %v332
  %v394 = vpack.c.b16 %v335, %v334
  %v395 = vpack.c.b16 %v337, %v336
  %v396 = vpack.c.b16 %v339, %v338
  %v397 = vpack.c.b16 %v341, %v340
  %v398 = vpack.c.b16 %v343, %v342
  %v399 = vpack.c.b16 %v345, %v344
  %v400 = vpack.c.b16 %v347, %v346
  %v401 = vpack.c.b16 %v349, %v348
  %v402 = vpack.c.b16 %v351, %v350
  %v403 = vpack.c.b16 %v353, %v352
  %v404 = vpack.c.b16 %v355, %v354
  %v405 = vpack.c.b16 %v357, %v356
  %v406 = vpack.c.b16 %v359, %v358
  %v407 = vpack.c.b16 %v361, %v360
  %v408 = vpack.c.b16 %v363, %v362
  %v409 = vpack.c.b16 %v365, %v364
  %v410 = vpack.c.b16 %v367, %v366
  %v411 = vpack.c.b16 %v369, %v368
  %v412 = vpack.c.b16 %v371, %v370
  %v413 = vpack.c.b16 %v373, %v372
  %v414 = vpack.c.b16 %v375, %v374
  %v415 = vpack.c.b16 %v377, %v376
  %v416 = vpack.c.b16 %v379, %v378
  %v417 = vpack.c.b16 %v381, %v380
  %v418 = vpack.c.b16 %v383, %v382
  %v419 = vpack.c.b16 %v385, %v384
  %v420 = vpack.c.b16 %v387, %v386
  %v421 = vpack.c.b16 %v389, %v388
  %v422 = vpack.c.b16 %v390, %v390
  %vm454 = vcmask 949248
  %v456 = vsel %vm454, %v212, 0
  %v459 = vsel %vm454, %v216, 0
  %v462 = vsel %vm454, %v220, 0
  %v465 = vsel %vm454, %v224, 0
  %v468 = vsel %vm454, %v228, 0
  %v471 = vsel %vm454, %v232, 0
  %v474 = vsel %vm454, %v236, 0
  %v477 = vsel %vm454, %v240, 0
  %vm479 = vcmask 1041408
  %v481 = vsel %vm479, %v422, 0
  %483 = vmatpush.bf16.msra.mxu0 %v398
  %484 = vmatpush.bf16.msra.mxu0 %v397
  %485 = vmatpush.bf16.msra.mxu0 %v396
  %486 = vmatpush.bf16.msra.mxu0 %v395
  %487 = vmatpush.bf16.msra.mxu0 %v394
  %488 = vmatpush.bf16.msra.mxu0 %v393
  %489 = vmatpush.bf16.msra.mxu0 %v392
  %490 = vmatpush.bf16.msra.mxu0 %v391
  %491 = vmatmul.bf16.gmra.mxu0 %v209
  %v492 = vpop.f32.mrf.mxu0
  %v493 = vadd.f32 %v111, %v492
  %v494 = vpop.f32.mrf.mxu0
  %v495 = vadd.f32 %v111, %v494
  %496 = vmatmul.bf16.gmra.mxu0 %v213
  %v497 = vpop.f32.mrf.mxu0
  %v498 = vadd.f32 %v111, %v497
  %v499 = vpop.f32.mrf.mxu0
  %v500 = vadd.f32 %v111, %v499
  %501 = vmatmul.bf16.gmra.mxu0 %v217
  %v502 = vpop.f32.mrf.mxu0
  %v503 = vadd.f32 %v111, %v502
  %v504 = vpop.f32.mrf.mxu0
  %v505 = vadd.f32 %v111, %v504
  %506 = vmatmul.bf16.gmra.mxu0 %v221
  %v507 = vpop.f32.mrf.mxu0
  %v508 = vadd.f32 %v111, %v507
  %v509 = vpop.f32.mrf.mxu0
  %v510 = vadd.f32 %v111, %v509
  %511 = vmatmul.bf16.gmra.mxu0 %v225
  %v512 = vpop.f32.mrf.mxu0
  %v513 = vadd.f32 %v111, %v512
  %v514 = vpop.f32.mrf.mxu0
  %v515 = vadd.f32 %v111, %v514
  %516 = vmatmul.bf16.gmra.mxu0 %v229
  %v517 = vpop.f32.mrf.mxu0
  %v518 = vadd.f32 %v111, %v517
  %v519 = vpop.f32.mrf.mxu0
  %v520 = vadd.f32 %v111, %v519
  %521 = vmatmul.bf16.gmra.mxu0 %v233
  %v522 = vpop.f32.mrf.mxu0
  %v523 = vadd.f32 %v111, %v522
  %v524 = vpop.f32.mrf.mxu0
  %v525 = vadd.f32 %v111, %v524
  %526 = vmatmul.bf16.gmra.mxu0 %v237
  %v527 = vpop.f32.mrf.mxu0
  %v528 = vadd.f32 %v111, %v527
  %v529 = vpop.f32.mrf.mxu0
  %v530 = vadd.f32 %v111, %v529
  %531 = vdwg.mxu0
  %532 = vmatpush.bf16.msra.mxu0 %v406
  %533 = vmatpush.bf16.msra.mxu0 %v405
  %534 = vmatpush.bf16.msra.mxu0 %v404
  %535 = vmatpush.bf16.msra.mxu0 %v403
  %536 = vmatpush.bf16.msra.mxu0 %v402
  %537 = vmatpush.bf16.msra.mxu0 %v401
  %538 = vmatpush.bf16.msra.mxu0 %v400
  %539 = vmatpush.bf16.msra.mxu0 %v399
  %540 = vmatmul.bf16.gmra.mxu0 %v210
  %v541 = vpop.f32.mrf.mxu0
  %v542 = vadd.f32 %v493, %v541
  %v543 = vpop.f32.mrf.mxu0
  %v544 = vadd.f32 %v495, %v543
  %545 = vmatmul.bf16.gmra.mxu0 %v214
  %v546 = vpop.f32.mrf.mxu0
  %v547 = vadd.f32 %v498, %v546
  %v548 = vpop.f32.mrf.mxu0
  %v549 = vadd.f32 %v500, %v548
  %550 = vmatmul.bf16.gmra.mxu0 %v218
  %v551 = vpop.f32.mrf.mxu0
  %v552 = vadd.f32 %v503, %v551
  %v553 = vpop.f32.mrf.mxu0
  %v554 = vadd.f32 %v505, %v553
  %555 = vmatmul.bf16.gmra.mxu0 %v222
  %v556 = vpop.f32.mrf.mxu0
  %v557 = vadd.f32 %v508, %v556
  %v558 = vpop.f32.mrf.mxu0
  %v559 = vadd.f32 %v510, %v558
  %560 = vmatmul.bf16.gmra.mxu0 %v226
  %v561 = vpop.f32.mrf.mxu0
  %v562 = vadd.f32 %v513, %v561
  %v563 = vpop.f32.mrf.mxu0
  %v564 = vadd.f32 %v515, %v563
  %565 = vmatmul.bf16.gmra.mxu0 %v230
  %v566 = vpop.f32.mrf.mxu0
  %v567 = vadd.f32 %v518, %v566
  %v568 = vpop.f32.mrf.mxu0
  %v569 = vadd.f32 %v520, %v568
  %570 = vmatmul.bf16.gmra.mxu0 %v234
  %v571 = vpop.f32.mrf.mxu0
  %v572 = vadd.f32 %v523, %v571
  %v573 = vpop.f32.mrf.mxu0
  %v574 = vadd.f32 %v525, %v573
  %575 = vmatmul.bf16.gmra.mxu0 %v238
  %v576 = vpop.f32.mrf.mxu0
  %v577 = vadd.f32 %v528, %v576
  %v578 = vpop.f32.mrf.mxu0
  %v579 = vadd.f32 %v530, %v578
  %580 = vdwg.mxu0
  %581 = vmatpush.bf16.msra.mxu0 %v414
  %582 = vmatpush.bf16.msra.mxu0 %v413
  %583 = vmatpush.bf16.msra.mxu0 %v412
  %584 = vmatpush.bf16.msra.mxu0 %v411
  %585 = vmatpush.bf16.msra.mxu0 %v410
  %586 = vmatpush.bf16.msra.mxu0 %v409
  %587 = vmatpush.bf16.msra.mxu0 %v408
  %588 = vmatpush.bf16.msra.mxu0 %v407
  %589 = vmatmul.bf16.gmra.mxu0 %v211
  %v590 = vpop.f32.mrf.mxu0
  %v591 = vadd.f32 %v542, %v590
  %v592 = vpop.f32.mrf.mxu0
  %v593 = vadd.f32 %v544, %v592
  %594 = vmatmul.bf16.gmra.mxu0 %v215
  %v595 = vpop.f32.mrf.mxu0
  %v596 = vadd.f32 %v547, %v595
  %v597 = vpop.f32.mrf.mxu0
  %v598 = vadd.f32 %v549, %v597
  %599 = vmatmul.bf16.gmra.mxu0 %v219
  %v600 = vpop.f32.mrf.mxu0
  %v601 = vadd.f32 %v552, %v600
  %v602 = vpop.f32.mrf.mxu0
  %v603 = vadd.f32 %v554, %v602
  %604 = vmatmul.bf16.gmra.mxu0 %v223
  %v605 = vpop.f32.mrf.mxu0
  %v606 = vadd.f32 %v557, %v605
  %v607 = vpop.f32.mrf.mxu0
  %v608 = vadd.f32 %v559, %v607
  %609 = vmatmul.bf16.gmra.mxu0 %v227
  %v610 = vpop.f32.mrf.mxu0
  %v611 = vadd.f32 %v562, %v610
  %v612 = vpop.f32.mrf.mxu0
  %v613 = vadd.f32 %v564, %v612
  %614 = vmatmul.bf16.gmra.mxu0 %v231
  %v615 = vpop.f32.mrf.mxu0
  %v616 = vadd.f32 %v567, %v615
  %v617 = vpop.f32.mrf.mxu0
  %v618 = vadd.f32 %v569, %v617
  %619 = vmatmul.bf16.gmra.mxu0 %v235
  %v620 = vpop.f32.mrf.mxu0
  %v621 = vadd.f32 %v572, %v620
  %v622 = vpop.f32.mrf.mxu0
  %v623 = vadd.f32 %v574, %v622
  %624 = vmatmul.bf16.gmra.mxu0 %v239
  %v625 = vpop.f32.mrf.mxu0
  %v626 = vadd.f32 %v577, %v625
  %v627 = vpop.f32.mrf.mxu0
  %v628 = vadd.f32 %v579, %v627
  %629 = vdwg.mxu0
  %630 = vmatpush.bf16.msra.mxu0 %v481
  %631 = vmatpush.bf16.msra.mxu0 %v421
  %632 = vmatpush.bf16.msra.mxu0 %v420
  %633 = vmatpush.bf16.msra.mxu0 %v419
  %634 = vmatpush.bf16.msra.mxu0 %v418
  %635 = vmatpush.bf16.msra.mxu0 %v417
  %636 = vmatpush.bf16.msra.mxu0 %v416
  %637 = vmatpush.bf16.msra.mxu0 %v415
  %638 = vmatmul.bf16.gmra.mxu0 %v456
  %v639 = vpop.f32.mrf.mxu0
  %v640 = vadd.f32 %v591, %v639
  %v641 = vpop.f32.mrf.mxu0
  %v642 = vadd.f32 %v593, %v641
  %643 = vmatmul.bf16.gmra.mxu0 %v459
  %v644 = vpop.f32.mrf.mxu0
  %v645 = vadd.f32 %v596, %v644
  %v646 = vpop.f32.mrf.mxu0
  %v647 = vadd.f32 %v598, %v646
  %648 = vmatmul.bf16.gmra.mxu0 %v462
  %v649 = vpop.f32.mrf.mxu0
  %v650 = vadd.f32 %v601, %v649
  %v651 = vpop.f32.mrf.mxu0
  %v652 = vadd.f32 %v603, %v651
  %653 = vmatmul.bf16.gmra.mxu0 %v465
  %v654 = vpop.f32.mrf.mxu0
  %v655 = vadd.f32 %v606, %v654
  %v656 = vpop.f32.mrf.mxu0
  %v657 = vadd.f32 %v608, %v656
  %658 = vmatmul.bf16.gmra.mxu0 %v468
  %v659 = vpop.f32.mrf.mxu0
  %v660 = vadd.f32 %v611, %v659
  %v661 = vpop.f32.mrf.mxu0
  %v662 = vadd.f32 %v613, %v661
  %663 = vmatmul.bf16.gmra.mxu0 %v471
  %v664 = vpop.f32.mrf.mxu0
  %v665 = vadd.f32 %v616, %v664
  %v666 = vpop.f32.mrf.mxu0
  %v667 = vadd.f32 %v618, %v666
  %668 = vmatmul.bf16.gmra.mxu0 %v474
  %v669 = vpop.f32.mrf.mxu0
  %v670 = vadd.f32 %v621, %v669
  %v671 = vpop.f32.mrf.mxu0
  %v672 = vadd.f32 %v623, %v671
  %673 = vmatmul.bf16.gmra.mxu0 %v477
  %v674 = vpop.f32.mrf.mxu0
  %v675 = vadd.f32 %v626, %v674
  %v676 = vpop.f32.mrf.mxu0
  %v677 = vadd.f32 %v628, %v676
  %678 = vdwg.mxu0
  %v679 = vmax.f32 %v640, 0.0
  %v680 = vmax.f32 %v642, 0.0
  %v681 = vmax.f32 %v645, 0.0
  %v682 = vmax.f32 %v647, 0.0
  %v683 = vmax.f32 %v650, 0.0
  %v684 = vmax.f32 %v652, 0.0
  %v685 = vmax.f32 %v655, 0.0
  %v686 = vmax.f32 %v657, 0.0
  %v687 = vmax.f32 %v660, 0.0
  %v688 = vmax.f32 %v662, 0.0
  %v689 = vmax.f32 %v665, 0.0
  %v690 = vmax.f32 %v667, 0.0
  %v691 = vmax.f32 %v670, 0.0
  %v692 = vmax.f32 %v672, 0.0
  %v693 = vmax.f32 %v675, 0.0
  %v694 = vmax.f32 %v677, 0.0
  %v695 = vmax.f32 %v679, %v683
  %v696 = vmax.f32 %v680, %v684
  %v697 = vmax.f32 %v681, %v685
  %v698 = vmax.f32 %v682, %v686
  %v699 = vmax.f32 %v687, %v691
  %v700 = vmax.f32 %v688, %v692
  %v701 = vmax.f32 %v689, %v693
  %v702 = vmax.f32 %v690, %v694
  %v703 = vmax.f32 %v695, %v699
  %v704 = vmax.f32 %v696, %v700
  %v705 = vmax.f32 %v697, %v701
  %v706 = vmax.f32 %v698, %v702
  %v707 = vpack.c.bf16 %v703, %v703
  %v708 = vpack.c.bf16 %v704, %v704
  %v709 = vpack.c.bf16 %v705, %v705
  %v710 = vpack.c.bf16 %v706, %v706
  %vm711 = vcmask 404480
  %712 = vst.msk [vmem:[%s3] sm:$0xf] %vm711, %v707
  %713 = vst.msk [vmem:[%s3 + $0x4] sm:$0xf] %vm711, %v708
  %714 = vst.msk [vmem:[%s3 + $0x8] sm:$0xf] %vm711, %v709
  %715 = vst.msk [vmem:[%s3 + $0xc] sm:$0xf] %vm711, %v710
  // Predicated region
  $region14: #{net_forward.4} parent=0 // pred_check
    _
  $region15: #{net_forward.4} parent=0 // pred_check_branch
    %717 = sbr.rel (0) target = $region17
  $region16: #{net_forward.4} parent=0 // pred_region
    _
  $region17: #{net_forward.4} parent=0 // pred_fallthru
    _
  // Predicated region
  $region18: #{net_forward.4} parent=0 // pred_check
    _
  $region19: #{net_forward.4} parent=0 // pred_check_branch
    %719 = sbr.rel (0) target = $region21
  $region20: #{net_forward.4} parent=0 // pred_region
    _
  $region21: #{net_forward.4} parent=0 // pred_fallthru
    _

// kernel: net_forward.5
$region0: #{net_forward.5}
  #allocation0 [shape = 'u32[]', space=smem, size = 0x4, offset = 0x4, fixed_abs, tag = 'smem constant byte address 0x4 - core index']
  #allocation1 [shape = 'u32[72,128]{1,0:T(1,128)}', space=vmem, size = 0x9000, scoped, tag = 'internal scratch']
  %s0 = inlined_call_operand.vmem [shape: bf16[2,800], index: 0, kind: input, shape index: {}]
  %s1 = inlined_call_operand.vmem [shape: bf16[800,500], index: 1, kind: input, shape index: {}]
  %s2 = inlined_call_operand.vmem [shape: f32[1,500], index: 2, kind: input, shape index: {}]
  %s3 = inlined_call_operand.vmem [shape: bf16[500,128], index: 3, kind: input, shape index: {}]
  %s4 = inlined_call_operand.vmem [shape: f32[1,128], index: 4, kind: input, shape index: {}]
  %s5 = inlined_call_operand.hbm [shape: f32[2,128], index: 5, kind: output, shape index: {}]
  %s6 = sld [smem:[#allocation0]]
  $region30: #{net_forward.5} parent=0
    _
  %s8 = ssub.s32 1, %s6
  %s9 = scalar_select 0, %s8, %s6
  $region1: #{net_forward.5} parent=0
    #allocation2 [shape = 'u8[1024]{0}', space=vmem, size = 0x400, scoped, tag = 'output window, operand 0, single buffered']
    #allocation3 [shape = 's32[1]{0}', space=sflag, size = 0x4, scoped, tag = 'scoped memory for net_forward.5']
    %10 = vsyncpa [#allocation3], 0
    // Predicated region
    $region2: #{net_forward.5} parent=1 // pred_check
      _
    $region3: #{net_forward.5} parent=1 // pred_check_branch
      %12 = sbr.rel (0) target = $region5
    $region4: #{net_forward.5} parent=1 // pred_region
      _
    $region5: #{net_forward.5} parent=1 // pred_fallthru
      _
    // Predicated region
    $region6: #{net_forward.5} parent=1 // pred_check
      _
    $region7: #{net_forward.5} parent=1 // pred_check_branch
      %14 = sbr.rel (0) target = $region9
    $region8: #{net_forward.5} parent=1 // pred_region
      _
    $region9: #{net_forward.5} parent=1 // pred_fallthru
      _
    // Predicated region
    $region10: #{net_forward.5} parent=1 // pred_check
      _
    $region11: #{net_forward.5} parent=1 // pred_check_branch
      %16 = sbr.rel (0) target = $region13
    $region12: #{net_forward.5} parent=1 // pred_region
      _
    $region13: #{net_forward.5} parent=1 // pred_fallthru
      _
    // Predicated region
    $region14: #{net_forward.5} parent=1 // pred_check
      _
    $region15: #{net_forward.5} parent=1 // pred_check_branch
      %18 = sbr.rel (0) target = $region17
    $region16: #{net_forward.5} parent=1 // pred_region
      _
    $region17: #{net_forward.5} parent=1 // pred_fallthru
      _
    // Predicated region
    $region18: #{net_forward.5} parent=1 // pred_check
      _
    $region19: #{net_forward.5} parent=1 // pred_check_branch
      %20 = sbr.rel (0) target = $region21
    $region20: #{net_forward.5} parent=1 // pred_region
      _
    $region21: #{net_forward.5} parent=1 // pred_fallthru
      _
    %v22 = vld [vmem:[%s0] sm:$0x7f]
    %v23 = vld [vmem:[%s1] sm:$0xff]
    %v24 = vld [vmem:[%s1 + $0x8] sm:$0xff]
    %v25 = vld [vmem:[%s1 + $0x10] sm:$0xff]
    %v26 = vld [vmem:[%s1 + $0x18] sm:$0xff]
    %v27 = vld [vmem:[%s1 + $0x20] sm:$0xff]
    %v28 = vld [vmem:[%s1 + $0x28] sm:$0xff]
    %v29 = vld [vmem:[%s1 + $0x30] sm:$0xff]
    %v30 = vld [vmem:[%s1 + $0x38] sm:$0xff]
    %v31 = vld [vmem:[%s1 + $0x40] sm:$0xff]
    %v32 = vld [vmem:[%s1 + $0x48] sm:$0xff]
    %v33 = vld [vmem:[%s1 + $0x50] sm:$0xff]
    %v34 = vld [vmem:[%s1 + $0x58] sm:$0xff]
    %v35 = vld [vmem:[%s1 + $0x60] sm:$0xff]
    %v36 = vld [vmem:[%s1 + $0x68] sm:$0xff]
    %v37 = vld [vmem:[%s1 + $0x70] sm:$0xff]
    %v38 = vld [vmem:[%s1 + $0x78] sm:$0xff]
    %v39 = vld [vmem:[%s1 + $0x80] sm:$0xff]
    %v40 = vld [vmem:[%s1 + $0x88] sm:$0xff]
    %v41 = vld [vmem:[%s1 + $0x90] sm:$0xff]
    %v42 = vld [vmem:[%s1 + $0x98] sm:$0xff]
    %v43 = vld [vmem:[%s1 + $0xa0] sm:$0xff]
    %v44 = vld [vmem:[%s1 + $0xa8] sm:$0xff]
    %v45 = vld [vmem:[%s1 + $0xb0] sm:$0xff]
    %v46 = vld [vmem:[%s1 + $0xb8] sm:$0xff]
    %v47 = vld [vmem:[%s1 + $0xc0] sm:$0xff]
    %v48 = vld [vmem:[%s1 + $0xc8] sm:$0xff]
    %v49 = vld [vmem:[%s1 + $0xd0] sm:$0xff]
    %v50 = vld [vmem:[%s1 + $0xd8] sm:$0xff]
    %v51 = vld [vmem:[%s1 + $0xe0] sm:$0xff]
    %v52 = vld [vmem:[%s1 + $0xe8] sm:$0xff]
    %v53 = vld [vmem:[%s1 + $0xf0] sm:$0xff]
    %v54 = vld [vmem:[%s1 + $0xf8] sm:$0xff]
    %v55 = vld [vmem:[%s1 + $0x100] sm:$0xff]
    %v56 = vld [vmem:[%s1 + $0x108] sm:$0xff]
    %v57 = vld [vmem:[%s1 + $0x110] sm:$0xff]
    %v58 = vld [vmem:[%s1 + $0x118] sm:$0xff]
    %v59 = vld [vmem:[%s1 + $0x120] sm:$0xff]
    %v60 = vld [vmem:[%s1 + $0x128] sm:$0xff]
    %v61 = vld [vmem:[%s1 + $0x130] sm:$0xff]
    %v62 = vld [vmem:[%s1 + $0x138] sm:$0xff]
    %v63 = vld [vmem:[%s1 + $0x140] sm:$0xff]
    %v64 = vld [vmem:[%s1 + $0x148] sm:$0xff]
    %v65 = vld [vmem:[%s1 + $0x150] sm:$0xff]
    %v66 = vld [vmem:[%s1 + $0x158] sm:$0xff]
    %v67 = vld [vmem:[%s1 + $0x160] sm:$0xff]
    %v68 = vld [vmem:[%s1 + $0x168] sm:$0xff]
    %v69 = vld [vmem:[%s1 + $0x170] sm:$0xff]
    %v70 = vld [vmem:[%s1 + $0x178] sm:$0xff]
    %v71 = vld [vmem:[%s1 + $0x180] sm:$0xff]
    %v72 = vld [vmem:[%s1 + $0x188] sm:$0xff]
    %v73 = vld [vmem:[%s1 + $0x190] sm:$0xff]
    %v74 = vld [vmem:[%s1 + $0x198] sm:$0xff]
    %v75 = vld [vmem:[%s1 + $0x1a0] sm:$0xff]
    %v76 = vld [vmem:[%s1 + $0x1a8] sm:$0xff]
    %v77 = vld [vmem:[%s1 + $0x1b0] sm:$0xff]
    %v78 = vld [vmem:[%s1 + $0x1b8] sm:$0xff]
    %v79 = vld [vmem:[%s1 + $0x1c0] sm:$0xff]
    %v80 = vld [vmem:[%s1 + $0x1c8] sm:$0xff]
    %v81 = vld [vmem:[%s1 + $0x1d0] sm:$0xff]
    %v82 = vld [vmem:[%s1 + $0x1d8] sm:$0xff]
    %v83 = vld [vmem:[%s1 + $0x1e0] sm:$0xff]
    %v84 = vld [vmem:[%s1 + $0x1e8] sm:$0xff]
    %v85 = vld [vmem:[%s1 + $0x1f0] sm:$0xff]
    %v86 = vld [vmem:[%s1 + $0x1f8] sm:$0xff]
    %v87 = vld [vmem:[%s1 + $0x200] sm:$0xff]
    %v88 = vld [vmem:[%s1 + $0x208] sm:$0xff]
    %v89 = vld [vmem:[%s1 + $0x210] sm:$0xff]
    %v90 = vld [vmem:[%s1 + $0x218] sm:$0xff]
    %v91 = vld [vmem:[%s1 + $0x220] sm:$0xff]
    %v92 = vld [vmem:[%s1 + $0x228] sm:$0xff]
    %v93 = vld [vmem:[%s1 + $0x230] sm:$0xff]
    %v94 = vld [vmem:[%s1 + $0x238] sm:$0xff]
    %v95 = vld [vmem:[%s1 + $0x240] sm:$0xff]
    %v96 = vld [vmem:[%s1 + $0x248] sm:$0xff]
    %v97 = vld [vmem:[%s1 + $0x250] sm:$0xff]
    %v98 = vld [vmem:[%s1 + $0x258] sm:$0xff]
    %v99 = vld [vmem:[%s1 + $0x260] sm:$0xff]
    %v100 = vld [vmem:[%s1 + $0x268] sm:$0xff]
    %v101 = vld [vmem:[%s1 + $0x270] sm:$0xff]
    %v102 = vld [vmem:[%s1 + $0x278] sm:$0xff]
    %v103 = vld [vmem:[%s1 + $0x280] sm:$0xff]
    %v104 = vld [vmem:[%s1 + $0x288] sm:$0xff]
    %v105 = vld [vmem:[%s1 + $0x290] sm:$0xff]
    %v106 = vld [vmem:[%s1 + $0x298] sm:$0xff]
    %v107 = vld [vmem:[%s1 + $0x2a0] sm:$0xff]
    %v108 = vld [vmem:[%s1 + $0x2a8] sm:$0xff]
    %v109 = vld [vmem:[%s1 + $0x2b0] sm:$0xff]
    %v110 = vld [vmem:[%s1 + $0x2b8] sm:$0xff]
    %v111 = vld [vmem:[%s1 + $0x2c0] sm:$0xff]
    %v112 = vld [vmem:[%s1 + $0x2c8] sm:$0xff]
    %v113 = vld [vmem:[%s1 + $0x2d0] sm:$0xff]
    %v114 = vld [vmem:[%s1 + $0x2d8] sm:$0xff]
    %v115 = vld [vmem:[%s1 + $0x2e0] sm:$0xff]
    %v116 = vld [vmem:[%s1 + $0x2e8] sm:$0xff]
    %v117 = vld [vmem:[%s1 + $0x2f0] sm:$0xff]
    %v118 = vld [vmem:[%s1 + $0x2f8] sm:$0xff]
    %v119 = vld [vmem:[%s1 + $0x300] sm:$0xff]
    %v120 = vld [vmem:[%s1 + $0x308] sm:$0xff]
    %v121 = vld [vmem:[%s1 + $0x310] sm:$0xff]
    %v122 = vld [vmem:[%s1 + $0x318] sm:$0xff]
    %v123 = vld [vmem:[%s1 + $0x320] sm:$0xff]
    %v124 = vld [vmem:[%s1 + $0x328] sm:$0xff]
    %v125 = vld [vmem:[%s1 + $0x330] sm:$0xff]
    %v126 = vld [vmem:[%s1 + $0x338] sm:$0xff]
    %v127 = vld [vmem:[%s1 + $0x340] sm:$0xff]
    %v128 = vld [vmem:[%s1 + $0x348] sm:$0xff]
    %v129 = vld [vmem:[%s1 + $0x350] sm:$0xff]
    %v130 = vld [vmem:[%s1 + $0x358] sm:$0xff]
    %v131 = vld [vmem:[%s1 + $0x360] sm:$0xff]
    %v132 = vld [vmem:[%s1 + $0x368] sm:$0xff]
    %v133 = vld [vmem:[%s1 + $0x370] sm:$0xff]
    %v134 = vld [vmem:[%s1 + $0x378] sm:$0xff]
    %v135 = vld [vmem:[%s1 + $0x380] sm:$0xff]
    %v136 = vld [vmem:[%s1 + $0x388] sm:$0xff]
    %v137 = vld [vmem:[%s1 + $0x390] sm:$0xff]
    %v138 = vld [vmem:[%s1 + $0x398] sm:$0xff]
    %v139 = vld [vmem:[%s1 + $0x3a0] sm:$0xff]
    %v140 = vld [vmem:[%s1 + $0x3a8] sm:$0xff]
    %v141 = vld [vmem:[%s1 + $0x3b0] sm:$0xff]
    %v142 = vld [vmem:[%s1 + $0x3b8] sm:$0xff]
    %v143 = vld [vmem:[%s1 + $0x3c0] sm:$0xff]
    %v144 = vld [vmem:[%s1 + $0x3c8] sm:$0xff]
    %v145 = vld [vmem:[%s1 + $0x3d0] sm:$0xff]
    %v146 = vld [vmem:[%s1 + $0x3d8] sm:$0xff]
    %v147 = vld [vmem:[%s1 + $0x3e0] sm:$0xff]
    %v148 = vld [vmem:[%s1 + $0x3e8] sm:$0xff]
    %v149 = vld [vmem:[%s1 + $0x3f0] sm:$0xff]
    %v150 = vld [vmem:[%s1 + $0x3f8] sm:$0xff]
    %v151 = vld [vmem:[%s1 + $0x400] sm:$0xff]
    %v152 = vld [vmem:[%s1 + $0x408] sm:$0xff]
    %v153 = vld [vmem:[%s1 + $0x410] sm:$0xff]
    %v154 = vld [vmem:[%s1 + $0x418] sm:$0xff]
    %v155 = vld [vmem:[%s1 + $0x420] sm:$0xff]
    %v156 = vld [vmem:[%s1 + $0x428] sm:$0xff]
    %v157 = vld [vmem:[%s1 + $0x430] sm:$0xff]
    %v158 = vld [vmem:[%s1 + $0x438] sm:$0xff]
    %v159 = vld [vmem:[%s1 + $0x440] sm:$0xff]
    %v160 = vld [vmem:[%s1 + $0x448] sm:$0xff]
    %v161 = vld [vmem:[%s1 + $0x450] sm:$0xff]
    %v162 = vld [vmem:[%s1 + $0x458] sm:$0xff]
    %v163 = vld [vmem:[%s1 + $0x460] sm:$0xff]
    %v164 = vld [vmem:[%s1 + $0x468] sm:$0xff]
    %v165 = vld [vmem:[%s1 + $0x470] sm:$0xff]
    %v166 = vld [vmem:[%s1 + $0x478] sm:$0xff]
    %v167 = vld [vmem:[%s1 + $0x480] sm:$0xff]
    %v168 = vld [vmem:[%s1 + $0x488] sm:$0xff]
    %v169 = vld [vmem:[%s1 + $0x490] sm:$0xff]
    %v170 = vld [vmem:[%s1 + $0x498] sm:$0xff]
    %v171 = vld [vmem:[%s1 + $0x4a0] sm:$0xff]
    %v172 = vld [vmem:[%s1 + $0x4a8] sm:$0xff]
    %v173 = vld [vmem:[%s1 + $0x4b0] sm:$0xff]
    %v174 = vld [vmem:[%s1 + $0x4b8] sm:$0xff]
    %v175 = vld [vmem:[%s1 + $0x4c0] sm:$0xff]
    %v176 = vld [vmem:[%s1 + $0x4c8] sm:$0xff]
    %v177 = vld [vmem:[%s1 + $0x4d0] sm:$0xff]
    %v178 = vld [vmem:[%s1 + $0x4d8] sm:$0xff]
    %v179 = vld [vmem:[%s1 + $0x4e0] sm:$0xff]
    %v180 = vld [vmem:[%s1 + $0x4e8] sm:$0xff]
    %v181 = vld [vmem:[%s1 + $0x4f0] sm:$0xff]
    %v182 = vld [vmem:[%s1 + $0x4f8] sm:$0xff]
    %v183 = vld [vmem:[%s1 + $0x500] sm:$0xff]
    %v184 = vld [vmem:[%s1 + $0x508] sm:$0xff]
    %v185 = vld [vmem:[%s1 + $0x510] sm:$0xff]
    %v186 = vld [vmem:[%s1 + $0x518] sm:$0xff]
    %v187 = vld [vmem:[%s1 + $0x520] sm:$0xff]
    %v188 = vld [vmem:[%s1 + $0x528] sm:$0xff]
    %v189 = vld [vmem:[%s1 + $0x530] sm:$0xff]
    %v190 = vld [vmem:[%s1 + $0x538] sm:$0xff]
    %v191 = vld [vmem:[%s1 + $0x540] sm:$0xff]
    %v192 = vld [vmem:[%s1 + $0x548] sm:$0xff]
    %v193 = vld [vmem:[%s1 + $0x550] sm:$0xff]
    %v194 = vld [vmem:[%s1 + $0x558] sm:$0xff]
    %v195 = vld [vmem:[%s1 + $0x560] sm:$0xff]
    %v196 = vld [vmem:[%s1 + $0x568] sm:$0xff]
    %v197 = vld [vmem:[%s1 + $0x570] sm:$0xff]
    %v198 = vld [vmem:[%s1 + $0x578] sm:$0xff]
    %v199 = vld [vmem:[%s1 + $0x580] sm:$0xff]
    %v200 = vld [vmem:[%s1 + $0x588] sm:$0xff]
    %v201 = vld [vmem:[%s1 + $0x590] sm:$0xff]
    %v202 = vld [vmem:[%s1 + $0x598] sm:$0xff]
    %v203 = vld [vmem:[%s1 + $0x5a0] sm:$0xff]
    %v204 = vld [vmem:[%s1 + $0x5a8] sm:$0xff]
    %v205 = vld [vmem:[%s1 + $0x5b0] sm:$0xff]
    %v206 = vld [vmem:[%s1 + $0x5b8] sm:$0xff]
    %v207 = vld [vmem:[%s1 + $0x5c0] sm:$0xff]
    %v208 = vld [vmem:[%s1 + $0x5c8] sm:$0xff]
    %v209 = vld [vmem:[%s1 + $0x5d0] sm:$0xff]
    %v210 = vld [vmem:[%s1 + $0x5d8] sm:$0xff]
    %v211 = vld [vmem:[%s1 + $0x5e0] sm:$0xff]
    %v212 = vld [vmem:[%s1 + $0x5e8] sm:$0xff]
    %v213 = vld [vmem:[%s1 + $0x5f0] sm:$0xff]
    %v214 = vld [vmem:[%s1 + $0x5f8] sm:$0xff]
    %v215 = vld [vmem:[%s1 + $0x600] sm:$0xff]
    %v216 = vld [vmem:[%s1 + $0x608] sm:$0xff]
    %v217 = vld [vmem:[%s1 + $0x610] sm:$0xff]
    %v218 = vld [vmem:[%s1 + $0x618] sm:$0xff]
    %v219 = vld [vmem:[%s1 + $0x620] sm:$0xff]
    %v220 = vld [vmem:[%s1 + $0x628] sm:$0xff]
    %v221 = vld [vmem:[%s1 + $0x630] sm:$0xff]
    %v222 = vld [vmem:[%s1 + $0x638] sm:$0xff]
    %v223 = vld [vmem:[%s2] sm:$0xf]
    %v225 = vperm.slane %v223, 0
    %v226 = vperm.slane %v223, 1
    %v227 = vperm.slane %v223, 2
    %v228 = vperm.slane %v223, 3
    %234 = vst [vmem:[#allocation1] ss:$9 sm:$0xff] %v22
    %v235 = vld [vmem:[#allocation1] sm:$0xff]
    %v236 = vld [vmem:[#allocation1 + $0x9] sm:$0xff]
    %v237 = vld [vmem:[#allocation1 + $0x12] sm:$0xff]
    %v238 = vld [vmem:[#allocation1 + $0x1b] sm:$0xff]
    %v239 = vld [vmem:[#allocation1 + $0x24] sm:$0xff]
    %v240 = vld [vmem:[#allocation1 + $0x2d] sm:$0xff]
    %v241 = vld [vmem:[#allocation1 + $0x36] sm:$0xff]
    %v448 = vunpack.c.l.b16 %v23
    %v449 = vunpack.c.h.b16 %v23
    %v450 = vunpack.c.l.b16 %v24
    %v451 = vunpack.c.h.b16 %v24
    %v452 = vunpack.c.l.b16 %v25
    %v453 = vunpack.c.h.b16 %v25
    %v454 = vunpack.c.l.b16 %v26
    %v455 = vunpack.c.h.b16 %v26
    %v456 = vunpack.c.l.b16 %v27
    %v457 = vunpack.c.h.b16 %v27
    %v458 = vunpack.c.l.b16 %v28
    %v459 = vunpack.c.h.b16 %v28
    %v460 = vunpack.c.l.b16 %v29
    %v461 = vunpack.c.h.b16 %v29
    %v462 = vunpack.c.l.b16 %v30
    %v463 = vunpack.c.h.b16 %v30
    %v464 = vunpack.c.l.b16 %v31
    %v465 = vunpack.c.h.b16 %v31
    %v466 = vunpack.c.l.b16 %v32
    %v467 = vunpack.c.h.b16 %v32
    %v468 = vunpack.c.l.b16 %v33
    %v469 = vunpack.c.h.b16 %v33
    %v470 = vunpack.c.l.b16 %v34
    %v471 = vunpack.c.h.b16 %v34
    %v472 = vunpack.c.l.b16 %v35
    %v473 = vunpack.c.h.b16 %v35
    %v474 = vunpack.c.l.b16 %v36
    %v475 = vunpack.c.h.b16 %v36
    %v476 = vunpack.c.l.b16 %v37
    %v477 = vunpack.c.h.b16 %v37
    %v478 = vunpack.c.l.b16 %v38
    %v479 = vunpack.c.h.b16 %v38
    %v480 = vunpack.c.l.b16 %v39
    %v481 = vunpack.c.h.b16 %v39
    %v482 = vunpack.c.l.b16 %v40
    %v483 = vunpack.c.h.b16 %v40
    %v484 = vunpack.c.l.b16 %v41
    %v485 = vunpack.c.h.b16 %v41
    %v486 = vunpack.c.l.b16 %v42
    %v487 = vunpack.c.h.b16 %v42
    %v488 = vunpack.c.l.b16 %v43
    %v489 = vunpack.c.h.b16 %v43
    %v490 = vunpack.c.l.b16 %v44
    %v491 = vunpack.c.h.b16 %v44
    %v492 = vunpack.c.l.b16 %v45
    %v493 = vunpack.c.h.b16 %v45
    %v494 = vunpack.c.l.b16 %v46
    %v495 = vunpack.c.h.b16 %v46
    %v496 = vunpack.c.l.b16 %v47
    %v497 = vunpack.c.h.b16 %v47
    %v498 = vunpack.c.l.b16 %v48
    %v499 = vunpack.c.h.b16 %v48
    %v500 = vunpack.c.l.b16 %v49
    %v501 = vunpack.c.h.b16 %v49
    %v502 = vunpack.c.l.b16 %v50
    %v503 = vunpack.c.h.b16 %v50
    %v504 = vunpack.c.l.b16 %v51
    %v505 = vunpack.c.h.b16 %v51
    %v506 = vunpack.c.l.b16 %v52
    %v507 = vunpack.c.h.b16 %v52
    %v508 = vunpack.c.l.b16 %v53
    %v509 = vunpack.c.h.b16 %v53
    %v510 = vunpack.c.l.b16 %v54
    %v511 = vunpack.c.h.b16 %v54
    %v512 = vunpack.c.l.b16 %v55
    %v513 = vunpack.c.h.b16 %v55
    %v514 = vunpack.c.l.b16 %v56
    %v515 = vunpack.c.h.b16 %v56
    %v516 = vunpack.c.l.b16 %v57
    %v517 = vunpack.c.h.b16 %v57
    %v518 = vunpack.c.l.b16 %v58
    %v519 = vunpack.c.h.b16 %v58
    %v520 = vunpack.c.l.b16 %v59
    %v521 = vunpack.c.h.b16 %v59
    %v522 = vunpack.c.l.b16 %v60
    %v523 = vunpack.c.h.b16 %v60
    %v524 = vunpack.c.l.b16 %v61
    %v525 = vunpack.c.h.b16 %v61
    %v526 = vunpack.c.l.b16 %v62
    %v527 = vunpack.c.h.b16 %v62
    %v528 = vunpack.c.l.b16 %v63
    %v529 = vunpack.c.h.b16 %v63
    %v530 = vunpack.c.l.b16 %v64
    %v531 = vunpack.c.h.b16 %v64
    %v532 = vunpack.c.l.b16 %v65
    %v533 = vunpack.c.h.b16 %v65
    %v534 = vunpack.c.l.b16 %v66
    %v535 = vunpack.c.h.b16 %v66
    %v536 = vunpack.c.l.b16 %v67
    %v537 = vunpack.c.h.b16 %v67
    %v538 = vunpack.c.l.b16 %v68
    %v539 = vunpack.c.h.b16 %v68
    %v540 = vunpack.c.l.b16 %v69
    %v541 = vunpack.c.h.b16 %v69
    %v542 = vunpack.c.l.b16 %v70
    %v543 = vunpack.c.h.b16 %v70
    %v544 = vunpack.c.l.b16 %v71
    %v545 = vunpack.c.h.b16 %v71
    %v546 = vunpack.c.l.b16 %v72
    %v547 = vunpack.c.h.b16 %v72
    %v548 = vunpack.c.l.b16 %v73
    %v549 = vunpack.c.h.b16 %v73
    %v550 = vunpack.c.l.b16 %v74
    %v551 = vunpack.c.h.b16 %v74
    %v552 = vunpack.c.l.b16 %v75
    %v553 = vunpack.c.h.b16 %v75
    %v554 = vunpack.c.l.b16 %v76
    %v555 = vunpack.c.h.b16 %v76
    %v556 = vunpack.c.l.b16 %v77
    %v557 = vunpack.c.h.b16 %v77
    %v558 = vunpack.c.l.b16 %v78
    %v559 = vunpack.c.h.b16 %v78
    %v560 = vunpack.c.l.b16 %v79
    %v561 = vunpack.c.h.b16 %v79
    %v562 = vunpack.c.l.b16 %v80
    %v563 = vunpack.c.h.b16 %v80
    %v564 = vunpack.c.l.b16 %v81
    %v565 = vunpack.c.h.b16 %v81
    %v566 = vunpack.c.l.b16 %v82
    %v567 = vunpack.c.h.b16 %v82
    %v568 = vunpack.c.l.b16 %v83
    %v569 = vunpack.c.h.b16 %v83
    %v570 = vunpack.c.l.b16 %v84
    %v571 = vunpack.c.h.b16 %v84
    %v572 = vunpack.c.l.b16 %v85
    %v573 = vunpack.c.h.b16 %v85
    %v574 = vunpack.c.l.b16 %v86
    %v575 = vunpack.c.h.b16 %v86
    %v576 = vunpack.c.l.b16 %v87
    %v577 = vunpack.c.h.b16 %v87
    %v578 = vunpack.c.l.b16 %v88
    %v579 = vunpack.c.h.b16 %v88
    %v580 = vunpack.c.l.b16 %v89
    %v581 = vunpack.c.h.b16 %v89
    %v582 = vunpack.c.l.b16 %v90
    %v583 = vunpack.c.h.b16 %v90
    %v584 = vunpack.c.l.b16 %v91
    %v585 = vunpack.c.h.b16 %v91
    %v586 = vunpack.c.l.b16 %v92
    %v587 = vunpack.c.h.b16 %v92
    %v588 = vunpack.c.l.b16 %v93
    %v589 = vunpack.c.h.b16 %v93
    %v590 = vunpack.c.l.b16 %v94
    %v591 = vunpack.c.h.b16 %v94
    %v592 = vunpack.c.l.b16 %v95
    %v593 = vunpack.c.h.b16 %v95
    %v594 = vunpack.c.l.b16 %v96
    %v595 = vunpack.c.h.b16 %v96
    %v596 = vunpack.c.l.b16 %v97
    %v597 = vunpack.c.h.b16 %v97
    %v598 = vunpack.c.l.b16 %v98
    %v599 = vunpack.c.h.b16 %v98
    %v600 = vunpack.c.l.b16 %v99
    %v601 = vunpack.c.h.b16 %v99
    %v602 = vunpack.c.l.b16 %v100
    %v603 = vunpack.c.h.b16 %v100
    %v604 = vunpack.c.l.b16 %v101
    %v605 = vunpack.c.h.b16 %v101
    %v606 = vunpack.c.l.b16 %v102
    %v607 = vunpack.c.h.b16 %v102
    %v608 = vunpack.c.l.b16 %v103
    %v609 = vunpack.c.h.b16 %v103
    %v610 = vunpack.c.l.b16 %v104
    %v611 = vunpack.c.h.b16 %v104
    %v612 = vunpack.c.l.b16 %v105
    %v613 = vunpack.c.h.b16 %v105
    %v614 = vunpack.c.l.b16 %v106
    %v615 = vunpack.c.h.b16 %v106
    %v616 = vunpack.c.l.b16 %v107
    %v617 = vunpack.c.h.b16 %v107
    %v618 = vunpack.c.l.b16 %v108
    %v619 = vunpack.c.h.b16 %v108
    %v620 = vunpack.c.l.b16 %v109
    %v621 = vunpack.c.h.b16 %v109
    %v622 = vunpack.c.l.b16 %v110
    %v623 = vunpack.c.h.b16 %v110
    %v624 = vunpack.c.l.b16 %v111
    %v625 = vunpack.c.h.b16 %v111
    %v626 = vunpack.c.l.b16 %v112
    %v627 = vunpack.c.h.b16 %v112
    %v628 = vunpack.c.l.b16 %v113
    %v629 = vunpack.c.h.b16 %v113
    %v630 = vunpack.c.l.b16 %v114
    %v631 = vunpack.c.h.b16 %v114
    %v632 = vunpack.c.l.b16 %v115
    %v633 = vunpack.c.h.b16 %v115
    %v634 = vunpack.c.l.b16 %v116
    %v635 = vunpack.c.h.b16 %v116
    %v636 = vunpack.c.l.b16 %v117
    %v637 = vunpack.c.h.b16 %v117
    %v638 = vunpack.c.l.b16 %v118
    %v639 = vunpack.c.h.b16 %v118
    %v640 = vunpack.c.l.b16 %v119
    %v641 = vunpack.c.h.b16 %v119
    %v642 = vunpack.c.l.b16 %v120
    %v643 = vunpack.c.h.b16 %v120
    %v644 = vunpack.c.l.b16 %v121
    %v645 = vunpack.c.h.b16 %v121
    %v646 = vunpack.c.l.b16 %v122
    %v647 = vunpack.c.h.b16 %v122
    %v648 = vunpack.c.l.b16 %v123
    %v649 = vunpack.c.h.b16 %v123
    %v650 = vunpack.c.l.b16 %v124
    %v651 = vunpack.c.h.b16 %v124
    %v652 = vunpack.c.l.b16 %v125
    %v653 = vunpack.c.h.b16 %v125
    %v654 = vunpack.c.l.b16 %v126
    %v655 = vunpack.c.h.b16 %v126
    %v656 = vunpack.c.l.b16 %v127
    %v657 = vunpack.c.h.b16 %v127
    %v658 = vunpack.c.l.b16 %v128
    %v659 = vunpack.c.h.b16 %v128
    %v660 = vunpack.c.l.b16 %v129
    %v661 = vunpack.c.h.b16 %v129
    %v662 = vunpack.c.l.b16 %v130
    %v663 = vunpack.c.h.b16 %v130
    %v664 = vunpack.c.l.b16 %v131
    %v665 = vunpack.c.h.b16 %v131
    %v666 = vunpack.c.l.b16 %v132
    %v667 = vunpack.c.h.b16 %v132
    %v668 = vunpack.c.l.b16 %v133
    %v669 = vunpack.c.h.b16 %v133
    %v670 = vunpack.c.l.b16 %v134
    %v671 = vunpack.c.h.b16 %v134
    %v672 = vunpack.c.l.b16 %v135
    %v673 = vunpack.c.h.b16 %v135
    %v674 = vunpack.c.l.b16 %v136
    %v675 = vunpack.c.h.b16 %v136
    %v676 = vunpack.c.l.b16 %v137
    %v677 = vunpack.c.h.b16 %v137
    %v678 = vunpack.c.l.b16 %v138
    %v679 = vunpack.c.h.b16 %v138
    %v680 = vunpack.c.l.b16 %v139
    %v681 = vunpack.c.h.b16 %v139
    %v682 = vunpack.c.l.b16 %v140
    %v683 = vunpack.c.h.b16 %v140
    %v684 = vunpack.c.l.b16 %v141
    %v685 = vunpack.c.h.b16 %v141
    %v686 = vunpack.c.l.b16 %v142
    %v687 = vunpack.c.h.b16 %v142
    %v688 = vunpack.c.l.b16 %v143
    %v689 = vunpack.c.h.b16 %v143
    %v690 = vunpack.c.l.b16 %v144
    %v691 = vunpack.c.h.b16 %v144
    %v692 = vunpack.c.l.b16 %v145
    %v693 = vunpack.c.h.b16 %v145
    %v694 = vunpack.c.l.b16 %v146
    %v695 = vunpack.c.h.b16 %v146
    %v696 = vunpack.c.l.b16 %v147
    %v697 = vunpack.c.h.b16 %v147
    %v698 = vunpack.c.l.b16 %v148
    %v699 = vunpack.c.h.b16 %v148
    %v700 = vunpack.c.l.b16 %v149
    %v701 = vunpack.c.h.b16 %v149
    %v702 = vunpack.c.l.b16 %v150
    %v703 = vunpack.c.h.b16 %v150
    %v704 = vunpack.c.l.b16 %v151
    %v705 = vunpack.c.h.b16 %v151
    %v706 = vunpack.c.l.b16 %v152
    %v707 = vunpack.c.h.b16 %v152
    %v708 = vunpack.c.l.b16 %v153
    %v709 = vunpack.c.h.b16 %v153
    %v710 = vunpack.c.l.b16 %v154
    %v711 = vunpack.c.h.b16 %v154
    %v712 = vunpack.c.l.b16 %v155
    %v713 = vunpack.c.h.b16 %v155
    %v714 = vunpack.c.l.b16 %v156
    %v715 = vunpack.c.h.b16 %v156
    %v716 = vunpack.c.l.b16 %v157
    %v717 = vunpack.c.h.b16 %v157
    %v718 = vunpack.c.l.b16 %v158
    %v719 = vunpack.c.h.b16 %v158
    %v720 = vunpack.c.l.b16 %v159
    %v721 = vunpack.c.h.b16 %v159
    %v722 = vunpack.c.l.b16 %v160
    %v723 = vunpack.c.h.b16 %v160
    %v724 = vunpack.c.l.b16 %v161
    %v725 = vunpack.c.h.b16 %v161
    %v726 = vunpack.c.l.b16 %v162
    %v727 = vunpack.c.h.b16 %v162
    %v728 = vunpack.c.l.b16 %v163
    %v729 = vunpack.c.h.b16 %v163
    %v730 = vunpack.c.l.b16 %v164
    %v731 = vunpack.c.h.b16 %v164
    %v732 = vunpack.c.l.b16 %v165
    %v733 = vunpack.c.h.b16 %v165
    %v734 = vunpack.c.l.b16 %v166
    %v735 = vunpack.c.h.b16 %v166
    %v736 = vunpack.c.l.b16 %v167
    %v737 = vunpack.c.h.b16 %v167
    %v738 = vunpack.c.l.b16 %v168
    %v739 = vunpack.c.h.b16 %v168
    %v740 = vunpack.c.l.b16 %v169
    %v741 = vunpack.c.h.b16 %v169
    %v742 = vunpack.c.l.b16 %v170
    %v743 = vunpack.c.h.b16 %v170
    %v744 = vunpack.c.l.b16 %v171
    %v745 = vunpack.c.h.b16 %v171
    %v746 = vunpack.c.l.b16 %v172
    %v747 = vunpack.c.h.b16 %v172
    %v748 = vunpack.c.l.b16 %v173
    %v749 = vunpack.c.h.b16 %v173
    %v750 = vunpack.c.l.b16 %v174
    %v751 = vunpack.c.h.b16 %v174
    %v752 = vunpack.c.l.b16 %v175
    %v753 = vunpack.c.h.b16 %v175
    %v754 = vunpack.c.l.b16 %v176
    %v755 = vunpack.c.h.b16 %v176
    %v756 = vunpack.c.l.b16 %v177
    %v757 = vunpack.c.h.b16 %v177
    %v758 = vunpack.c.l.b16 %v178
    %v759 = vunpack.c.h.b16 %v178
    %v760 = vunpack.c.l.b16 %v179
    %v761 = vunpack.c.h.b16 %v179
    %v762 = vunpack.c.l.b16 %v180
    %v763 = vunpack.c.h.b16 %v180
    %v764 = vunpack.c.l.b16 %v181
    %v765 = vunpack.c.h.b16 %v181
    %v766 = vunpack.c.l.b16 %v182
    %v767 = vunpack.c.h.b16 %v182
    %v768 = vunpack.c.l.b16 %v183
    %v769 = vunpack.c.h.b16 %v183
    %v770 = vunpack.c.l.b16 %v184
    %v771 = vunpack.c.h.b16 %v184
    %v772 = vunpack.c.l.b16 %v185
    %v773 = vunpack.c.h.b16 %v185
    %v774 = vunpack.c.l.b16 %v186
    %v775 = vunpack.c.h.b16 %v186
    %v776 = vunpack.c.l.b16 %v187
    %v777 = vunpack.c.h.b16 %v187
    %v778 = vunpack.c.l.b16 %v188
    %v779 = vunpack.c.h.b16 %v188
    %v780 = vunpack.c.l.b16 %v189
    %v781 = vunpack.c.h.b16 %v189
    %v782 = vunpack.c.l.b16 %v190
    %v783 = vunpack.c.h.b16 %v190
    %v784 = vunpack.c.l.b16 %v191
    %v785 = vunpack.c.h.b16 %v191
    %v786 = vunpack.c.l.b16 %v192
    %v787 = vunpack.c.h.b16 %v192
    %v788 = vunpack.c.l.b16 %v193
    %v789 = vunpack.c.h.b16 %v193
    %v790 = vunpack.c.l.b16 %v194
    %v791 = vunpack.c.h.b16 %v194
    %v792 = vunpack.c.l.b16 %v195
    %v793 = vunpack.c.h.b16 %v195
    %v794 = vunpack.c.l.b16 %v196
    %v795 = vunpack.c.h.b16 %v196
    %v796 = vunpack.c.l.b16 %v197
    %v797 = vunpack.c.h.b16 %v197
    %v798 = vunpack.c.l.b16 %v198
    %v799 = vunpack.c.h.b16 %v198
    %v800 = vunpack.c.l.b16 %v199
    %v801 = vunpack.c.h.b16 %v199
    %v802 = vunpack.c.l.b16 %v200
    %v803 = vunpack.c.h.b16 %v200
    %v804 = vunpack.c.l.b16 %v201
    %v805 = vunpack.c.h.b16 %v201
    %v806 = vunpack.c.l.b16 %v202
    %v807 = vunpack.c.h.b16 %v202
    %v808 = vunpack.c.l.b16 %v203
    %v809 = vunpack.c.h.b16 %v203
    %v810 = vunpack.c.l.b16 %v204
    %v811 = vunpack.c.h.b16 %v204
    %v812 = vunpack.c.l.b16 %v205
    %v813 = vunpack.c.h.b16 %v205
    %v814 = vunpack.c.l.b16 %v206
    %v815 = vunpack.c.h.b16 %v206
    %v816 = vunpack.c.l.b16 %v207
    %v817 = vunpack.c.h.b16 %v207
    %v818 = vunpack.c.l.b16 %v208
    %v819 = vunpack.c.h.b16 %v208
    %v820 = vunpack.c.l.b16 %v209
    %v821 = vunpack.c.h.b16 %v209
    %v822 = vunpack.c.l.b16 %v210
    %v823 = vunpack.c.h.b16 %v210
    %v824 = vunpack.c.l.b16 %v211
    %v825 = vunpack.c.h.b16 %v211
    %v826 = vunpack.c.l.b16 %v212
    %v827 = vunpack.c.h.b16 %v212
    %v828 = vunpack.c.l.b16 %v213
    %v829 = vunpack.c.h.b16 %v213
    %v830 = vunpack.c.l.b16 %v214
    %v831 = vunpack.c.h.b16 %v214
    %v832 = vunpack.c.l.b16 %v215
    %v833 = vunpack.c.h.b16 %v215
    %v834 = vunpack.c.l.b16 %v216
    %v835 = vunpack.c.h.b16 %v216
    %v836 = vunpack.c.l.b16 %v217
    %v837 = vunpack.c.h.b16 %v217
    %v838 = vunpack.c.l.b16 %v218
    %v839 = vunpack.c.h.b16 %v218
    %v840 = vunpack.c.l.b16 %v219
    %v841 = vunpack.c.h.b16 %v219
    %v842 = vunpack.c.l.b16 %v220
    %v843 = vunpack.c.h.b16 %v220
    %v844 = vunpack.c.l.b16 %v221
    %v845 = vunpack.c.h.b16 %v221
    %v846 = vunpack.c.l.b16 %v222
    %v847 = vunpack.c.h.b16 %v222
    %v848 = vpack.c.b16 %v452, %v448
    %v849 = vpack.c.b16 %v453, %v449
    %v850 = vpack.c.b16 %v454, %v450
    %v851 = vpack.c.b16 %v455, %v451
    %v852 = vpack.c.b16 %v460, %v456
    %v853 = vpack.c.b16 %v461, %v457
    %v854 = vpack.c.b16 %v462, %v458
    %v855 = vpack.c.b16 %v463, %v459
    %v856 = vpack.c.b16 %v468, %v464
    %v857 = vpack.c.b16 %v469, %v465
    %v858 = vpack.c.b16 %v470, %v466
    %v859 = vpack.c.b16 %v471, %v467
    %v860 = vpack.c.b16 %v476, %v472
    %v861 = vpack.c.b16 %v477, %v473
    %v862 = vpack.c.b16 %v478, %v474
    %v863 = vpack.c.b16 %v479, %v475
    %v864 = vpack.c.b16 %v484, %v480
    %v865 = vpack.c.b16 %v485, %v481
    %v866 = vpack.c.b16 %v486, %v482
    %v867 = vpack.c.b16 %v487, %v483
    %v868 = vpack.c.b16 %v492, %v488
    %v869 = vpack.c.b16 %v493, %v489
    %v870 = vpack.c.b16 %v494, %v490
    %v871 = vpack.c.b16 %v495, %v491
    %v872 = vpack.c.b16 %v500, %v496
    %v873 = vpack.c.b16 %v501, %v497
    %v874 = vpack.c.b16 %v502, %v498
    %v875 = vpack.c.b16 %v503, %v499
    %v876 = vpack.c.b16 %v508, %v504
    %v877 = vpack.c.b16 %v509, %v505
    %v878 = vpack.c.b16 %v510, %v506
    %v879 = vpack.c.b16 %v511, %v507
    %v880 = vpack.c.b16 %v516, %v512
    %v881 = vpack.c.b16 %v517, %v513
    %v882 = vpack.c.b16 %v518, %v514
    %v883 = vpack.c.b16 %v519, %v515
    %v884 = vpack.c.b16 %v524, %v520
    %v885 = vpack.c.b16 %v525, %v521
    %v886 = vpack.c.b16 %v526, %v522
    %v887 = vpack.c.b16 %v527, %v523
    %v888 = vpack.c.b16 %v532, %v528
    %v889 = vpack.c.b16 %v533, %v529
    %v890 = vpack.c.b16 %v534, %v530
    %v891 = vpack.c.b16 %v535, %v531
    %v892 = vpack.c.b16 %v540, %v536
    %v893 = vpack.c.b16 %v541, %v537
    %v894 = vpack.c.b16 %v542, %v538
    %v895 = vpack.c.b16 %v543, %v539
    %v896 = vpack.c.b16 %v548, %v544
    %v897 = vpack.c.b16 %v549, %v545
    %v898 = vpack.c.b16 %v550, %v546
    %v899 = vpack.c.b16 %v551, %v547
    %v900 = vpack.c.b16 %v556, %v552
    %v901 = vpack.c.b16 %v557, %v553
    %v902 = vpack.c.b16 %v558, %v554
    %v903 = vpack.c.b16 %v559, %v555
    %v904 = vpack.c.b16 %v564, %v560
    %v905 = vpack.c.b16 %v565, %v561
    %v906 = vpack.c.b16 %v566, %v562
    %v907 = vpack.c.b16 %v567, %v563
    %v908 = vpack.c.b16 %v572, %v568
    %v909 = vpack.c.b16 %v573, %v569
    %v910 = vpack.c.b16 %v574, %v570
    %v911 = vpack.c.b16 %v575, %v571
    %v912 = vpack.c.b16 %v580, %v576
    %v913 = vpack.c.b16 %v581, %v577
    %v914 = vpack.c.b16 %v582, %v578
    %v915 = vpack.c.b16 %v583, %v579
    %v916 = vpack.c.b16 %v588, %v584
    %v917 = vpack.c.b16 %v589, %v585
    %v918 = vpack.c.b16 %v590, %v586
    %v919 = vpack.c.b16 %v591, %v587
    %v920 = vpack.c.b16 %v596, %v592
    %v921 = vpack.c.b16 %v597, %v593
    %v922 = vpack.c.b16 %v598, %v594
    %v923 = vpack.c.b16 %v599, %v595
    %v924 = vpack.c.b16 %v604, %v600
    %v925 = vpack.c.b16 %v605, %v601
    %v926 = vpack.c.b16 %v606, %v602
    %v927 = vpack.c.b16 %v607, %v603
    %v928 = vpack.c.b16 %v612, %v608
    %v929 = vpack.c.b16 %v613, %v609
    %v930 = vpack.c.b16 %v614, %v610
    %v931 = vpack.c.b16 %v615, %v611
    %v932 = vpack.c.b16 %v620, %v616
    %v933 = vpack.c.b16 %v621, %v617
    %v934 = vpack.c.b16 %v622, %v618
    %v935 = vpack.c.b16 %v623, %v619
    %v936 = vpack.c.b16 %v628, %v624
    %v937 = vpack.c.b16 %v629, %v625
    %v938 = vpack.c.b16 %v630, %v626
    %v939 = vpack.c.b16 %v631, %v627
    %v940 = vpack.c.b16 %v636, %v632
    %v941 = vpack.c.b16 %v637, %v633
    %v942 = vpack.c.b16 %v638, %v634
    %v943 = vpack.c.b16 %v639, %v635
    %v944 = vpack.c.b16 %v644, %v640
    %v945 = vpack.c.b16 %v645, %v641
    %v946 = vpack.c.b16 %v646, %v642
    %v947 = vpack.c.b16 %v647, %v643
    %v948 = vpack.c.b16 %v652, %v648
    %v949 = vpack.c.b16 %v653, %v649
    %v950 = vpack.c.b16 %v654, %v650
    %v951 = vpack.c.b16 %v655, %v651
    %v952 = vpack.c.b16 %v660, %v656
    %v953 = vpack.c.b16 %v661, %v657
    %v954 = vpack.c.b16 %v662, %v658
    %v955 = vpack.c.b16 %v663, %v659
    %v956 = vpack.c.b16 %v668, %v664
    %v957 = vpack.c.b16 %v669, %v665
    %v958 = vpack.c.b16 %v670, %v666
    %v959 = vpack.c.b16 %v671, %v667
    %v960 = vpack.c.b16 %v676, %v672
    %v961 = vpack.c.b16 %v677, %v673
    %v962 = vpack.c.b16 %v678, %v674
    %v963 = vpack.c.b16 %v679, %v675
    %v964 = vpack.c.b16 %v684, %v680
    %v965 = vpack.c.b16 %v685, %v681
    %v966 = vpack.c.b16 %v686, %v682
    %v967 = vpack.c.b16 %v687, %v683
    %v968 = vpack.c.b16 %v692, %v688
    %v969 = vpack.c.b16 %v693, %v689
    %v970 = vpack.c.b16 %v694, %v690
    %v971 = vpack.c.b16 %v695, %v691
    %v972 = vpack.c.b16 %v700, %v696
    %v973 = vpack.c.b16 %v701, %v697
    %v974 = vpack.c.b16 %v702, %v698
    %v975 = vpack.c.b16 %v703, %v699
    %v976 = vpack.c.b16 %v708, %v704
    %v977 = vpack.c.b16 %v709, %v705
    %v978 = vpack.c.b16 %v710, %v706
    %v979 = vpack.c.b16 %v711, %v707
    %v980 = vpack.c.b16 %v716, %v712
    %v981 = vpack.c.b16 %v717, %v713
    %v982 = vpack.c.b16 %v718, %v714
    %v983 = vpack.c.b16 %v719, %v715
    %v984 = vpack.c.b16 %v724, %v720
    %v985 = vpack.c.b16 %v725, %v721
    %v986 = vpack.c.b16 %v726, %v722
    %v987 = vpack.c.b16 %v727, %v723
    %v988 = vpack.c.b16 %v732, %v728
    %v989 = vpack.c.b16 %v733, %v729
    %v990 = vpack.c.b16 %v734, %v730
    %v991 = vpack.c.b16 %v735, %v731
    %v992 = vpack.c.b16 %v740, %v736
    %v993 = vpack.c.b16 %v741, %v737
    %v994 = vpack.c.b16 %v742, %v738
    %v995 = vpack.c.b16 %v743, %v739
    %v996 = vpack.c.b16 %v748, %v744
    %v997 = vpack.c.b16 %v749, %v745
    %v998 = vpack.c.b16 %v750, %v746
    %v999 = vpack.c.b16 %v751, %v747
    %v1000 = vpack.c.b16 %v756, %v752
    %v1001 = vpack.c.b16 %v757, %v753
    %v1002 = vpack.c.b16 %v758, %v754
    %v1003 = vpack.c.b16 %v759, %v755
    %v1004 = vpack.c.b16 %v764, %v760
    %v1005 = vpack.c.b16 %v765, %v761
    %v1006 = vpack.c.b16 %v766, %v762
    %v1007 = vpack.c.b16 %v767, %v763
    %v1008 = vpack.c.b16 %v772, %v768
    %v1009 = vpack.c.b16 %v773, %v769
    %v1010 = vpack.c.b16 %v774, %v770
    %v1011 = vpack.c.b16 %v775, %v771
    %v1012 = vpack.c.b16 %v780, %v776
    %v1013 = vpack.c.b16 %v781, %v777
    %v1014 = vpack.c.b16 %v782, %v778
    %v1015 = vpack.c.b16 %v783, %v779
    %v1016 = vpack.c.b16 %v788, %v784
    %v1017 = vpack.c.b16 %v789, %v785
    %v1018 = vpack.c.b16 %v790, %v786
    %v1019 = vpack.c.b16 %v791, %v787
    %v1020 = vpack.c.b16 %v796, %v792
    %v1021 = vpack.c.b16 %v797, %v793
    %v1022 = vpack.c.b16 %v798, %v794
    %v1023 = vpack.c.b16 %v799, %v795
    %v1024 = vpack.c.b16 %v804, %v800
    %v1025 = vpack.c.b16 %v805, %v801
    %v1026 = vpack.c.b16 %v806, %v802
    %v1027 = vpack.c.b16 %v807, %v803
    %v1028 = vpack.c.b16 %v812, %v808
    %v1029 = vpack.c.b16 %v813, %v809
    %v1030 = vpack.c.b16 %v814, %v810
    %v1031 = vpack.c.b16 %v815, %v811
    %v1032 = vpack.c.b16 %v820, %v816
    %v1033 = vpack.c.b16 %v821, %v817
    %v1034 = vpack.c.b16 %v822, %v818
    %v1035 = vpack.c.b16 %v823, %v819
    %v1036 = vpack.c.b16 %v828, %v824
    %v1037 = vpack.c.b16 %v829, %v825
    %v1038 = vpack.c.b16 %v830, %v826
    %v1039 = vpack.c.b16 %v831, %v827
    %v1040 = vpack.c.b16 %v836, %v832
    %v1041 = vpack.c.b16 %v837, %v833
    %v1042 = vpack.c.b16 %v838, %v834
    %v1043 = vpack.c.b16 %v839, %v835
    %v1044 = vpack.c.b16 %v844, %v840
    %v1045 = vpack.c.b16 %v845, %v841
    %v1046 = vpack.c.b16 %v846, %v842
    %v1047 = vpack.c.b16 %v847, %v843
    %vm1248 = vcmask 261120
    %v1249 = vsel %vm1248, %v241, 0
    %1251 = vmatpush.bf16.msra.mxu0 %v876
    %1252 = vmatpush.bf16.msra.mxu0 %v872
    %1253 = vmatpush.bf16.msra.mxu0 %v868
    %1254 = vmatpush.bf16.msra.mxu0 %v864
    %1255 = vmatpush.bf16.msra.mxu0 %v860
    %1256 = vmatpush.bf16.msra.mxu0 %v856
    %1257 = vmatpush.bf16.msra.mxu0 %v852
    %1258 = vmatpush.bf16.msra.mxu0 %v848
    %1259 = vmatmul.bf16.gmra.mxu0 %v235
    %v1260 = vpop.f32.mrf.mxu0
    %v1261 = vadd.f32 %v225, %v1260
    %v1262 = vpop.f32.mrf.mxu0
    %1263 = vdwg.mxu0
    %1264 = vmatpush.bf16.msra.mxu0 %v908
    %1265 = vmatpush.bf16.msra.mxu0 %v904
    %1266 = vmatpush.bf16.msra.mxu0 %v900
    %1267 = vmatpush.bf16.msra.mxu0 %v896
    %1268 = vmatpush.bf16.msra.mxu0 %v892
    %1269 = vmatpush.bf16.msra.mxu0 %v888
    %1270 = vmatpush.bf16.msra.mxu0 %v884
    %1271 = vmatpush.bf16.msra.mxu0 %v880
    %1272 = vmatmul.bf16.gmra.mxu0 %v236
    %v1273 = vpop.f32.mrf.mxu0
    %v1274 = vadd.f32 %v1261, %v1273
    %v1275 = vpop.f32.mrf.mxu0
    %1276 = vdwg.mxu0
    %1277 = vmatpush.bf16.msra.mxu0 %v940
    %1278 = vmatpush.bf16.msra.mxu0 %v936
    %1279 = vmatpush.bf16.msra.mxu0 %v932
    %1280 = vmatpush.bf16.msra.mxu0 %v928
    %1281 = vmatpush.bf16.msra.mxu0 %v924
    %1282 = vmatpush.bf16.msra.mxu0 %v920
    %1283 = vmatpush.bf16.msra.mxu0 %v916
    %1284 = vmatpush.bf16.msra.mxu0 %v912
    %1285 = vmatmul.bf16.gmra.mxu0 %v237
    %v1286 = vpop.f32.mrf.mxu0
    %v1287 = vadd.f32 %v1274, %v1286
    %v1288 = vpop.f32.mrf.mxu0
    %1289 = vdwg.mxu0
    %1290 = vmatpush.bf16.msra.mxu0 %v972
    %1291 = vmatpush.bf16.msra.mxu0 %v968
    %1292 = vmatpush.bf16.msra.mxu0 %v964
    %1293 = vmatpush.bf16.msra.mxu0 %v960
    %1294 = vmatpush.bf16.msra.mxu0 %v956
    %1295 = vmatpush.bf16.msra.mxu0 %v952
    %1296 = vmatpush.bf16.msra.mxu0 %v948
    %1297 = vmatpush.bf16.msra.mxu0 %v944
    %1298 = vmatmul.bf16.gmra.mxu0 %v238
    %v1299 = vpop.f32.mrf.mxu0
    %v1300 = vadd.f32 %v1287, %v1299
    %v1301 = vpop.f32.mrf.mxu0
    %1302 = vdwg.mxu0
    %1303 = vmatpush.bf16.msra.mxu0 %v1004
    %1304 = vmatpush.bf16.msra.mxu0 %v1000
    %1305 = vmatpush.bf16.msra.mxu0 %v996
    %1306 = vmatpush.bf16.msra.mxu0 %v992
    %1307 = vmatpush.bf16.msra.mxu0 %v988
    %1308 = vmatpush.bf16.msra.mxu0 %v984
    %1309 = vmatpush.bf16.msra.mxu0 %v980
    %1310 = vmatpush.bf16.msra.mxu0 %v976
    %1311 = vmatmul.bf16.gmra.mxu0 %v239
    %v1312 = vpop.f32.mrf.mxu0
    %v1313 = vadd.f32 %v1300, %v1312
    %v1314 = vpop.f32.mrf.mxu0
    %1315 = vdwg.mxu0
    %1316 = vmatpush.bf16.msra.mxu0 %v1036
    %1317 = vmatpush.bf16.msra.mxu0 %v1032
    %1318 = vmatpush.bf16.msra.mxu0 %v1028
    %1319 = vmatpush.bf16.msra.mxu0 %v1024
    %1320 = vmatpush.bf16.msra.mxu0 %v1020
    %1321 = vmatpush.bf16.msra.mxu0 %v1016
    %1322 = vmatpush.bf16.msra.mxu0 %v1012
    %1323 = vmatpush.bf16.msra.mxu0 %v1008
    %1324 = vmatmul.bf16.gmra.mxu0 %v240
    %v1325 = vpop.f32.mrf.mxu0
    %v1326 = vadd.f32 %v1313, %v1325
    %v1327 = vpop.f32.mrf.mxu0
    %1328 = vdwg.mxu0
    %1329 = vmatpush.bf16.msra.mxu0 0
    %1330 = vmatpush.bf16.msra.mxu0 0
    %1331 = vmatpush.bf16.msra.mxu0 0
    %1332 = vmatpush.bf16.msra.mxu0 0
    %1333 = vmatpush.bf16.msra.mxu0 0
    %1334 = vmatpush.bf16.msra.mxu0 0
    %1335 = vmatpush.bf16.msra.mxu0 %v1044
    %1336 = vmatpush.bf16.msra.mxu0 %v1040
    %1337 = vmatmul.bf16.gmra.mxu0 %v1249
    %v1338 = vpop.f32.mrf.mxu0
    %v1339 = vadd.f32 %v1326, %v1338
    %v1340 = vpop.f32.mrf.mxu0
    %1341 = vdwg.mxu0
    %1342 = vmatpush.bf16.msra.mxu0 %v877
    %1343 = vmatpush.bf16.msra.mxu0 %v873
    %1344 = vmatpush.bf16.msra.mxu0 %v869
    %1345 = vmatpush.bf16.msra.mxu0 %v865
    %1346 = vmatpush.bf16.msra.mxu0 %v861
    %1347 = vmatpush.bf16.msra.mxu0 %v857
    %1348 = vmatpush.bf16.msra.mxu0 %v853
    %1349 = vmatpush.bf16.msra.mxu0 %v849
    %1350 = vmatmul.bf16.gmra.mxu0 %v235
    %v1351 = vpop.f32.mrf.mxu0
    %v1352 = vadd.f32 %v226, %v1351
    %v1353 = vpop.f32.mrf.mxu0
    %1354 = vdwg.mxu0
    %1355 = vmatpush.bf16.msra.mxu0 %v909
    %1356 = vmatpush.bf16.msra.mxu0 %v905
    %1357 = vmatpush.bf16.msra.mxu0 %v901
    %1358 = vmatpush.bf16.msra.mxu0 %v897
    %1359 = vmatpush.bf16.msra.mxu0 %v893
    %1360 = vmatpush.bf16.msra.mxu0 %v889
    %1361 = vmatpush.bf16.msra.mxu0 %v885
    %1362 = vmatpush.bf16.msra.mxu0 %v881
    %1363 = vmatmul.bf16.gmra.mxu0 %v236
    %v1364 = vpop.f32.mrf.mxu0
    %v1365 = vadd.f32 %v1352, %v1364
    %v1366 = vpop.f32.mrf.mxu0
    %1367 = vdwg.mxu0
    %1368 = vmatpush.bf16.msra.mxu0 %v941
    %1369 = vmatpush.bf16.msra.mxu0 %v937
    %1370 = vmatpush.bf16.msra.mxu0 %v933
    %1371 = vmatpush.bf16.msra.mxu0 %v929
    %1372 = vmatpush.bf16.msra.mxu0 %v925
    %1373 = vmatpush.bf16.msra.mxu0 %v921
    %1374 = vmatpush.bf16.msra.mxu0 %v917
    %1375 = vmatpush.bf16.msra.mxu0 %v913
    %1376 = vmatmul.bf16.gmra.mxu0 %v237
    %v1377 = vpop.f32.mrf.mxu0
    %v1378 = vadd.f32 %v1365, %v1377
    %v1379 = vpop.f32.mrf.mxu0
    %1380 = vdwg.mxu0
    %1381 = vmatpush.bf16.msra.mxu0 %v973
    %1382 = vmatpush.bf16.msra.mxu0 %v969
    %1383 = vmatpush.bf16.msra.mxu0 %v965
    %1384 = vmatpush.bf16.msra.mxu0 %v961
    %1385 = vmatpush.bf16.msra.mxu0 %v957
    %1386 = vmatpush.bf16.msra.mxu0 %v953
    %1387 = vmatpush.bf16.msra.mxu0 %v949
    %1388 = vmatpush.bf16.msra.mxu0 %v945
    %1389 = vmatmul.bf16.gmra.mxu0 %v238
    %v1390 = vpop.f32.mrf.mxu0
    %v1391 = vadd.f32 %v1378, %v1390
    %v1392 = vpop.f32.mrf.mxu0
    %1393 = vdwg.mxu0
    %1394 = vmatpush.bf16.msra.mxu0 %v1005
    %1395 = vmatpush.bf16.msra.mxu0 %v1001
    %1396 = vmatpush.bf16.msra.mxu0 %v997
    %1397 = vmatpush.bf16.msra.mxu0 %v993
    %1398 = vmatpush.bf16.msra.mxu0 %v989
    %1399 = vmatpush.bf16.msra.mxu0 %v985
    %1400 = vmatpush.bf16.msra.mxu0 %v981
    %1401 = vmatpush.bf16.msra.mxu0 %v977
    %1402 = vmatmul.bf16.gmra.mxu0 %v239
    %v1403 = vpop.f32.mrf.mxu0
    %v1404 = vadd.f32 %v1391, %v1403
    %v1405 = vpop.f32.mrf.mxu0
    %1406 = vdwg.mxu0
    %1407 = vmatpush.bf16.msra.mxu0 %v1037
    %1408 = vmatpush.bf16.msra.mxu0 %v1033
    %1409 = vmatpush.bf16.msra.mxu0 %v1029
    %1410 = vmatpush.bf16.msra.mxu0 %v1025
    %1411 = vmatpush.bf16.msra.mxu0 %v1021
    %1412 = vmatpush.bf16.msra.mxu0 %v1017
    %1413 = vmatpush.bf16.msra.mxu0 %v1013
    %1414 = vmatpush.bf16.msra.mxu0 %v1009
    %1415 = vmatmul.bf16.gmra.mxu0 %v240
    %v1416 = vpop.f32.mrf.mxu0
    %v1417 = vadd.f32 %v1404, %v1416
    %v1418 = vpop.f32.mrf.mxu0
    %1419 = vdwg.mxu0
    %1420 = vmatpush.bf16.msra.mxu0 0
    %1421 = vmatpush.bf16.msra.mxu0 0
    %1422 = vmatpush.bf16.msra.mxu0 0
    %1423 = vmatpush.bf16.msra.mxu0 0
    %1424 = vmatpush.bf16.msra.mxu0 0
    %1425 = vmatpush.bf16.msra.mxu0 0
    %1426 = vmatpush.bf16.msra.mxu0 %v1045
    %1427 = vmatpush.bf16.msra.mxu0 %v1041
    %1428 = vmatmul.bf16.gmra.mxu0 %v1249
    %v1429 = vpop.f32.mrf.mxu0
    %v1430 = vadd.f32 %v1417, %v1429
    %v1431 = vpop.f32.mrf.mxu0
    %1432 = vdwg.mxu0
    %1433 = vmatpush.bf16.msra.mxu0 %v878
    %1434 = vmatpush.bf16.msra.mxu0 %v874
    %1435 = vmatpush.bf16.msra.mxu0 %v870
    %1436 = vmatpush.bf16.msra.mxu0 %v866
    %1437 = vmatpush.bf16.msra.mxu0 %v862
    %1438 = vmatpush.bf16.msra.mxu0 %v858
    %1439 = vmatpush.bf16.msra.mxu0 %v854
    %1440 = vmatpush.bf16.msra.mxu0 %v850
    %1441 = vmatmul.bf16.gmra.mxu0 %v235
    %v1442 = vpop.f32.mrf.mxu0
    %v1443 = vadd.f32 %v227, %v1442
    %v1444 = vpop.f32.mrf.mxu0
    %1445 = vdwg.mxu0
    %1446 = vmatpush.bf16.msra.mxu0 %v910
    %1447 = vmatpush.bf16.msra.mxu0 %v906
    %1448 = vmatpush.bf16.msra.mxu0 %v902
    %1449 = vmatpush.bf16.msra.mxu0 %v898
    %1450 = vmatpush.bf16.msra.mxu0 %v894
    %1451 = vmatpush.bf16.msra.mxu0 %v890
    %1452 = vmatpush.bf16.msra.mxu0 %v886
    %1453 = vmatpush.bf16.msra.mxu0 %v882
    %1454 = vmatmul.bf16.gmra.mxu0 %v236
    %v1455 = vpop.f32.mrf.mxu0
    %v1456 = vadd.f32 %v1443, %v1455
    %v1457 = vpop.f32.mrf.mxu0
    %1458 = vdwg.mxu0
    %1459 = vmatpush.bf16.msra.mxu0 %v942
    %1460 = vmatpush.bf16.msra.mxu0 %v938
    %1461 = vmatpush.bf16.msra.mxu0 %v934
    %1462 = vmatpush.bf16.msra.mxu0 %v930
    %1463 = vmatpush.bf16.msra.mxu0 %v926
    %1464 = vmatpush.bf16.msra.mxu0 %v922
    %1465 = vmatpush.bf16.msra.mxu0 %v918
    %1466 = vmatpush.bf16.msra.mxu0 %v914
    %1467 = vmatmul.bf16.gmra.mxu0 %v237
    %v1468 = vpop.f32.mrf.mxu0
    %v1469 = vadd.f32 %v1456, %v1468
    %v1470 = vpop.f32.mrf.mxu0
    %1471 = vdwg.mxu0
    %1472 = vmatpush.bf16.msra.mxu0 %v974
    %1473 = vmatpush.bf16.msra.mxu0 %v970
    %1474 = vmatpush.bf16.msra.mxu0 %v966
    %1475 = vmatpush.bf16.msra.mxu0 %v962
    %1476 = vmatpush.bf16.msra.mxu0 %v958
    %1477 = vmatpush.bf16.msra.mxu0 %v954
    %1478 = vmatpush.bf16.msra.mxu0 %v950
    %1479 = vmatpush.bf16.msra.mxu0 %v946
    %1480 = vmatmul.bf16.gmra.mxu0 %v238
    %v1481 = vpop.f32.mrf.mxu0
    %v1482 = vadd.f32 %v1469, %v1481
    %v1483 = vpop.f32.mrf.mxu0
    %1484 = vdwg.mxu0
    %1485 = vmatpush.bf16.msra.mxu0 %v1006
    %1486 = vmatpush.bf16.msra.mxu0 %v1002
    %1487 = vmatpush.bf16.msra.mxu0 %v998
    %1488 = vmatpush.bf16.msra.mxu0 %v994
    %1489 = vmatpush.bf16.msra.mxu0 %v990
    %1490 = vmatpush.bf16.msra.mxu0 %v986
    %1491 = vmatpush.bf16.msra.mxu0 %v982
    %1492 = vmatpush.bf16.msra.mxu0 %v978
    %1493 = vmatmul.bf16.gmra.mxu0 %v239
    %v1494 = vpop.f32.mrf.mxu0
    %v1495 = vadd.f32 %v1482, %v1494
    %v1496 = vpop.f32.mrf.mxu0
    %1497 = vdwg.mxu0
    %1498 = vmatpush.bf16.msra.mxu0 %v1038
    %1499 = vmatpush.bf16.msra.mxu0 %v1034
    %1500 = vmatpush.bf16.msra.mxu0 %v1030
    %1501 = vmatpush.bf16.msra.mxu0 %v1026
    %1502 = vmatpush.bf16.msra.mxu0 %v1022
    %1503 = vmatpush.bf16.msra.mxu0 %v1018
    %1504 = vmatpush.bf16.msra.mxu0 %v1014
    %1505 = vmatpush.bf16.msra.mxu0 %v1010
    %1506 = vmatmul.bf16.gmra.mxu0 %v240
    %v1507 = vpop.f32.mrf.mxu0
    %v1508 = vadd.f32 %v1495, %v1507
    %v1509 = vpop.f32.mrf.mxu0
    %1510 = vdwg.mxu0
    %1511 = vmatpush.bf16.msra.mxu0 0
    %1512 = vmatpush.bf16.msra.mxu0 0
    %1513 = vmatpush.bf16.msra.mxu0 0
    %1514 = vmatpush.bf16.msra.mxu0 0
    %1515 = vmatpush.bf16.msra.mxu0 0
    %1516 = vmatpush.bf16.msra.mxu0 0
    %1517 = vmatpush.bf16.msra.mxu0 %v1046
    %1518 = vmatpush.bf16.msra.mxu0 %v1042
    %1519 = vmatmul.bf16.gmra.mxu0 %v1249
    %v1520 = vpop.f32.mrf.mxu0
    %v1521 = vadd.f32 %v1508, %v1520
    %v1522 = vpop.f32.mrf.mxu0
    %1523 = vdwg.mxu0
    %1524 = vmatpush.bf16.msra.mxu0 %v879
    %1525 = vmatpush.bf16.msra.mxu0 %v875
    %1526 = vmatpush.bf16.msra.mxu0 %v871
    %1527 = vmatpush.bf16.msra.mxu0 %v867
    %1528 = vmatpush.bf16.msra.mxu0 %v863
    %1529 = vmatpush.bf16.msra.mxu0 %v859
    %1530 = vmatpush.bf16.msra.mxu0 %v855
    %1531 = vmatpush.bf16.msra.mxu0 %v851
    %1532 = vmatmul.bf16.gmra.mxu0 %v235
    %v1533 = vpop.f32.mrf.mxu0
    %v1534 = vadd.f32 %v228, %v1533
    %v1535 = vpop.f32.mrf.mxu0
    %1536 = vdwg.mxu0
    %1537 = vmatpush.bf16.msra.mxu0 %v911
    %1538 = vmatpush.bf16.msra.mxu0 %v907
    %1539 = vmatpush.bf16.msra.mxu0 %v903
    %1540 = vmatpush.bf16.msra.mxu0 %v899
    %1541 = vmatpush.bf16.msra.mxu0 %v895
    %1542 = vmatpush.bf16.msra.mxu0 %v891
    %1543 = vmatpush.bf16.msra.mxu0 %v887
    %1544 = vmatpush.bf16.msra.mxu0 %v883
    %1545 = vmatmul.bf16.gmra.mxu0 %v236
    %v1546 = vpop.f32.mrf.mxu0
    %v1547 = vadd.f32 %v1534, %v1546
    %v1548 = vpop.f32.mrf.mxu0
    %1549 = vdwg.mxu0
    %1550 = vmatpush.bf16.msra.mxu0 %v943
    %1551 = vmatpush.bf16.msra.mxu0 %v939
    %1552 = vmatpush.bf16.msra.mxu0 %v935
    %1553 = vmatpush.bf16.msra.mxu0 %v931
    %1554 = vmatpush.bf16.msra.mxu0 %v927
    %1555 = vmatpush.bf16.msra.mxu0 %v923
    %1556 = vmatpush.bf16.msra.mxu0 %v919
    %1557 = vmatpush.bf16.msra.mxu0 %v915
    %1558 = vmatmul.bf16.gmra.mxu0 %v237
    %v1559 = vpop.f32.mrf.mxu0
    %v1560 = vadd.f32 %v1547, %v1559
    %v1561 = vpop.f32.mrf.mxu0
    %1562 = vdwg.mxu0
    %1563 = vmatpush.bf16.msra.mxu0 %v975
    %1564 = vmatpush.bf16.msra.mxu0 %v971
    %1565 = vmatpush.bf16.msra.mxu0 %v967
    %1566 = vmatpush.bf16.msra.mxu0 %v963
    %1567 = vmatpush.bf16.msra.mxu0 %v959
    %1568 = vmatpush.bf16.msra.mxu0 %v955
    %1569 = vmatpush.bf16.msra.mxu0 %v951
    %1570 = vmatpush.bf16.msra.mxu0 %v947
    %1571 = vmatmul.bf16.gmra.mxu0 %v238
    %v1572 = vpop.f32.mrf.mxu0
    %v1573 = vadd.f32 %v1560, %v1572
    %v1574 = vpop.f32.mrf.mxu0
    %1575 = vdwg.mxu0
    %1576 = vmatpush.bf16.msra.mxu0 %v1007
    %1577 = vmatpush.bf16.msra.mxu0 %v1003
    %1578 = vmatpush.bf16.msra.mxu0 %v999
    %1579 = vmatpush.bf16.msra.mxu0 %v995
    %1580 = vmatpush.bf16.msra.mxu0 %v991
    %1581 = vmatpush.bf16.msra.mxu0 %v987
    %1582 = vmatpush.bf16.msra.mxu0 %v983
    %1583 = vmatpush.bf16.msra.mxu0 %v979
    %1584 = vmatmul.bf16.gmra.mxu0 %v239
    %v1585 = vpop.f32.mrf.mxu0
    %v1586 = vadd.f32 %v1573, %v1585
    %v1587 = vpop.f32.mrf.mxu0
    %1588 = vdwg.mxu0
    %1589 = vmatpush.bf16.msra.mxu0 %v1039
    %1590 = vmatpush.bf16.msra.mxu0 %v1035
    %1591 = vmatpush.bf16.msra.mxu0 %v1031
    %1592 = vmatpush.bf16.msra.mxu0 %v1027
    %1593 = vmatpush.bf16.msra.mxu0 %v1023
    %1594 = vmatpush.bf16.msra.mxu0 %v1019
    %1595 = vmatpush.bf16.msra.mxu0 %v1015
    %1596 = vmatpush.bf16.msra.mxu0 %v1011
    %1597 = vmatmul.bf16.gmra.mxu0 %v240
    %v1598 = vpop.f32.mrf.mxu0
    %v1599 = vadd.f32 %v1586, %v1598
    %v1600 = vpop.f32.mrf.mxu0
    %1601 = vdwg.mxu0
    %1602 = vmatpush.bf16.msra.mxu0 0
    %1603 = vmatpush.bf16.msra.mxu0 0
    %1604 = vmatpush.bf16.msra.mxu0 0
    %1605 = vmatpush.bf16.msra.mxu0 0
    %1606 = vmatpush.bf16.msra.mxu0 0
    %1607 = vmatpush.bf16.msra.mxu0 0
    %1608 = vmatpush.bf16.msra.mxu0 %v1047
    %1609 = vmatpush.bf16.msra.mxu0 %v1043
    %1610 = vmatmul.bf16.gmra.mxu0 %v1249
    %v1611 = vpop.f32.mrf.mxu0
    %v1612 = vadd.f32 %v1599, %v1611
    %v1613 = vpop.f32.mrf.mxu0
    %1614 = vdwg.mxu0
    %v1615 = vmax.f32 %v1339, 0.0
    %v1616 = vmax.f32 %v1430, 0.0
    %v1617 = vmax.f32 %v1521, 0.0
    %v1618 = vmax.f32 %v1612, 0.0
    %v1619 = vpack.c.bf16 %v1615, %v1615
    %v1620 = vpack.c.bf16 %v1616, %v1616
    %v1621 = vpack.c.bf16 %v1617, %v1617
    %v1622 = vpack.c.bf16 %v1618, %v1618
    %v1623 = vld [vmem:[%s3] sm:$0xf]
    %v1624 = vld [vmem:[%s3 + $0x4] sm:$0xf]
    %v1625 = vld [vmem:[%s3 + $0x8] sm:$0xf]
    %v1626 = vld [vmem:[%s3 + $0xc] sm:$0xf]
    %v1627 = vld [vmem:[%s3 + $0x10] sm:$0xf]
    %v1628 = vld [vmem:[%s3 + $0x14] sm:$0xf]
    %v1629 = vld [vmem:[%s3 + $0x18] sm:$0xf]
    %v1630 = vld [vmem:[%s3 + $0x1c] sm:$0xf]
    %v1631 = vld [vmem:[%s3 + $0x20] sm:$0xf]
    %v1632 = vld [vmem:[%s3 + $0x24] sm:$0xf]
    %v1633 = vld [vmem:[%s3 + $0x28] sm:$0xf]
    %v1634 = vld [vmem:[%s3 + $0x2c] sm:$0xf]
    %v1635 = vld [vmem:[%s3 + $0x30] sm:$0xf]
    %v1636 = vld [vmem:[%s3 + $0x34] sm:$0xf]
    %v1637 = vld [vmem:[%s3 + $0x38] sm:$0xf]
    %v1638 = vld [vmem:[%s3 + $0x3c] sm:$0xf]
    %v1639 = vld [vmem:[%s3 + $0x40] sm:$0xf]
    %v1640 = vld [vmem:[%s3 + $0x44] sm:$0xf]
    %v1641 = vld [vmem:[%s3 + $0x48] sm:$0xf]
    %v1642 = vld [vmem:[%s3 + $0x4c] sm:$0xf]
    %v1643 = vld [vmem:[%s3 + $0x50] sm:$0xf]
    %v1644 = vld [vmem:[%s3 + $0x54] sm:$0xf]
    %v1645 = vld [vmem:[%s3 + $0x58] sm:$0xf]
    %v1646 = vld [vmem:[%s3 + $0x5c] sm:$0xf]
    %v1647 = vld [vmem:[%s3 + $0x60] sm:$0xf]
    %v1648 = vld [vmem:[%s3 + $0x64] sm:$0xf]
    %v1649 = vld [vmem:[%s3 + $0x68] sm:$0xf]
    %v1650 = vld [vmem:[%s3 + $0x6c] sm:$0xf]
    %v1651 = vld [vmem:[%s3 + $0x70] sm:$0xf]
    %v1652 = vld [vmem:[%s3 + $0x74] sm:$0xf]
    %v1653 = vld [vmem:[%s3 + $0x78] sm:$0xf]
    %v1654 = vld [vmem:[%s3 + $0x7c] sm:$0xf]
    %v1655 = vld [vmem:[%s3 + $0x80] sm:$0xf]
    %v1656 = vld [vmem:[%s3 + $0x84] sm:$0xf]
    %v1657 = vld [vmem:[%s3 + $0x88] sm:$0xf]
    %v1658 = vld [vmem:[%s3 + $0x8c] sm:$0xf]
    %v1659 = vld [vmem:[%s3 + $0x90] sm:$0xf]
    %v1660 = vld [vmem:[%s3 + $0x94] sm:$0xf]
    %v1661 = vld [vmem:[%s3 + $0x98] sm:$0xf]
    %v1662 = vld [vmem:[%s3 + $0x9c] sm:$0xf]
    %v1663 = vld [vmem:[%s3 + $0xa0] sm:$0xf]
    %v1664 = vld [vmem:[%s3 + $0xa4] sm:$0xf]
    %v1665 = vld [vmem:[%s3 + $0xa8] sm:$0xf]
    %v1666 = vld [vmem:[%s3 + $0xac] sm:$0xf]
    %v1667 = vld [vmem:[%s3 + $0xb0] sm:$0xf]
    %v1668 = vld [vmem:[%s3 + $0xb4] sm:$0xf]
    %v1669 = vld [vmem:[%s3 + $0xb8] sm:$0xf]
    %v1670 = vld [vmem:[%s3 + $0xbc] sm:$0xf]
    %v1671 = vld [vmem:[%s3 + $0xc0] sm:$0xf]
    %v1672 = vld [vmem:[%s3 + $0xc4] sm:$0xf]
    %v1673 = vld [vmem:[%s3 + $0xc8] sm:$0xf]
    %v1674 = vld [vmem:[%s3 + $0xcc] sm:$0xf]
    %v1675 = vld [vmem:[%s3 + $0xd0] sm:$0xf]
    %v1676 = vld [vmem:[%s3 + $0xd4] sm:$0xf]
    %v1677 = vld [vmem:[%s3 + $0xd8] sm:$0xf]
    %v1678 = vld [vmem:[%s3 + $0xdc] sm:$0xf]
    %v1679 = vld [vmem:[%s3 + $0xe0] sm:$0xf]
    %v1680 = vld [vmem:[%s3 + $0xe4] sm:$0xf]
    %v1681 = vld [vmem:[%s3 + $0xe8] sm:$0xf]
    %v1682 = vld [vmem:[%s3 + $0xec] sm:$0xf]
    %v1683 = vld [vmem:[%s3 + $0xf0] sm:$0xf]
    %v1684 = vld [vmem:[%s3 + $0xf4] sm:$0xf]
    %v1685 = vld [vmem:[%s3 + $0xf8] sm:$0x3]
    %v1686 = vld [vmem:[%s4] sm:$0x1]
    %v1688 = vperm.slane %v1686, 0
    %v1753 = vunpack.c.l.b16 %v1623
    %v1754 = vunpack.c.l.b16 %v1624
    %v1755 = vunpack.c.l.b16 %v1625
    %v1756 = vunpack.c.l.b16 %v1626
    %v1757 = vunpack.c.l.b16 %v1627
    %v1758 = vunpack.c.l.b16 %v1628
    %v1759 = vunpack.c.l.b16 %v1629
    %v1760 = vunpack.c.l.b16 %v1630
    %v1761 = vunpack.c.l.b16 %v1631
    %v1762 = vunpack.c.l.b16 %v1632
    %v1763 = vunpack.c.l.b16 %v1633
    %v1764 = vunpack.c.l.b16 %v1634
    %v1765 = vunpack.c.l.b16 %v1635
    %v1766 = vunpack.c.l.b16 %v1636
    %v1767 = vunpack.c.l.b16 %v1637
    %v1768 = vunpack.c.l.b16 %v1638
    %v1769 = vunpack.c.l.b16 %v1639
    %v1770 = vunpack.c.l.b16 %v1640
    %v1771 = vunpack.c.l.b16 %v1641
    %v1772 = vunpack.c.l.b16 %v1642
    %v1773 = vunpack.c.l.b16 %v1643
    %v1774 = vunpack.c.l.b16 %v1644
    %v1775 = vunpack.c.l.b16 %v1645
    %v1776 = vunpack.c.l.b16 %v1646
    %v1777 = vunpack.c.l.b16 %v1647
    %v1778 = vunpack.c.l.b16 %v1648
    %v1779 = vunpack.c.l.b16 %v1649
    %v1780 = vunpack.c.l.b16 %v1650
    %v1781 = vunpack.c.l.b16 %v1651
    %v1782 = vunpack.c.l.b16 %v1652
    %v1783 = vunpack.c.l.b16 %v1653
    %v1784 = vunpack.c.l.b16 %v1654
    %v1785 = vunpack.c.l.b16 %v1655
    %v1786 = vunpack.c.l.b16 %v1656
    %v1787 = vunpack.c.l.b16 %v1657
    %v1788 = vunpack.c.l.b16 %v1658
    %v1789 = vunpack.c.l.b16 %v1659
    %v1790 = vunpack.c.l.b16 %v1660
    %v1791 = vunpack.c.l.b16 %v1661
    %v1792 = vunpack.c.l.b16 %v1662
    %v1793 = vunpack.c.l.b16 %v1663
    %v1794 = vunpack.c.l.b16 %v1664
    %v1795 = vunpack.c.l.b16 %v1665
    %v1796 = vunpack.c.l.b16 %v1666
    %v1797 = vunpack.c.l.b16 %v1667
    %v1798 = vunpack.c.l.b16 %v1668
    %v1799 = vunpack.c.l.b16 %v1669
    %v1800 = vunpack.c.l.b16 %v1670
    %v1801 = vunpack.c.l.b16 %v1671
    %v1802 = vunpack.c.l.b16 %v1672
    %v1803 = vunpack.c.l.b16 %v1673
    %v1804 = vunpack.c.l.b16 %v1674
    %v1805 = vunpack.c.l.b16 %v1675
    %v1806 = vunpack.c.l.b16 %v1676
    %v1807 = vunpack.c.l.b16 %v1677
    %v1808 = vunpack.c.l.b16 %v1678
    %v1809 = vunpack.c.l.b16 %v1679
    %v1810 = vunpack.c.l.b16 %v1680
    %v1811 = vunpack.c.l.b16 %v1681
    %v1812 = vunpack.c.l.b16 %v1682
    %v1813 = vunpack.c.l.b16 %v1683
    %v1814 = vunpack.c.l.b16 %v1684
    %v1815 = vunpack.c.l.b16 %v1685
    %v1816 = vpack.c.b16 %v1754, %v1753
    %v1817 = vpack.c.b16 %v1756, %v1755
    %v1818 = vpack.c.b16 %v1758, %v1757
    %v1819 = vpack.c.b16 %v1760, %v1759
    %v1820 = vpack.c.b16 %v1762, %v1761
    %v1821 = vpack.c.b16 %v1764, %v1763
    %v1822 = vpack.c.b16 %v1766, %v1765
    %v1823 = vpack.c.b16 %v1768, %v1767
    %v1824 = vpack.c.b16 %v1770, %v1769
    %v1825 = vpack.c.b16 %v1772, %v1771
    %v1826 = vpack.c.b16 %v1774, %v1773
    %v1827 = vpack.c.b16 %v1776, %v1775
    %v1828 = vpack.c.b16 %v1778, %v1777
    %v1829 = vpack.c.b16 %v1780, %v1779
    %v1830 = vpack.c.b16 %v1782, %v1781
    %v1831 = vpack.c.b16 %v1784, %v1783
    %v1832 = vpack.c.b16 %v1786, %v1785
    %v1833 = vpack.c.b16 %v1788, %v1787
    %v1834 = vpack.c.b16 %v1790, %v1789
    %v1835 = vpack.c.b16 %v1792, %v1791
    %v1836 = vpack.c.b16 %v1794, %v1793
    %v1837 = vpack.c.b16 %v1796, %v1795
    %v1838 = vpack.c.b16 %v1798, %v1797
    %v1839 = vpack.c.b16 %v1800, %v1799
    %v1840 = vpack.c.b16 %v1802, %v1801
    %v1841 = vpack.c.b16 %v1804, %v1803
    %v1842 = vpack.c.b16 %v1806, %v1805
    %v1843 = vpack.c.b16 %v1808, %v1807
    %v1844 = vpack.c.b16 %v1810, %v1809
    %v1845 = vpack.c.b16 %v1812, %v1811
    %v1846 = vpack.c.b16 %v1814, %v1813
    %v1847 = vpack.c.b16 %v1815, %v1815
    %vm1879 = vcmask 949248
    %v1881 = vsel %vm1879, %v1622, 0
    %vm1883 = vcmask 1041408
    %v1885 = vsel %vm1883, %v1847, 0
    %1887 = vmatpush.bf16.msra.mxu0 %v1823
    %1888 = vmatpush.bf16.msra.mxu0 %v1822
    %1889 = vmatpush.bf16.msra.mxu0 %v1821
    %1890 = vmatpush.bf16.msra.mxu0 %v1820
    %1891 = vmatpush.bf16.msra.mxu0 %v1819
    %1892 = vmatpush.bf16.msra.mxu0 %v1818
    %1893 = vmatpush.bf16.msra.mxu0 %v1817
    %1894 = vmatpush.bf16.msra.mxu0 %v1816
    %1895 = vmatmul.bf16.gmra.mxu0 %v1619
    %v1896 = vpop.f32.mrf.mxu0
    %v1897 = vadd.f32 %v1688, %v1896
    %v1898 = vpop.f32.mrf.mxu0
    %1899 = vdwg.mxu0
    %1900 = vmatpush.bf16.msra.mxu0 %v1831
    %1901 = vmatpush.bf16.msra.mxu0 %v1830
    %1902 = vmatpush.bf16.msra.mxu0 %v1829
    %1903 = vmatpush.bf16.msra.mxu0 %v1828
    %1904 = vmatpush.bf16.msra.mxu0 %v1827
    %1905 = vmatpush.bf16.msra.mxu0 %v1826
    %1906 = vmatpush.bf16.msra.mxu0 %v1825
    %1907 = vmatpush.bf16.msra.mxu0 %v1824
    %1908 = vmatmul.bf16.gmra.mxu0 %v1620
    %v1909 = vpop.f32.mrf.mxu0
    %v1910 = vadd.f32 %v1897, %v1909
    %v1911 = vpop.f32.mrf.mxu0
    %1912 = vdwg.mxu0
    %1913 = vmatpush.bf16.msra.mxu0 %v1839
    %1914 = vmatpush.bf16.msra.mxu0 %v1838
    %1915 = vmatpush.bf16.msra.mxu0 %v1837
    %1916 = vmatpush.bf16.msra.mxu0 %v1836
    %1917 = vmatpush.bf16.msra.mxu0 %v1835
    %1918 = vmatpush.bf16.msra.mxu0 %v1834
    %1919 = vmatpush.bf16.msra.mxu0 %v1833
    %1920 = vmatpush.bf16.msra.mxu0 %v1832
    %1921 = vmatmul.bf16.gmra.mxu0 %v1621
    %v1922 = vpop.f32.mrf.mxu0
    %v1923 = vadd.f32 %v1910, %v1922
    %v1924 = vpop.f32.mrf.mxu0
    %1925 = vdwg.mxu0
    %1926 = vmatpush.bf16.msra.mxu0 %v1885
    %1927 = vmatpush.bf16.msra.mxu0 %v1846
    %1928 = vmatpush.bf16.msra.mxu0 %v1845
    %1929 = vmatpush.bf16.msra.mxu0 %v1844
    %1930 = vmatpush.bf16.msra.mxu0 %v1843
    %1931 = vmatpush.bf16.msra.mxu0 %v1842
    %1932 = vmatpush.bf16.msra.mxu0 %v1841
    %1933 = vmatpush.bf16.msra.mxu0 %v1840
    %1934 = vmatmul.bf16.gmra.mxu0 %v1881
    %v1935 = vpop.f32.mrf.mxu0
    %v1936 = vadd.f32 %v1923, %v1935
    %v1937 = vpop.f32.mrf.mxu0
    %1938 = vdwg.mxu0
    %v1939 = vsel %vm1883, %v1936, -inf
    %1940 = vmax.xlane.f32.xlu0 %v1939
    %v1941 = vpop.xlane.xlu0 %1940
    %v1942 = vsub.f32 %v1936, %v1941
    %v1943 = vmul.f32 %v1942, 1.442695
    %v1944 = vpow.pop %v1943
    %v1945 = vsel %vm1883, %v1944, 0.0
    %1946 = vadd.xlane.f32.xlu0 %v1945
    %v1947 = vpop.xlane.xlu0 %1946
    %v1948 = vlog2.pop %v1947
    %v1949 = vmul.f32 %v1948, 0.6931472
    %v1950 = vsub.f32 %v1942, %v1949
    %1951 = vst [vmem:[#allocation2] sm:$0x3] %v1950
    // Predicated region
    $region22: #{net_forward.5} parent=1 // pred_check
      _
    $region23: #{net_forward.5} parent=1 // pred_check_branch
      %1953 = sbr.rel (0) target = $region25
    $region24: #{net_forward.5} parent=1 // pred_region
      %1955 = vsyncadd [#allocation3], 0
      %s1957 = sshll.u32 [#allocation2], 4
      %s1958 = int_to_ptr.vmem [resolvable:$true] %s1957
      %s1959 = sshll.u32 %s5, 4
      %s1960 = int_to_ptr.hbm [resolvable:$true] %s1959
      %1962 = dma.vmem_to_hbm [thread:$0]  %s1958, 32, %s1960, [#allocation3]
    $region25: #{net_forward.5} parent=1 // pred_fallthru
      _
    // Predicated region
    $region26: #{net_forward.5} parent=1 // pred_check
      _
    $region27: #{net_forward.5} parent=1 // pred_check_branch
      %1964 = sbr.rel (0) target = $region29
    $region28: #{net_forward.5} parent=1 // pred_region
      %1966 = dma.done [#allocation3], 32
    $region29: #{net_forward.5} parent=1 // pred_fallthru
      _
    %1967 = vsyncpa [#allocation3], 1

</llo_original>
